<compile_context>
chip_gen: v5e
topology: v5e:2x2
jax: 0.10.0
libtpu: 0.0.40
codegen_flags: <defaults>
</compile_context>

<pallas_src>
import functools

import jax
import jax.numpy as jnp
from jax.experimental import pallas as pl
from jax.experimental.pallas import tpu as pltpu


_PALLAS_MIN_M = 64            # below this, launch overhead dominates -> XLA fallback
_PALLAS_MIN_FLOPS = 1_000_000 # useful FLOPs cutoff for a Pallas launch
_TK_SINGLE_MAX = 2048         # full-K single-step limit (tiles stay ~4 MiB << 32 MiB VMEM)


def _round_up(x, m):
    return (x + m - 1) // m * m


def _pick_tk(kp, single_max=_TK_SINGLE_MAX, multi_max=512):
    """kp is already a multiple of 128. Prefer a single K step; otherwise the largest
    128-multiple divisor of kp <= multi_max (so no K step is pure zero padding)."""
    if kp <= single_max:
        return kp
    best = 128
    t = 256
    while t <= multi_max:
        if kp % t == 0:
            best = t
        t += 128
    return best


# ----------------------------------------------------------------------------
# Pallas kernels: out = act(A @ B + bias)
# ----------------------------------------------------------------------------
def _mm_kernel_single(a_ref, b_ref, bias_ref, o_ref, *, relu):
    # Single K step: no accumulator scratch, no init/finalize phases.
    acc = jnp.dot(a_ref[...], b_ref[...], preferred_element_type=jnp.float32)
    acc = acc + bias_ref[...]
    if relu:
        acc = jnp.maximum(acc, 0.0)
    o_ref[...] = acc.astype(o_ref.dtype)


def _mm_kernel_multi(a_ref, b_ref, bias_ref, o_ref, acc_ref, *, relu):
    # General path (K split across grid steps) - only used when Kp > _TK_SINGLE_MAX.
    k = pl.program_id(2)

    @pl.when(k == 0)
    def _():
        acc_ref[...] = jnp.zeros_like(acc_ref)

    acc_ref[...] += jnp.dot(a_ref[...], b_ref[...],
                            preferred_element_type=jnp.float32)

    @pl.when(k == pl.num_programs(2) - 1)
    def _():
        acc = acc_ref[...] + bias_ref[...]
        if relu:
            acc = jnp.maximum(acc, 0.0)
        o_ref[...] = acc.astype(o_ref.dtype)


def pallas_matmul(a, b, bias=None, relu=False, out_dtype=jnp.float32, tm_max=256):
    """a: (M, K) activations/patches, b: (K, N) folded weights, bias: (N,)."""
    M, K = a.shape
    K2, N = b.shape
    assert K == K2, (a.shape, b.shape)
    if bias is None:
        bias = jnp.zeros((N,), jnp.float32)

    # Lane-dense padding: Kp/Np are fixed to 128 multiples FIRST, tiles divide them.
    Kp = _round_up(K, 128)
    Np = _round_up(N, 128)
    tn = 256 if (Np % 256 == 0) else 128          # fills a full v6e/v7x MXU pass when possible
    tk = _pick_tk(Kp)
    gk = Kp // tk
    gn = Np // tn

    # M tile: 16-row multiple (bf16 vreg packs (16,128)).
    tm = min(tm_max, _round_up(M, 16))
    # Guarantee >=2 steps on a parallel grid axis so v7x's 2nd TensorCore is not idle.
    if gn * (_round_up(M, tm) // tm) == 1 and tm >= 32:
        tm = _round_up(tm // 2, 16)
    Mp = _round_up(M, tm)
    gm = Mp // tm

    a_p = jnp.pad(a.astype(jnp.bfloat16), ((0, Mp - M), (0, Kp - K)))
    b_p = jnp.pad(b.astype(jnp.bfloat16), ((0, Kp - K), (0, Np - N)))
    bias_p = jnp.pad(bias.astype(jnp.float32), (0, Np - N)).reshape(1, Np)

    cost = pl.CostEstimate(
        flops=2 * Mp * Np * Kp,
        transcendentals=0,
        bytes_accessed=2 * (Mp * Kp + Kp * Np) + 4 * Mp * Np)

    if gk == 1:
        out = pl.pallas_call(
            functools.partial(_mm_kernel_single, relu=relu),
            out_shape=jax.ShapeDtypeStruct((Mp, Np), out_dtype),
            grid=(gm, gn),
            in_specs=[
                pl.BlockSpec((tm, Kp), lambda i, j: (i, 0)),
                pl.BlockSpec((Kp, tn), lambda i, j: (0, j)),
                pl.BlockSpec((1, tn), lambda i, j: (0, j)),
            ],
            out_specs=pl.BlockSpec((tm, tn), lambda i, j: (i, j)),
            compiler_params=pltpu.CompilerParams(
                dimension_semantics=("parallel", "parallel"),
                vmem_limit_bytes=32 * 1024 * 1024),
            cost_estimate=cost,
        )(a_p, b_p, bias_p)
    else:
        out = pl.pallas_call(
            functools.partial(_mm_kernel_multi, relu=relu),
            out_shape=jax.ShapeDtypeStruct((Mp, Np), out_dtype),
            grid=(gm, gn, gk),
            in_specs=[
                pl.BlockSpec((tm, tk), lambda i, j, k: (i, k)),
                pl.BlockSpec((tk, tn), lambda i, j, k: (k, j)),
                pl.BlockSpec((1, tn), lambda i, j, k: (0, j)),
            ],
            out_specs=pl.BlockSpec((tm, tn), lambda i, j, k: (i, j)),
            scratch_shapes=[pltpu.VMEM((tm, tn), jnp.float32)],
            compiler_params=pltpu.CompilerParams(
                dimension_semantics=("parallel", "parallel", "arbitrary"),
                vmem_limit_bytes=32 * 1024 * 1024),
            cost_estimate=cost,
        )(a_p, b_p, bias_p)

    if Mp == M and Np == N:
        return out                       # no slice -> no extra HBM copy
    return out[:M, :N]


def matmul_bias_act(a, b, bias=None, relu=False, out_dtype=jnp.float32):
    """Dispatch: tiny matmuls go to XLA (a Pallas launch would be pure overhead)."""
    M, K = a.shape
    N = b.shape[1]
    if M < _PALLAS_MIN_M or 2 * M * K * N < _PALLAS_MIN_FLOPS:
        y = jnp.dot(a.astype(jnp.bfloat16), b.astype(jnp.bfloat16),
                    preferred_element_type=jnp.float32)
        if bias is not None:
            y = y + bias.astype(jnp.float32)
        if relu:
            y = jnp.maximum(y, 0.0)
        return y.astype(out_dtype)
    return pallas_matmul(a, b, bias, relu=relu, out_dtype=out_dtype)


# ----------------------------------------------------------------------------
# Conv2d (+ folded eval-mode BatchNorm + ReLU) via NHWC im2col + matmul
# ----------------------------------------------------------------------------
def _im2col_nhwc(x, kh, kw, stride, dilation, padding):
    """x: (N, H, W, C) -> patches (N*Ho*Wo, C*kh*kw), column order c*(kh*kw)+tap."""
    # TODO(synk): patches are materialized by XLA (implicit-GEMM conv with tap/Cin as the
    # K grid axis not implemented; it would remove ~9x activation HBM traffic on v5e/v6e).
    N, H, W, C = x.shape
    Ho = (H + 2 * padding - dilation * (kh - 1) - 1) // stride + 1
    Wo = (W + 2 * padding - dilation * (kw - 1) - 1) // stride + 1
    if kh == 1 and kw == 1 and stride == 1 and padding == 0:
        return x.reshape(N * H * W, C), Ho, Wo, N
    xp = jnp.pad(x, ((0, 0), (padding, padding), (padding, padding), (0, 0)))
    cols = []
    for ki in range(kh):
        for kj in range(kw):
            sl = xp[:, ki * dilation: ki * dilation + (Ho - 1) * stride + 1: stride,
                       kj * dilation: kj * dilation + (Wo - 1) * stride + 1: stride, :]
            cols.append(sl)                       # (N, Ho, Wo, C)
    p = jnp.stack(cols, axis=-1)                  # (N, Ho, Wo, C, kh*kw)
    return p.reshape(N * Ho * Wo, C * kh * kw), Ho, Wo, N


def _fold_conv_bn(p):
    """Fold eval-mode BatchNorm into a matmul-layout (K, Cout) bf16 weight + f32 bias."""
    # TODO(synk): BatchNorm folded with running stats (train-mode batch stats not reproduced).
    w = p["w"]                                    # (Cout, Cin, kh, kw) -- PyTorch layout
    cout, cin, kh, kw = w.shape
    wm = w.reshape(cout, cin * kh * kw).T.astype(jnp.float32)   # (K, Cout)
    if "gamma" in p:
        scale = p["gamma"] / jnp.sqrt(p["var"] + 1e-5)
        wm = wm * scale[None, :]
        bias = p["beta"] - p["mean"] * scale
        if "b" in p:
            bias = bias + p["b"] * scale
    else:
        bias = p.get("b", jnp.zeros((cout,), jnp.float32))
    return {"wm": wm.astype(jnp.bfloat16), "bias": bias.astype(jnp.float32)}


def prepare_params(params):
    """Fold/transpose/cast all conv weights ONCE, outside the jitted forward."""
    return {k: _fold_conv_bn(v) for k, v in params.items()}


def conv_bn_relu(x, pm, ksize=1, stride=1, dilation=1, padding=0, relu=True,
                 out_dtype=jnp.bfloat16):
    patches, Ho, Wo, N = _im2col_nhwc(x, ksize, ksize, stride, dilation, padding)
    y = matmul_bias_act(patches, pm["wm"], pm["bias"], relu=relu, out_dtype=out_dtype)
    return y.reshape(N, Ho, Wo, y.shape[-1])


# ----------------------------------------------------------------------------
# ASPP conv branches: 4 independent dots in ONE pallas_call (no zero block-diagonal,
# no duplicated patch matrix, single launch).
# ----------------------------------------------------------------------------
def _aspp4_kernel(a1, b1, c1, a2, b2, c2, a3, b3, c3, a4, b4, c4,
                  o1, o2, o3, o4):
    for a, b, c, o in ((a1, b1, c1, o1), (a2, b2, c2, o2),
                       (a3, b3, c3, o3), (a4, b4, c4, o4)):
        acc = jnp.dot(a[...], b[...], preferred_element_type=jnp.float32) + c[...]
        o[...] = jnp.maximum(acc, 0.0).astype(o.dtype)


def _aspp4_pallas(pts, weights, biases, tm_max=256):
    M = pts[0].shape[0]
    tm = min(tm_max, _round_up(M, 16))
    if _round_up(M, tm) // tm == 1 and tm >= 32:
        tm = _round_up(tm // 2, 16)               # >=2 parallel steps for v7x
    Mp = _round_up(M, tm)
    gm = Mp // tm

    operands, in_specs, out_shapes, out_specs = [], [], [], []
    for p, w, c in zip(pts, weights, biases):
        K = p.shape[1]
        ca = w.shape[1]
        Kp = _round_up(K, 128)
        operands += [
            jnp.pad(p.astype(jnp.bfloat16), ((0, Mp - M), (0, Kp - K))),
            jnp.pad(w.astype(jnp.bfloat16), ((0, Kp - K), (0, 0))),
            c.astype(jnp.float32).reshape(1, ca),
        ]
        in_specs += [
            pl.BlockSpec((tm, Kp), lambda i: (i, 0)),
            pl.BlockSpec((Kp, ca), lambda i: (0, 0)),
            pl.BlockSpec((1, ca), lambda i: (0, 0)),
        ]
        out_shapes.append(jax.ShapeDtypeStruct((Mp, ca), jnp.bfloat16))
        out_specs.append(pl.BlockSpec((tm, ca), lambda i: (i, 0)))

    outs = pl.pallas_call(
        _aspp4_kernel,
        out_shape=tuple(out_shapes),
        grid=(gm,),
        in_specs=in_specs,
        out_specs=tuple(out_specs),
        compiler_params=pltpu.CompilerParams(
            dimension_semantics=("parallel",),
            vmem_limit_bytes=32 * 1024 * 1024),
    )(*operands)
    return jnp.concatenate([o[:M] for o in outs], axis=-1)


def aspp_branches_fused(y, branch_pms, rates=(6, 12, 18)):
    """1x1 + three dilated 3x3 ASPP branches -> one Pallas launch (or XLA if tiny)."""
    Nb, fh, fw, cb = y.shape
    pt1, Ho, Wo, _ = _im2col_nhwc(y, 1, 1, 1, 1, 0)
    pts = [pt1]
    for r in rates:
        pt, ho, wo, _ = _im2col_nhwc(y, 3, 3, 1, r, r)
        assert (ho, wo) == (Ho, Wo)
        pts.append(pt)
    weights = [pm["wm"] for pm in branch_pms]
    biases = [pm["bias"] for pm in branch_pms]

    M = pts[0].shape[0]
    total_flops = 2 * M * sum(w.shape[0] * w.shape[1] for w in weights)
    if total_flops < _PALLAS_MIN_FLOPS:
        outs = []
        for p, w, c in zip(pts, weights, biases):
            o = jnp.dot(p.astype(jnp.bfloat16), w,
                        preferred_element_type=jnp.float32) + c
            outs.append(jnp.maximum(o, 0.0))
        out = jnp.concatenate(outs, axis=-1).astype(jnp.bfloat16)
    else:
        out = _aspp4_pallas(pts, weights, biases)
    return out.reshape(Nb, Ho, Wo, out.shape[-1])


# ----------------------------------------------------------------------------
# Bilinear upsample (align_corners=True): separable f32 einsum in XLA
# (bandwidth-trivial tensor; a Pallas launch here is pure overhead + zero-pad MXU work)
# ----------------------------------------------------------------------------
def _interp_matrix(out_size, in_size):
    if in_size == 1:
        return jnp.ones((out_size, 1), jnp.float32)
    if out_size == 1:
        return jnp.zeros((1, in_size), jnp.float32).at[0, 0].set(1.0)
    scale = (in_size - 1) / (out_size - 1)
    src = jnp.arange(out_size, dtype=jnp.float32) * scale
    lo = jnp.clip(jnp.floor(src).astype(jnp.int32), 0, in_size - 2)
    frac = src - lo.astype(jnp.float32)
    m = jnp.zeros((out_size, in_size), jnp.float32)
    m = m.at[jnp.arange(out_size), lo].add(1.0 - frac)
    m = m.at[jnp.arange(out_size), lo + 1].add(frac)
    return m


def bilinear_upsample_nchw(x, out_h, out_w):
    """F.interpolate(mode='bilinear', align_corners=True), kept in f32."""
    N, C, H, W = x.shape
    A = _interp_matrix(out_h, H)                  # (out_h, H)
    B = _interp_matrix(out_w, W)                  # (out_w, W)
    return jnp.einsum('nchw,oh,pw->ncop', x.astype(jnp.float32), A, B)


# ----------------------------------------------------------------------------
# Deterministic parameter init (synthetic, no checkpoint)
# ----------------------------------------------------------------------------
def _init_conv(key, cout, cin, k, with_bias=False, with_bn=True):
    k0, k1, k2, k3 = jax.random.split(key, 4)
    fan_in = cin * k * k
    p = {"w": jax.random.normal(k0, (cout, cin, k, k), jnp.float32) * (2.0 / fan_in) ** 0.5}
    if with_bias:
        p["b"] = 0.01 * jax.random.normal(k1, (cout,), jnp.float32)
    if with_bn:
        p["gamma"] = 1.0 + 0.1 * jax.random.normal(k2, (cout,), jnp.float32)
        p["beta"] = 0.1 * jax.random.normal(k3, (cout,), jnp.float32)
        p["mean"] = jnp.zeros((cout,), jnp.float32)
        p["var"] = jnp.ones((cout,), jnp.float32)
    return p


def init_deeplabv3(key, in_ch=3, num_classes=3):
    ks = jax.random.split(key, 12)
    cb, ca = 128, 32                              # (scaled-down 2048 / 256)
    return {
        # backbone (ResNet-style, output_stride=16, dilated last block)
        "stem":   _init_conv(ks[0], 16, in_ch, 3),
        "layer1": _init_conv(ks[1], 32, 16, 3),
        "layer2": _init_conv(ks[2], 64, 32, 3),
        "layer3": _init_conv(ks[3], 64, 64, 3),
        "layer4": _init_conv(ks[4], cb, 64, 3),
        # ASPP (rates 1, 6, 12, 18 for output_stride=16)
        "aspp1":  _init_conv(ks[5], ca, cb, 1),
        "aspp2":  _init_conv(ks[6], ca, cb, 3),
        "aspp3":  _init_conv(ks[7], ca, cb, 3),
        "aspp4":  _init_conv(ks[8], ca, cb, 3),
        "gap":    _init_conv(ks[9], ca, cb, 1),
        "proj":   _init_conv(ks[10], ca, 5 * ca, 1),
        "cls":    _init_conv(ks[11], num_classes, ca, 1, with_bias=True, with_bn=False),
    }


# ----------------------------------------------------------------------------
# Forward pass: backbone -> ASPP -> bilinear upsample to input size
# ----------------------------------------------------------------------------
def deeplabv3_forward(pp, x):
    N, C, H, W = x.shape
    y = jnp.transpose(x, (0, 2, 3, 1)).astype(jnp.bfloat16)   # NHWC / bf16 internally

    # backbone (total stride 16, last stage dilated)
    y = conv_bn_relu(y, pp["stem"],   ksize=3, stride=2, padding=1)
    y = conv_bn_relu(y, pp["layer1"], ksize=3, stride=2, padding=1)
    y = conv_bn_relu(y, pp["layer2"], ksize=3, stride=2, padding=1)
    y = conv_bn_relu(y, pp["layer3"], ksize=3, stride=2, padding=1)
    y = conv_bn_relu(y, pp["layer4"], ksize=3, stride=1, dilation=2, padding=2)

    Nb, fh, fw, cb = y.shape

    # ASPP: four conv branches in one Pallas launch (separate dots, no zero padding)
    aspp = aspp_branches_fused(
        y, (pp["aspp1"], pp["aspp2"], pp["aspp3"], pp["aspp4"]))

    # image-pooling branch: global average pool + 1x1 conv (tiny -> XLA), broadcast
    pooled = jnp.mean(y.astype(jnp.float32), axis=(1, 2),
                      keepdims=True).astype(jnp.bfloat16)
    b5 = conv_bn_relu(pooled, pp["gap"], ksize=1)              # (N,1,1,ca)
    b5 = jnp.broadcast_to(b5, (Nb, fh, fw, b5.shape[-1]))

    cat = jnp.concatenate([aspp, b5], axis=-1)
    z = conv_bn_relu(cat, pp["proj"], ksize=1)
    # TODO(synk): ASPP Dropout(0.5) skipped (eval-mode inference).
    z = conv_bn_relu(z, pp["cls"], ksize=1, relu=False, out_dtype=jnp.float32)

    # F.interpolate(..., size=input HxW, mode='bilinear', align_corners=True)
    z = jnp.transpose(z, (0, 3, 1, 2))                         # tiny tensor -> NCHW
    return bilinear_upsample_nchw(z, H, W).astype(jnp.float32)


if __name__ == "__main__":
    key = jax.random.PRNGKey(0)
    kp, kx = jax.random.split(key)
    params = init_deeplabv3(kp, in_ch=3, num_classes=3)
    pp = prepare_params(params)                   # fold BN / transpose / bf16 cast once
    x = jax.random.normal(kx, (2, 3, 64, 64), jnp.float32)     # NCHW, like PyTorch
    fwd = jax.jit(deeplabv3_forward)
    out = jax.block_until_ready(fwd(pp, x))
    assert out.shape == (2, 3, 64, 64), out.shape
    assert out.dtype == jnp.float32
    print("KERNEL_OK")
</pallas_src>

<mosaic_0001>
module attributes {stable_mosaic.version = 11 : i64} {
  func.func @_mm_kernel_single(%arg0: i32, %arg1: i32, %arg2: memref<256x128xbf16, #tpu.memory_space<vmem>>, %arg3: memref<128x128xbf16, #tpu.memory_space<vmem>>, %arg4: memref<1x128xf32, #tpu.memory_space<vmem>>, %arg5: memref<256x128xbf16, #tpu.memory_space<vmem>>) attributes {dimension_semantics = [#tpu.dimension_semantics<parallel>, #tpu.dimension_semantics<parallel>], iteration_bounds = array<i64: 8, 1>, scalar_prefetch = 0 : i64, scratch_operands = 0 : i64, tpu.core_type = #tpu.core_type<tc>, window_params = [{transform_indices = @transform_0, window_bounds = array<i64: 256, 128>}, {transform_indices = @transform_1, window_bounds = array<i64: 128, 128>}, {transform_indices = @transform_2, window_bounds = array<i64: 1, 128>}, {transform_indices = @transform_3, window_bounds = array<i64: 256, 128>}]} {
    %c0 = arith.constant 0 : index
    %c0_0 = arith.constant 0 : index
    %0 = vector.load %arg2[%c0, %c0_0] : memref<256x128xbf16, #tpu.memory_space<vmem>>, vector<256x128xbf16>
    %c0_1 = arith.constant 0 : index
    %c0_2 = arith.constant 0 : index
    %1 = vector.load %arg3[%c0_1, %c0_2] : memref<128x128xbf16, #tpu.memory_space<vmem>>, vector<128x128xbf16>
    %cst = arith.constant dense<0.000000e+00> : vector<256x128xf32>
    %2 = tpu.matmul %0, %1, %cst {dimension_numbers = #tpu.dot_dimension_numbers<[1], [0], [0], [1], [0, 0, 1, 1], [], []>} : vector<256x128xbf16>, vector<128x128xbf16>, vector<256x128xf32> -> vector<256x128xf32>
    %c0_3 = arith.constant 0 : index
    %c0_4 = arith.constant 0 : index
    %3 = vector.load %arg4[%c0_3, %c0_4] : memref<1x128xf32, #tpu.memory_space<vmem>>, vector<1x128xf32>
    %4 = vector.broadcast %3 : vector<1x128xf32> to vector<256x128xf32>
    %5 = arith.addf %2, %4 : vector<256x128xf32>
    %cst_5 = arith.constant 0.000000e+00 : f32
    %6 = vector.broadcast %cst_5 : f32 to vector<256x128xf32>
    %7 = arith.maximumf %5, %6 : vector<256x128xf32>
    %8 = arith.truncf %7 : vector<256x128xf32> to vector<256x128xbf16>
    %c0_6 = arith.constant 0 : index
    %c0_7 = arith.constant 0 : index
    %9 = vector.load %arg5[%c0_6, %c0_7] : memref<256x128xbf16, #tpu.memory_space<vmem>>, vector<256x128xbf16>
    tpu.vector_store %arg5[%c0_6, %c0_7], %8 {strides = array<i32>} : memref<256x128xbf16, #tpu.memory_space<vmem>>, vector<256x128xbf16>,
    return
  }
  func.func @transform_0(%arg0: i32, %arg1: i32) -> (i32, i32) {
    %c0_i32 = arith.constant 0 : i32
    %c0_i32_0 = arith.constant 0 : i32
    return %arg0, %c0_i32 : i32, i32
  }
  func.func @transform_1(%arg0: i32, %arg1: i32) -> (i32, i32) {
    %c0_i32 = arith.constant 0 : i32
    %c0_i32_0 = arith.constant 0 : i32
    return %c0_i32, %arg1 : i32, i32
  }
  func.func @transform_2(%arg0: i32, %arg1: i32) -> (i32, i32) {
    %c0_i32 = arith.constant 0 : i32
    %c0_i32_0 = arith.constant 0 : i32
    return %c0_i32, %arg1 : i32, i32
  }
  func.func @transform_3(%arg0: i32, %arg1: i32) -> (i32, i32) {
    %c0_i32 = arith.constant 0 : i32
    return %arg0, %arg1 : i32, i32
  }
}

module attributes {stable_mosaic.version = 11 : i64} {
  func.func @_mm_kernel_single(%arg0: i32, %arg1: i32, %arg2: memref<256x256xbf16, #tpu.memory_space<vmem>>, %arg3: memref<256x128xbf16, #tpu.memory_space<vmem>>, %arg4: memref<1x128xf32, #tpu.memory_space<vmem>>, %arg5: memref<256x128xbf16, #tpu.memory_space<vmem>>) attributes {dimension_semantics = [#tpu.dimension_semantics<parallel>, #tpu.dimension_semantics<parallel>], iteration_bounds = array<i64: 2, 1>, scalar_prefetch = 0 : i64, scratch_operands = 0 : i64, tpu.core_type = #tpu.core_type<tc>, window_params = [{transform_indices = @transform_0, window_bounds = array<i64: 256, 256>}, {transform_indices = @transform_1, window_bounds = array<i64: 256, 128>}, {transform_indices = @transform_2, window_bounds = array<i64: 1, 128>}, {transform_indices = @transform_3, window_bounds = array<i64: 256, 128>}]} {
    %c0 = arith.constant 0 : index
    %c0_0 = arith.constant 0 : index
    %0 = vector.load %arg2[%c0, %c0_0] : memref<256x256xbf16, #tpu.memory_space<vmem>>, vector<256x256xbf16>
    %c0_1 = arith.constant 0 : index
    %c0_2 = arith.constant 0 : index
    %1 = vector.load %arg3[%c0_1, %c0_2] : memref<256x128xbf16, #tpu.memory_space<vmem>>, vector<256x128xbf16>
    %cst = arith.constant dense<0.000000e+00> : vector<256x128xf32>
    %2 = tpu.matmul %0, %1, %cst {dimension_numbers = #tpu.dot_dimension_numbers<[1], [0], [0], [1], [0, 0, 1, 1], [], []>} : vector<256x256xbf16>, vector<256x128xbf16>, vector<256x128xf32> -> vector<256x128xf32>
    %c0_3 = arith.constant 0 : index
    %c0_4 = arith.constant 0 : index
    %3 = vector.load %arg4[%c0_3, %c0_4] : memref<1x128xf32, #tpu.memory_space<vmem>>, vector<1x128xf32>
    %4 = vector.broadcast %3 : vector<1x128xf32> to vector<256x128xf32>
    %5 = arith.addf %2, %4 : vector<256x128xf32>
    %cst_5 = arith.constant 0.000000e+00 : f32
    %6 = vector.broadcast %cst_5 : f32 to vector<256x128xf32>
    %7 = arith.maximumf %5, %6 : vector<256x128xf32>
    %8 = arith.truncf %7 : vector<256x128xf32> to vector<256x128xbf16>
    %c0_6 = arith.constant 0 : index
    %c0_7 = arith.constant 0 : index
    %9 = vector.load %arg5[%c0_6, %c0_7] : memref<256x128xbf16, #tpu.memory_space<vmem>>, vector<256x128xbf16>
    tpu.vector_store %arg5[%c0_6, %c0_7], %8 {strides = array<i32>} : memref<256x128xbf16, #tpu.memory_space<vmem>>, vector<256x128xbf16>,
    return
  }
  func.func @transform_0(%arg0: i32, %arg1: i32) -> (i32, i32) {
    %c0_i32 = arith.constant 0 : i32
    %c0_i32_0 = arith.constant 0 : i32
    return %arg0, %c0_i32 : i32, i32
  }
  func.func @transform_1(%arg0: i32, %arg1: i32) -> (i32, i32) {
    %c0_i32 = arith.constant 0 : i32
    %c0_i32_0 = arith.constant 0 : i32
    return %c0_i32, %arg1 : i32, i32
  }
  func.func @transform_2(%arg0: i32, %arg1: i32) -> (i32, i32) {
    %c0_i32 = arith.constant 0 : i32
    %c0_i32_0 = arith.constant 0 : i32
    return %c0_i32, %arg1 : i32, i32
  }
  func.func @transform_3(%arg0: i32, %arg1: i32) -> (i32, i32) {
    %c0_i32 = arith.constant 0 : i32
    return %arg0, %arg1 : i32, i32
  }
}

module attributes {stable_mosaic.version = 11 : i64} {
  func.func @_mm_kernel_single(%arg0: i32, %arg1: i32, %arg2: memref<64x384xbf16, #tpu.memory_space<vmem>>, %arg3: memref<384x128xbf16, #tpu.memory_space<vmem>>, %arg4: memref<1x128xf32, #tpu.memory_space<vmem>>, %arg5: memref<64x128xbf16, #tpu.memory_space<vmem>>) attributes {dimension_semantics = [#tpu.dimension_semantics<parallel>, #tpu.dimension_semantics<parallel>], iteration_bounds = array<i64: 2, 1>, scalar_prefetch = 0 : i64, scratch_operands = 0 : i64, tpu.core_type = #tpu.core_type<tc>, window_params = [{transform_indices = @transform_0, window_bounds = array<i64: 64, 384>}, {transform_indices = @transform_1, window_bounds = array<i64: 384, 128>}, {transform_indices = @transform_2, window_bounds = array<i64: 1, 128>}, {transform_indices = @transform_3, window_bounds = array<i64: 64, 128>}]} {
    %c0 = arith.constant 0 : index
    %c0_0 = arith.constant 0 : index
    %0 = vector.load %arg2[%c0, %c0_0] : memref<64x384xbf16, #tpu.memory_space<vmem>>, vector<64x384xbf16>
    %c0_1 = arith.constant 0 : index
    %c0_2 = arith.constant 0 : index
    %1 = vector.load %arg3[%c0_1, %c0_2] : memref<384x128xbf16, #tpu.memory_space<vmem>>, vector<384x128xbf16>
    %cst = arith.constant dense<0.000000e+00> : vector<64x128xf32>
    %2 = tpu.matmul %0, %1, %cst {dimension_numbers = #tpu.dot_dimension_numbers<[1], [0], [0], [1], [0, 0, 1, 1], [], []>} : vector<64x384xbf16>, vector<384x128xbf16>, vector<64x128xf32> -> vector<64x128xf32>
    %c0_3 = arith.constant 0 : index
    %c0_4 = arith.constant 0 : index
    %3 = vector.load %arg4[%c0_3, %c0_4] : memref<1x128xf32, #tpu.memory_space<vmem>>, vector<1x128xf32>
    %4 = vector.broadcast %3 : vector<1x128xf32> to vector<64x128xf32>
    %5 = arith.addf %2, %4 : vector<64x128xf32>
    %cst_5 = arith.constant 0.000000e+00 : f32
    %6 = vector.broadcast %cst_5 : f32 to vector<64x128xf32>
    %7 = arith.maximumf %5, %6 : vector<64x128xf32>
    %8 = arith.truncf %7 : vector<64x128xf32> to vector<64x128xbf16>
    %c0_6 = arith.constant 0 : index
    %c0_7 = arith.constant 0 : index
    %9 = vector.load %arg5[%c0_6, %c0_7] : memref<64x128xbf16, #tpu.memory_space<vmem>>, vector<64x128xbf16>
    tpu.vector_store %arg5[%c0_6, %c0_7], %8 {strides = array<i32>} : memref<64x128xbf16, #tpu.memory_space<vmem>>, vector<64x128xbf16>,
    return
  }
  func.func @transform_0(%arg0: i32, %arg1: i32) -> (i32, i32) {
    %c0_i32 = arith.constant 0 : i32
    %c0_i32_0 = arith.constant 0 : i32
    return %arg0, %c0_i32 : i32, i32
  }
  func.func @transform_1(%arg0: i32, %arg1: i32) -> (i32, i32) {
    %c0_i32 = arith.constant 0 : i32
    %c0_i32_0 = arith.constant 0 : i32
    return %c0_i32, %arg1 : i32, i32
  }
  func.func @transform_2(%arg0: i32, %arg1: i32) -> (i32, i32) {
    %c0_i32 = arith.constant 0 : i32
    %c0_i32_0 = arith.constant 0 : i32
    return %c0_i32, %arg1 : i32, i32
  }
  func.func @transform_3(%arg0: i32, %arg1: i32) -> (i32, i32) {
    %c0_i32 = arith.constant 0 : i32
    return %arg0, %arg1 : i32, i32
  }
}

module attributes {stable_mosaic.version = 11 : i64} {
  func.func @_aspp4_kernel(%arg0: i32, %arg1: memref<16x128xbf16, #tpu.memory_space<vmem>>, %arg2: memref<128x32xbf16, #tpu.memory_space<vmem>>, %arg3: memref<1x32xf32, #tpu.memory_space<vmem>>, %arg4: memref<16x1152xbf16, #tpu.memory_space<vmem>>, %arg5: memref<1152x32xbf16, #tpu.memory_space<vmem>>, %arg6: memref<1x32xf32, #tpu.memory_space<vmem>>, %arg7: memref<16x1152xbf16, #tpu.memory_space<vmem>>, %arg8: memref<1152x32xbf16, #tpu.memory_space<vmem>>, %arg9: memref<1x32xf32, #tpu.memory_space<vmem>>, %arg10: memref<16x1152xbf16, #tpu.memory_space<vmem>>, %arg11: memref<1152x32xbf16, #tpu.memory_space<vmem>>, %arg12: memref<1x32xf32, #tpu.memory_space<vmem>>, %arg13: memref<16x32xbf16, #tpu.memory_space<vmem>>, %arg14: memref<16x32xbf16, #tpu.memory_space<vmem>>, %arg15: memref<16x32xbf16, #tpu.memory_space<vmem>>, %arg16: memref<16x32xbf16, #tpu.memory_space<vmem>>) attributes {dimension_semantics = [#tpu.dimension_semantics<parallel>], iteration_bounds = array<i64: 2>, scalar_prefetch = 0 : i64, scratch_operands = 0 : i64, tpu.core_type = #tpu.core_type<tc>, window_params = [{transform_indices = @transform_0, window_bounds = array<i64: 16, 128>}, {pipeline_mode = #tpu.pipeline_mode<synchronous>, transform_indices = @transform_1, window_bounds = array<i64: 128, 32>}, {pipeline_mode = #tpu.pipeline_mode<synchronous>, transform_indices = @transform_2, window_bounds = array<i64: 1, 32>}, {transform_indices = @transform_3, window_bounds = array<i64: 16, 1152>}, {pipeline_mode = #tpu.pipeline_mode<synchronous>, transform_indices = @transform_4, window_bounds = array<i64: 1152, 32>}, {pipeline_mode = #tpu.pipeline_mode<synchronous>, transform_indices = @transform_5, window_bounds = array<i64: 1, 32>}, {transform_indices = @transform_6, window_bounds = array<i64: 16, 1152>}, {pipeline_mode = #tpu.pipeline_mode<synchronous>, transform_indices = @transform_7, window_bounds = array<i64: 1152, 32>}, {pipeline_mode = #tpu.pipeline_mode<synchronous>, transform_indices = @transform_8, window_bounds = array<i64: 1, 32>}, {transform_indices = @transform_9, window_bounds = array<i64: 16, 1152>}, {pipeline_mode = #tpu.pipeline_mode<synchronous>, transform_indices = @transform_10, window_bounds = array<i64: 1152, 32>}, {pipeline_mode = #tpu.pipeline_mode<synchronous>, transform_indices = @transform_11, window_bounds = array<i64: 1, 32>}, {transform_indices = @transform_12, window_bounds = array<i64: 16, 32>}, {transform_indices = @transform_13, window_bounds = array<i64: 16, 32>}, {transform_indices = @transform_14, window_bounds = array<i64: 16, 32>}, {transform_indices = @transform_15, window_bounds = array<i64: 16, 32>}]} {
    %c0 = arith.constant 0 : index
    %c0_0 = arith.constant 0 : index
    %0 = vector.load %arg1[%c0, %c0_0] : memref<16x128xbf16, #tpu.memory_space<vmem>>, vector<16x128xbf16>
    %c0_1 = arith.constant 0 : index
    %c0_2 = arith.constant 0 : index
    %1 = vector.load %arg2[%c0_1, %c0_2] : memref<128x32xbf16, #tpu.memory_space<vmem>>, vector<128x32xbf16>
    %cst = arith.constant dense<0.000000e+00> : vector<16x32xf32>
    %2 = tpu.matmul %0, %1, %cst {dimension_numbers = #tpu.dot_dimension_numbers<[1], [0], [0], [1], [0, 0, 1, 1], [], []>} : vector<16x128xbf16>, vector<128x32xbf16>, vector<16x32xf32> -> vector<16x32xf32>
    %c0_3 = arith.constant 0 : index
    %c0_4 = arith.constant 0 : index
    %3 = vector.load %arg3[%c0_3, %c0_4] : memref<1x32xf32, #tpu.memory_space<vmem>>, vector<1x32xf32>
    %4 = vector.broadcast %3 : vector<1x32xf32> to vector<16x32xf32>
    %5 = arith.addf %2, %4 : vector<16x32xf32>
    %cst_5 = arith.constant 0.000000e+00 : f32
    %6 = vector.broadcast %cst_5 : f32 to vector<16x32xf32>
    %7 = arith.maximumf %5, %6 : vector<16x32xf32>
    %8 = arith.truncf %7 : vector<16x32xf32> to vector<16x32xbf16>
    %c0_6 = arith.constant 0 : index
    %c0_7 = arith.constant 0 : index
    %9 = vector.load %arg13[%c0_6, %c0_7] : memref<16x32xbf16, #tpu.memory_space<vmem>>, vector<16x32xbf16>
    tpu.vector_store %arg13[%c0_6, %c0_7], %8 {strides = array<i32>} : memref<16x32xbf16, #tpu.memory_space<vmem>>, vector<16x32xbf16>,
    %c0_8 = arith.constant 0 : index
    %c0_9 = arith.constant 0 : index
    %10 = vector.load %arg4[%c0_8, %c0_9] : memref<16x1152xbf16, #tpu.memory_space<vmem>>, vector<16x1152xbf16>
    %c0_10 = arith.constant 0 : index
    %c0_11 = arith.constant 0 : index
    %11 = vector.load %arg5[%c0_10, %c0_11] : memref<1152x32xbf16, #tpu.memory_space<vmem>>, vector<1152x32xbf16>
    %cst_12 = arith.constant dense<0.000000e+00> : vector<16x32xf32>
    %12 = tpu.matmul %10, %11, %cst_12 {dimension_numbers = #tpu.dot_dimension_numbers<[1], [0], [0], [1], [0, 0, 1, 1], [], []>} : vector<16x1152xbf16>, vector<1152x32xbf16>, vector<16x32xf32> -> vector<16x32xf32>
    %c0_13 = arith.constant 0 : index
    %c0_14 = arith.constant 0 : index
    %13 = vector.load %arg6[%c0_13, %c0_14] : memref<1x32xf32, #tpu.memory_space<vmem>>, vector<1x32xf32>
    %14 = vector.broadcast %13 : vector<1x32xf32> to vector<16x32xf32>
    %15 = arith.addf %12, %14 : vector<16x32xf32>
    %cst_15 = arith.constant 0.000000e+00 : f32
    %16 = vector.broadcast %cst_15 : f32 to vector<16x32xf32>
    %17 = arith.maximumf %15, %16 : vector<16x32xf32>
    %18 = arith.truncf %17 : vector<16x32xf32> to vector<16x32xbf16>
    %c0_16 = arith.constant 0 : index
    %c0_17 = arith.constant 0 : index
    %19 = vector.load %arg14[%c0_16, %c0_17] : memref<16x32xbf16, #tpu.memory_space<vmem>>, vector<16x32xbf16>
    tpu.vector_store %arg14[%c0_16, %c0_17], %18 {strides = array<i32>} : memref<16x32xbf16, #tpu.memory_space<vmem>>, vector<16x32xbf16>,
    %c0_18 = arith.constant 0 : index
    %c0_19 = arith.constant 0 : index
    %20 = vector.load %arg7[%c0_18, %c0_19] : memref<16x1152xbf16, #tpu.memory_space<vmem>>, vector<16x1152xbf16>
    %c0_20 = arith.constant 0 : index
    %c0_21 = arith.constant 0 : index
    %21 = vector.load %arg8[%c0_20, %c0_21] : memref<1152x32xbf16, #tpu.memory_space<vmem>>, vector<1152x32xbf16>
    %cst_22 = arith.constant dense<0.000000e+00> : vector<16x32xf32>
    %22 = tpu.matmul %20, %21, %cst_22 {dimension_numbers = #tpu.dot_dimension_numbers<[1], [0], [0], [1], [0, 0, 1, 1], [], []>} : vector<16x1152xbf16>, vector<1152x32xbf16>, vector<16x32xf32> -> vector<16x32xf32>
    %c0_23 = arith.constant 0 : index
    %c0_24 = arith.constant 0 : index
    %23 = vector.load %arg9[%c0_23, %c0_24] : memref<1x32xf32, #tpu.memory_space<vmem>>, vector<1x32xf32>
    %24 = vector.broadcast %23 : vector<1x32xf32> to vector<16x32xf32>
    %25 = arith.addf %22, %24 : vector<16x32xf32>
    %cst_25 = arith.constant 0.000000e+00 : f32
    %26 = vector.broadcast %cst_25 : f32 to vector<16x32xf32>
    %27 = arith.maximumf %25, %26 : vector<16x32xf32>
    %28 = arith.truncf %27 : vector<16x32xf32> to vector<16x32xbf16>
    %c0_26 = arith.constant 0 : index
    %c0_27 = arith.constant 0 : index
    %29 = vector.load %arg15[%c0_26, %c0_27] : memref<16x32xbf16, #tpu.memory_space<vmem>>, vector<16x32xbf16>
    tpu.vector_store %arg15[%c0_26, %c0_27], %28 {strides = array<i32>} : memref<16x32xbf16, #tpu.memory_space<vmem>>, vector<16x32xbf16>,
    %c0_28 = arith.constant 0 : index
    %c0_29 = arith.constant 0 : index
    %30 = vector.load %arg10[%c0_28, %c0_29] : memref<16x1152xbf16, #tpu.memory_space<vmem>>, vector<16x1152xbf16>
    %c0_30 = arith.constant 0 : index
    %c0_31 = arith.constant 0 : index
    %31 = vector.load %arg11[%c0_30, %c0_31] : memref<1152x32xbf16, #tpu.memory_space<vmem>>, vector<1152x32xbf16>
    %cst_32 = arith.constant dense<0.000000e+00> : vector<16x32xf32>
    %32 = tpu.matmul %30, %31, %cst_32 {dimension_numbers = #tpu.dot_dimension_numbers<[1], [0], [0], [1], [0, 0, 1, 1], [], []>} : vector<16x1152xbf16>, vector<1152x32xbf16>, vector<16x32xf32> -> vector<16x32xf32>
    %c0_33 = arith.constant 0 : index
    %c0_34 = arith.constant 0 : index
    %33 = vector.load %arg12[%c0_33, %c0_34] : memref<1x32xf32, #tpu.memory_space<vmem>>, vector<1x32xf32>
    %34 = vector.broadcast %33 : vector<1x32xf32> to vector<16x32xf32>
    %35 = arith.addf %32, %34 : vector<16x32xf32>
    %cst_35 = arith.constant 0.000000e+00 : f32
    %36 = vector.broadcast %cst_35 : f32 to vector<16x32xf32>
    %37 = arith.maximumf %35, %36 : vector<16x32xf32>
    %38 = arith.truncf %37 : vector<16x32xf32> to vector<16x32xbf16>
    %c0_36 = arith.constant 0 : index
    %c0_37 = arith.constant 0 : index
    %39 = vector.load %arg16[%c0_36, %c0_37] : memref<16x32xbf16, #tpu.memory_space<vmem>>, vector<16x32xbf16>
    tpu.vector_store %arg16[%c0_36, %c0_37], %38 {strides = array<i32>} : memref<16x32xbf16, #tpu.memory_space<vmem>>, vector<16x32xbf16>,
    return
  }
  func.func @transform_0(%arg0: i32) -> (i32, i32) {
    %c0_i32 = arith.constant 0 : i32
    %c0_i32_0 = arith.constant 0 : i32
    return %arg0, %c0_i32 : i32, i32
  }
  func.func @transform_1(%arg0: i32) -> (i32, i32) {
    %c0_i32 = arith.constant 0 : i32
    %c0_i32_0 = arith.constant 0 : i32
    %c0_i32_1 = arith.constant 0 : i32
    return %c0_i32, %c0_i32_0 : i32, i32
  }
  func.func @transform_2(%arg0: i32) -> (i32, i32) {
    %c0_i32 = arith.constant 0 : i32
    %c0_i32_0 = arith.constant 0 : i32
    %c0_i32_1 = arith.constant 0 : i32
    return %c0_i32, %c0_i32_0 : i32, i32
  }
  func.func @transform_3(%arg0: i32) -> (i32, i32) {
    %c0_i32 = arith.constant 0 : i32
    %c0_i32_0 = arith.constant 0 : i32
    return %arg0, %c0_i32 : i32, i32
  }
  func.func @transform_4(%arg0: i32) -> (i32, i32) {
    %c0_i32 = arith.constant 0 : i32
    %c0_i32_0 = arith.constant 0 : i32
    %c0_i32_1 = arith.constant 0 : i32
    return %c0_i32, %c0_i32_0 : i32, i32
  }
  func.func @transform_5(%arg0: i32) -> (i32, i32) {
    %c0_i32 = arith.constant 0 : i32
    %c0_i32_0 = arith.constant 0 : i32
    %c0_i32_1 = arith.constant 0 : i32
    return %c0_i32, %c0_i32_0 : i32, i32
  }
  func.func @transform_6(%arg0: i32) -> (i32, i32) {
    %c0_i32 = arith.constant 0 : i32
    %c0_i32_0 = arith.constant 0 : i32
    return %arg0, %c0_i32 : i32, i32
  }
  func.func @transform_7(%arg0: i32) -> (i32, i32) {
    %c0_i32 = arith.constant 0 : i32
    %c0_i32_0 = arith.constant 0 : i32
    %c0_i32_1 = arith.constant 0 : i32
    return %c0_i32, %c0_i32_0 : i32, i32
  }
  func.func @transform_8(%arg0: i32) -> (i32, i32) {
    %c0_i32 = arith.constant 0 : i32
    %c0_i32_0 = arith.constant 0 : i32
    %c0_i32_1 = arith.constant 0 : i32
    return %c0_i32, %c0_i32_0 : i32, i32
  }
  func.func @transform_9(%arg0: i32) -> (i32, i32) {
    %c0_i32 = arith.constant 0 : i32
    %c0_i32_0 = arith.constant 0 : i32
    return %arg0, %c0_i32 : i32, i32
  }
  func.func @transform_10(%arg0: i32) -> (i32, i32) {
    %c0_i32 = arith.constant 0 : i32
    %c0_i32_0 = arith.constant 0 : i32
    %c0_i32_1 = arith.constant 0 : i32
    return %c0_i32, %c0_i32_0 : i32, i32
  }
  func.func @transform_11(%arg0: i32) -> (i32, i32) {
    %c0_i32 = arith.constant 0 : i32
    %c0_i32_0 = arith.constant 0 : i32
    %c0_i32_1 = arith.constant 0 : i32
    return %c0_i32, %c0_i32_0 : i32, i32
  }
  func.func @transform_12(%arg0: i32) -> (i32, i32) {
    %c0_i32 = arith.constant 0 : i32
    %c0_i32_0 = arith.constant 0 : i32
    return %arg0, %c0_i32 : i32, i32
  }
  func.func @transform_13(%arg0: i32) -> (i32, i32) {
    %c0_i32 = arith.constant 0 : i32
    %c0_i32_0 = arith.constant 0 : i32
    return %arg0, %c0_i32 : i32, i32
  }
  func.func @transform_14(%arg0: i32) -> (i32, i32) {
    %c0_i32 = arith.constant 0 : i32
    %c0_i32_0 = arith.constant 0 : i32
    return %arg0, %c0_i32 : i32, i32
  }
  func.func @transform_15(%arg0: i32) -> (i32, i32) {
    %c0_i32 = arith.constant 0 : i32
    %c0_i32_0 = arith.constant 0 : i32
    return %arg0, %c0_i32 : i32, i32
  }
}

</mosaic_0001>

<llo_original>
// kernel: deeplabv3_forward.4
$region0: #{deeplabv3_forward.4}
  #allocation0 [shape = 'u32[]', space=smem, size = 0x4, offset = 0x4, fixed_abs, tag = 'smem constant byte address 0x4 - core index']
  #allocation1 [shape = 'u32[72,128]{1,0:T(1,128)}', space=vmem, size = 0x9000, scoped, tag = 'internal scratch']
  %s0 = inlined_call_operand.vmem [shape: bf16[2048,128], index: 0, kind: input, shape index: {}]
  %s1 = inlined_call_operand.vmem [shape: bf16[128,128], index: 1, kind: input, shape index: {}]
  %s2 = inlined_call_operand.vmem [shape: f32[1,128], index: 2, kind: input, shape index: {}]
  %s3 = inlined_call_operand.vmem [shape: bf16[2048,128], index: 3, kind: output, shape index: {}]
  %s4 = sld [smem:[#allocation0]]
  $region45: #{deeplabv3_forward.4} parent=0
    _
  %s6 = ssub.s32 1, %s4
  %s7 = scalar_select 0, %s6, %s4
  loop: start=0, step=1, limit=10
  $region2: #{deeplabv3_forward.4} parent=0 // loop_pre_header
    _
  $region3: #{deeplabv3_forward.4} parent=0 // loop_header
    %s9 = sphi 0, %s13
    %p10 = scmp.ge.s32.totalorder %s9, 10
    %s16 = sphi 0, %s28
    %s17 = sphi 0, %s24
    %s18 = sphi 0, %s16
    %s19 = sphi 0, %s17
    %s20 = sphi 0, %s18
    %s21 = sphi 0, %s19
    %s31 = sphi 0, %s33
    %s34 = sphi 0, %s31
    %s35 = sphi 0, %s34
    %s51 = sphi 0, %s35
    %s57 = sphi 0, %s59
    %s60 = sphi 0, %s57
    %s61 = sphi 0, %s60
    %s77 = sphi 0, %s61
    %s83 = sphi 0, %s85
    %s86 = sphi 0, %s83
    %s87 = sphi 0, %s86
    %s103 = sphi 0, %s87
    %s111 = sphi 0, %s113
    %s114 = sphi 0, %s111
    %s115 = sphi 0, %s114
    %s131 = sphi 0, %s115
  $region4: #{deeplabv3_forward.4} parent=0 // loop_header_branch
    %12 = sbr.rel (%p10) target = $region8
  $region5: #{deeplabv3_forward.4} parent=0 // loop_body
    %s14 = ssub.s32 %s9, 1
    %s15 = ssub.s32 %s9, 2
    %s22 = sadd.s32 1, %s17
    %p23 = scmp.ge.s32.totalorder %s22, 1
    %s24 = scalar_select %p23, 0, %s22
    %s25 = sadd.s32 1, %s16
    %s26 = scalar_select %p23, %s25, %s16
    %p27 = scmp.ge.s32.totalorder %s26, 8
    %s28 = scalar_select %p27, 0, %s26
    %s29 = ssub.s32 %s16, %s28
    %p30 = scmp.eq.s32.totalorder %s29, 0
    %s32 = sadd.s32 %s31, 1
    %s33 = scalar_select %p30, %s31, %s32
    %p36 = pneg %p30
    %p37 = scmp.eq.s32.totalorder %s9, 7
    %p38 = por %p36, %p37
    %p39 = scmp.ne.s32.totalorder %s31, %s34
    %p40 = scmp.eq.s32.totalorder %s9, 0
    %p41 = por %p39, %p40
    %p42 = scmp.ne.s32.totalorder %s31, %s34
    %p43 = scmp.eq.s32.totalorder %s14, 7
    %p44 = por %p42, %p43
    %p45 = scmp.ne.s32.totalorder %s34, %s35
    %p46 = scmp.eq.s32.totalorder %s14, 0
    %p47 = por %p45, %p46
    %p48 = scmp.ne.s32.totalorder %s34, %s35
    %p49 = scmp.eq.s32.totalorder %s15, 7
    %p50 = por %p48, %p49
    %p52 = scmp.ne.s32.totalorder %s35, %s51
    %p53 = scmp.eq.s32.totalorder %s15, 0
    %p54 = por %p52, %p53
    %s55 = ssub.s32 %s17, %s24
    %p56 = scmp.eq.s32.totalorder %s55, 0
    %s58 = sadd.s32 %s57, 1
    %s59 = scalar_select %p56, %s57, %s58
    %p62 = pneg %p56
    %p63 = scmp.eq.s32.totalorder %s9, 7
    %p64 = por %p62, %p63
    %p65 = scmp.ne.s32.totalorder %s57, %s60
    %p66 = scmp.eq.s32.totalorder %s9, 0
    %p67 = por %p65, %p66
    %p68 = scmp.ne.s32.totalorder %s57, %s60
    %p69 = scmp.eq.s32.totalorder %s14, 7
    %p70 = por %p68, %p69
    %p71 = scmp.ne.s32.totalorder %s60, %s61
    %p72 = scmp.eq.s32.totalorder %s14, 0
    %p73 = por %p71, %p72
    %p74 = scmp.ne.s32.totalorder %s60, %s61
    %p75 = scmp.eq.s32.totalorder %s15, 7
    %p76 = por %p74, %p75
    %p78 = scmp.ne.s32.totalorder %s61, %s77
    %p79 = scmp.eq.s32.totalorder %s15, 0
    %p80 = por %p78, %p79
    %s81 = ssub.s32 %s17, %s24
    %p82 = scmp.eq.s32.totalorder %s81, 0
    %s84 = sadd.s32 %s83, 1
    %s85 = scalar_select %p82, %s83, %s84
    %p88 = pneg %p82
    %p89 = scmp.eq.s32.totalorder %s9, 7
    %p90 = por %p88, %p89
    %p91 = scmp.ne.s32.totalorder %s83, %s86
    %p92 = scmp.eq.s32.totalorder %s9, 0
    %p93 = por %p91, %p92
    %p94 = scmp.ne.s32.totalorder %s83, %s86
    %p95 = scmp.eq.s32.totalorder %s14, 7
    %p96 = por %p94, %p95
    %p97 = scmp.ne.s32.totalorder %s86, %s87
    %p98 = scmp.eq.s32.totalorder %s14, 0
    %p99 = por %p97, %p98
    %p100 = scmp.ne.s32.totalorder %s86, %s87
    %p101 = scmp.eq.s32.totalorder %s15, 7
    %p102 = por %p100, %p101
    %p104 = scmp.ne.s32.totalorder %s87, %s103
    %p105 = scmp.eq.s32.totalorder %s15, 0
    %p106 = por %p104, %p105
    %s107 = ssub.s32 %s16, %s28
    %s108 = ssub.s32 %s17, %s24
    %s109 = sor.u32 %s107, %s108
    %p110 = scmp.eq.s32.totalorder %s109, 0
    %s112 = sadd.s32 %s111, 1
    %s113 = scalar_select %p110, %s111, %s112
    %p116 = pneg %p110
    %p117 = scmp.eq.s32.totalorder %s9, 7
    %p118 = por %p116, %p117
    %p119 = scmp.ne.s32.totalorder %s111, %s114
    %p120 = scmp.eq.s32.totalorder %s9, 0
    %p121 = por %p119, %p120
    %p122 = scmp.ne.s32.totalorder %s111, %s114
    %p123 = scmp.eq.s32.totalorder %s14, 7
    %p124 = por %p122, %p123
    %p125 = scmp.ne.s32.totalorder %s114, %s115
    %p126 = scmp.eq.s32.totalorder %s14, 0
    %p127 = por %p125, %p126
    %p128 = scmp.ne.s32.totalorder %s114, %s115
    %p129 = scmp.eq.s32.totalorder %s15, 7
    %p130 = por %p128, %p129
    %p132 = scmp.ne.s32.totalorder %s115, %s131
    %p133 = scmp.eq.s32.totalorder %s15, 0
    %p134 = por %p132, %p133
    %p135 = scmp.le.s32.totalorder 1, %s9
    %p136 = scmp.lt.s32.totalorder %s9, 9
    %p137 = pnand %p135, %p136
    %p138 = pneg %p137
    // Predicated region
    $region9: #{deeplabv3_forward.4} parent=5 // pred_check
      _
    $region10: #{deeplabv3_forward.4} parent=5 // pred_check_branch
      %140 = sbr.rel (%p137) target = $region12
    $region11: #{deeplabv3_forward.4} parent=5 // pred_region
      %s141 = ssub.s32 %s9, 1
      // Predicated region
      $region13: #{deeplabv3_forward.4} parent=11 // pred_check
        %p142 = pneg %p73
      $region14: #{deeplabv3_forward.4} parent=11 // pred_check_branch
        %144 = sbr.rel (%p142) target = $region16
      $region15: #{deeplabv3_forward.4} parent=11 // pred_region
        %p145 = scmp.lt.s32.totalorder %s19, 0
        %s146 = scalar_select %p145, %s19, 0
        %s147 = smul.addr %s146, 4
        %s148 = scalar_lea.vmem %s1, %s147
      $region16: #{deeplabv3_forward.4} parent=11 // pred_fallthru
        _
      // Predicated region
      $region17: #{deeplabv3_forward.4} parent=11 // pred_check
        %p149 = pneg %p99
      $region18: #{deeplabv3_forward.4} parent=11 // pred_check_branch
        %151 = sbr.rel (%p149) target = $region20
      $region19: #{deeplabv3_forward.4} parent=11 // pred_region
        %p152 = scmp.lt.s32.totalorder %s19, 0
        %s153 = scalar_select %p152, %s19, 0
        %s154 = scalar_lea.vmem %s2, %s153
      $region20: #{deeplabv3_forward.4} parent=11 // pred_fallthru
        _
    $region12: #{deeplabv3_forward.4} parent=5 // pred_fallthru
      _
    %p155 = scmp.lt.s32.totalorder %s9, 8
    // Predicated region
    $region21: #{deeplabv3_forward.4} parent=5 // pred_check
      %p156 = pneg %p155
    $region22: #{deeplabv3_forward.4} parent=5 // pred_check_branch
      %158 = sbr.rel (%p156) target = $region24
    $region23: #{deeplabv3_forward.4} parent=5 // pred_region
      // Predicated region
      $region25: #{deeplabv3_forward.4} parent=23 // pred_check
        %p159 = pneg %p41
      $region26: #{deeplabv3_forward.4} parent=23 // pred_check_branch
        %161 = sbr.rel (%p159) target = $region28
      $region27: #{deeplabv3_forward.4} parent=23 // pred_region
        %s162 = smul.u32 32, %s16
        %p163 = scmp.lt.s32.totalorder %s162, 255
        %s164 = scalar_select %p163, %s162, 255
        %s165 = smul.addr %s164, 4
        %s166 = scalar_lea.vmem %s0, %s165
        %s167 = smul.u32 32, %s16
      $region28: #{deeplabv3_forward.4} parent=23 // pred_fallthru
        _
    $region24: #{deeplabv3_forward.4} parent=5 // pred_fallthru
      _
    %p168 = scmp.le.s32.totalorder 1, %s9
    %p169 = scmp.lt.s32.totalorder %s9, 9
    %p170 = pnand %p168, %p169
    %p171 = pneg %p170
    // Predicated region
    $region29: #{deeplabv3_forward.4} parent=5 // pred_check
      _
    $region30: #{deeplabv3_forward.4} parent=5 // pred_check_branch
      %173 = sbr.rel (%p170) target = $region32
    $region31: #{deeplabv3_forward.4} parent=5 // pred_region
      %s174 = ssub.s32 %s9, 1
      %s175 = smul.u32 32, %s18
      %p176 = scmp.lt.s32.totalorder %s175, 255
      %s177 = scalar_select %p176, %s175, 255
      %s178 = smul.addr %s177, 4
      %s179 = scalar_lea.vmem %s0, %s178
      %p180 = pneg %p47
      %p181 = pneg %p44
      %p182 = scmp.lt.s32.totalorder %s19, 0
      %s183 = scalar_select %p182, %s19, 0
      %s184 = smul.addr %s183, 4
      %s185 = scalar_lea.vmem %s1, %s184
      %p186 = pneg %p73
      %p187 = pneg %p70
      %p188 = scmp.lt.s32.totalorder %s19, 0
      %s189 = scalar_select %p188, %s19, 0
      %s190 = scalar_lea.vmem %s2, %s189
      %p191 = pneg %p99
      %p192 = pneg %p96
      %p193 = pneg %p127
      %p194 = pneg %p124
      %s195 = smul.u32 32, %s18
      %p196 = scmp.lt.s32.totalorder %s195, 255
      %s197 = scalar_select %p196, %s195, 255
      %p198 = scmp.lt.s32.totalorder %s19, 0
      %s199 = scalar_select %p198, %s19, 0
      %s200 = sadd.s32 %s199, %s197
      %s201 = smul.addr %s200, 4
      %s202 = scalar_lea.vmem %s3, %s201
      %s203 = smul.u32 32, %s18
      %p204 = scmp.lt.s32.totalorder %s203, 255
      %s205 = scalar_select %p204, %s203, 255
      %s206 = smul.addr %s205, 4
      %s207 = scalar_lea.vmem %s0, %s206
      %s208 = smul.u32 32, %s18
      %p209 = scmp.lt.s32.totalorder %s19, 0
      %s210 = scalar_select %p209, %s19, 0
      %s211 = smul.addr %s210, 4
      %s212 = scalar_lea.vmem %s1, %s211
      %p213 = scmp.lt.s32.totalorder %s19, 0
      %s214 = scalar_select %p213, %s19, 0
      %s215 = scalar_lea.vmem %s2, %s214
      %s216 = smul.u32 32, %s18
      %p217 = scmp.lt.s32.totalorder %s216, 255
      %s218 = scalar_select %p217, %s216, 255
      %p219 = scmp.lt.s32.totalorder %s19, 0
      %s220 = scalar_select %p219, %s19, 0
      %s221 = sadd.s32 %s220, %s218
      %s222 = smul.addr %s221, 4
      %s223 = scalar_lea.vmem %s3, %s222
      %s224 = smul.u32 32, %s18
      %v225 = vld [vmem:[%s207] sm:$0xf]
      %v226 = vld [vmem:[%s207 + $0x4] sm:$0xf]
      %v227 = vld [vmem:[%s207 + $0x8] sm:$0xf]
      %v228 = vld [vmem:[%s207 + $0xc] sm:$0xf]
      %v229 = vld [vmem:[%s207 + $0x10] sm:$0xf]
      %v230 = vld [vmem:[%s207 + $0x14] sm:$0xf]
      %v231 = vld [vmem:[%s207 + $0x18] sm:$0xf]
      %v232 = vld [vmem:[%s207 + $0x1c] sm:$0xf]
      %v233 = vld [vmem:[%s207 + $0x20] sm:$0xf]
      %v234 = vld [vmem:[%s207 + $0x24] sm:$0xf]
      %v235 = vld [vmem:[%s207 + $0x28] sm:$0xf]
      %v236 = vld [vmem:[%s207 + $0x2c] sm:$0xf]
      %v237 = vld [vmem:[%s207 + $0x30] sm:$0xf]
      %v238 = vld [vmem:[%s207 + $0x34] sm:$0xf]
      %v239 = vld [vmem:[%s207 + $0x38] sm:$0xf]
      %v240 = vld [vmem:[%s207 + $0x3c] sm:$0xf]
      %v241 = vld [vmem:[%s207 + $0x40] sm:$0xf]
      %v242 = vld [vmem:[%s207 + $0x44] sm:$0xf]
      %v243 = vld [vmem:[%s207 + $0x48] sm:$0xf]
      %v244 = vld [vmem:[%s207 + $0x4c] sm:$0xf]
      %v245 = vld [vmem:[%s207 + $0x50] sm:$0xf]
      %v246 = vld [vmem:[%s207 + $0x54] sm:$0xf]
      %v247 = vld [vmem:[%s207 + $0x58] sm:$0xf]
      %v248 = vld [vmem:[%s207 + $0x5c] sm:$0xf]
      %v249 = vld [vmem:[%s207 + $0x60] sm:$0xf]
      %v250 = vld [vmem:[%s207 + $0x64] sm:$0xf]
      %v251 = vld [vmem:[%s207 + $0x68] sm:$0xf]
      %v252 = vld [vmem:[%s207 + $0x6c] sm:$0xf]
      %v253 = vld [vmem:[%s207 + $0x70] sm:$0xf]
      %v254 = vld [vmem:[%s207 + $0x74] sm:$0xf]
      %v255 = vld [vmem:[%s207 + $0x78] sm:$0xf]
      %v256 = vld [vmem:[%s207 + $0x7c] sm:$0xf]
      %v257 = vld [vmem:[%s212] sm:$0xf]
      %v258 = vld [vmem:[%s212 + $0x4] sm:$0xf]
      %v259 = vld [vmem:[%s212 + $0x8] sm:$0xf]
      %v260 = vld [vmem:[%s212 + $0xc] sm:$0xf]
      %v261 = vld [vmem:[%s212 + $0x10] sm:$0xf]
      %v262 = vld [vmem:[%s212 + $0x14] sm:$0xf]
      %v263 = vld [vmem:[%s212 + $0x18] sm:$0xf]
      %v264 = vld [vmem:[%s212 + $0x1c] sm:$0xf]
      %v265 = vld [vmem:[%s212 + $0x20] sm:$0xf]
      %v266 = vld [vmem:[%s212 + $0x24] sm:$0xf]
      %v267 = vld [vmem:[%s212 + $0x28] sm:$0xf]
      %v268 = vld [vmem:[%s212 + $0x2c] sm:$0xf]
      %v269 = vld [vmem:[%s212 + $0x30] sm:$0xf]
      %v270 = vld [vmem:[%s212 + $0x34] sm:$0xf]
      %v271 = vld [vmem:[%s212 + $0x38] sm:$0xf]
      %v272 = vld [vmem:[%s212 + $0x3c] sm:$0xf]
      %v273 = vld [vmem:[%s215] sm:$0x1]
      %v275 = vperm.slane %v273, 0
      %v309 = vunpack.c.l.b16 %v225
      %v310 = vunpack.c.l.b16 %v226
      %v311 = vunpack.c.l.b16 %v227
      %v312 = vunpack.c.l.b16 %v228
      %v313 = vunpack.c.l.b16 %v229
      %v314 = vunpack.c.l.b16 %v230
      %v315 = vunpack.c.l.b16 %v231
      %v316 = vunpack.c.l.b16 %v232
      %v317 = vunpack.c.l.b16 %v233
      %v318 = vunpack.c.l.b16 %v234
      %v319 = vunpack.c.l.b16 %v235
      %v320 = vunpack.c.l.b16 %v236
      %v321 = vunpack.c.l.b16 %v237
      %v322 = vunpack.c.l.b16 %v238
      %v323 = vunpack.c.l.b16 %v239
      %v324 = vunpack.c.l.b16 %v240
      %v325 = vunpack.c.l.b16 %v241
      %v326 = vunpack.c.l.b16 %v242
      %v327 = vunpack.c.l.b16 %v243
      %v328 = vunpack.c.l.b16 %v244
      %v329 = vunpack.c.l.b16 %v245
      %v330 = vunpack.c.l.b16 %v246
      %v331 = vunpack.c.l.b16 %v247
      %v332 = vunpack.c.l.b16 %v248
      %v333 = vunpack.c.l.b16 %v249
      %v334 = vunpack.c.l.b16 %v250
      %v335 = vunpack.c.l.b16 %v251
      %v336 = vunpack.c.l.b16 %v252
      %v337 = vunpack.c.l.b16 %v253
      %v338 = vunpack.c.l.b16 %v254
      %v339 = vunpack.c.l.b16 %v255
      %v340 = vunpack.c.l.b16 %v256
      %v341 = vpack.c.b16 %v310, %v309
      %v342 = vpack.c.b16 %v312, %v311
      %v343 = vpack.c.b16 %v314, %v313
      %v344 = vpack.c.b16 %v316, %v315
      %v345 = vpack.c.b16 %v318, %v317
      %v346 = vpack.c.b16 %v320, %v319
      %v347 = vpack.c.b16 %v322, %v321
      %v348 = vpack.c.b16 %v324, %v323
      %v349 = vpack.c.b16 %v326, %v325
      %v350 = vpack.c.b16 %v328, %v327
      %v351 = vpack.c.b16 %v330, %v329
      %v352 = vpack.c.b16 %v332, %v331
      %v353 = vpack.c.b16 %v334, %v333
      %v354 = vpack.c.b16 %v336, %v335
      %v355 = vpack.c.b16 %v338, %v337
      %v356 = vpack.c.b16 %v340, %v339
      %v389 = vunpack.c.l.b16 %v257
      %v390 = vunpack.c.l.b16 %v258
      %v391 = vunpack.c.l.b16 %v259
      %v392 = vunpack.c.l.b16 %v260
      %v393 = vunpack.c.l.b16 %v261
      %v394 = vunpack.c.l.b16 %v262
      %v395 = vunpack.c.l.b16 %v263
      %v396 = vunpack.c.l.b16 %v264
      %v397 = vunpack.c.l.b16 %v265
      %v398 = vunpack.c.l.b16 %v266
      %v399 = vunpack.c.l.b16 %v267
      %v400 = vunpack.c.l.b16 %v268
      %v401 = vunpack.c.l.b16 %v269
      %v402 = vunpack.c.l.b16 %v270
      %v403 = vunpack.c.l.b16 %v271
      %v404 = vunpack.c.l.b16 %v272
      %v405 = vpack.c.b16 %v390, %v389
      %v406 = vpack.c.b16 %v392, %v391
      %v407 = vpack.c.b16 %v394, %v393
      %v408 = vpack.c.b16 %v396, %v395
      %v409 = vpack.c.b16 %v398, %v397
      %v410 = vpack.c.b16 %v400, %v399
      %v411 = vpack.c.b16 %v402, %v401
      %v412 = vpack.c.b16 %v404, %v403
      %421 = vmatpush.bf16.msra.mxu0 %v412
      %422 = vmatpush.bf16.msra.mxu0 %v411
      %423 = vmatpush.bf16.msra.mxu0 %v410
      %424 = vmatpush.bf16.msra.mxu0 %v409
      %425 = vmatpush.bf16.msra.mxu0 %v408
      %426 = vmatpush.bf16.msra.mxu0 %v407
      %427 = vmatpush.bf16.msra.mxu0 %v406
      %428 = vmatpush.bf16.msra.mxu0 %v405
      %429 = vmatmul.bf16.gmra.mxu0 %v341
      %v430 = vpop.f32.mrf.mxu0
      %v431 = vadd.f32 %v275, %v430
      %v432 = vpop.f32.mrf.mxu0
      %v433 = vadd.f32 %v275, %v432
      %434 = vmatmul.bf16.gmra.mxu0 %v342
      %v435 = vpop.f32.mrf.mxu0
      %v436 = vadd.f32 %v275, %v435
      %v437 = vpop.f32.mrf.mxu0
      %v438 = vadd.f32 %v275, %v437
      %439 = vmatmul.bf16.gmra.mxu0 %v343
      %v440 = vpop.f32.mrf.mxu0
      %v441 = vadd.f32 %v275, %v440
      %v442 = vpop.f32.mrf.mxu0
      %v443 = vadd.f32 %v275, %v442
      %444 = vmatmul.bf16.gmra.mxu0 %v344
      %v445 = vpop.f32.mrf.mxu0
      %v446 = vadd.f32 %v275, %v445
      %v447 = vpop.f32.mrf.mxu0
      %v448 = vadd.f32 %v275, %v447
      %449 = vmatmul.bf16.gmra.mxu0 %v345
      %v450 = vpop.f32.mrf.mxu0
      %v451 = vadd.f32 %v275, %v450
      %v452 = vpop.f32.mrf.mxu0
      %v453 = vadd.f32 %v275, %v452
      %454 = vmatmul.bf16.gmra.mxu0 %v346
      %v455 = vpop.f32.mrf.mxu0
      %v456 = vadd.f32 %v275, %v455
      %v457 = vpop.f32.mrf.mxu0
      %v458 = vadd.f32 %v275, %v457
      %459 = vmatmul.bf16.gmra.mxu0 %v347
      %v460 = vpop.f32.mrf.mxu0
      %v461 = vadd.f32 %v275, %v460
      %v462 = vpop.f32.mrf.mxu0
      %v463 = vadd.f32 %v275, %v462
      %464 = vmatmul.bf16.gmra.mxu0 %v348
      %v465 = vpop.f32.mrf.mxu0
      %v466 = vadd.f32 %v275, %v465
      %v467 = vpop.f32.mrf.mxu0
      %v468 = vadd.f32 %v275, %v467
      %469 = vmatmul.bf16.gmra.mxu0 %v349
      %v470 = vpop.f32.mrf.mxu0
      %v471 = vadd.f32 %v275, %v470
      %v472 = vpop.f32.mrf.mxu0
      %v473 = vadd.f32 %v275, %v472
      %474 = vmatmul.bf16.gmra.mxu0 %v350
      %v475 = vpop.f32.mrf.mxu0
      %v476 = vadd.f32 %v275, %v475
      %v477 = vpop.f32.mrf.mxu0
      %v478 = vadd.f32 %v275, %v477
      %479 = vmatmul.bf16.gmra.mxu0 %v351
      %v480 = vpop.f32.mrf.mxu0
      %v481 = vadd.f32 %v275, %v480
      %v482 = vpop.f32.mrf.mxu0
      %v483 = vadd.f32 %v275, %v482
      %484 = vmatmul.bf16.gmra.mxu0 %v352
      %v485 = vpop.f32.mrf.mxu0
      %v486 = vadd.f32 %v275, %v485
      %v487 = vpop.f32.mrf.mxu0
      %v488 = vadd.f32 %v275, %v487
      %489 = vmatmul.bf16.gmra.mxu0 %v353
      %v490 = vpop.f32.mrf.mxu0
      %v491 = vadd.f32 %v275, %v490
      %v492 = vpop.f32.mrf.mxu0
      %v493 = vadd.f32 %v275, %v492
      %494 = vmatmul.bf16.gmra.mxu0 %v354
      %v495 = vpop.f32.mrf.mxu0
      %v496 = vadd.f32 %v275, %v495
      %v497 = vpop.f32.mrf.mxu0
      %v498 = vadd.f32 %v275, %v497
      %499 = vmatmul.bf16.gmra.mxu0 %v355
      %v500 = vpop.f32.mrf.mxu0
      %v501 = vadd.f32 %v275, %v500
      %v502 = vpop.f32.mrf.mxu0
      %v503 = vadd.f32 %v275, %v502
      %504 = vmatmul.bf16.gmra.mxu0 %v356
      %v505 = vpop.f32.mrf.mxu0
      %v506 = vadd.f32 %v275, %v505
      %v507 = vpop.f32.mrf.mxu0
      %v508 = vadd.f32 %v275, %v507
      %509 = vdwg.mxu0
      %v510 = vmax.f32 %v431, 0.0
      %v511 = vmax.f32 %v433, 0.0
      %v512 = vmax.f32 %v436, 0.0
      %v513 = vmax.f32 %v438, 0.0
      %v514 = vmax.f32 %v441, 0.0
      %v515 = vmax.f32 %v443, 0.0
      %v516 = vmax.f32 %v446, 0.0
      %v517 = vmax.f32 %v448, 0.0
      %v518 = vmax.f32 %v451, 0.0
      %v519 = vmax.f32 %v453, 0.0
      %v520 = vmax.f32 %v456, 0.0
      %v521 = vmax.f32 %v458, 0.0
      %v522 = vmax.f32 %v461, 0.0
      %v523 = vmax.f32 %v463, 0.0
      %v524 = vmax.f32 %v466, 0.0
      %v525 = vmax.f32 %v468, 0.0
      %v526 = vmax.f32 %v471, 0.0
      %v527 = vmax.f32 %v473, 0.0
      %v528 = vmax.f32 %v476, 0.0
      %v529 = vmax.f32 %v478, 0.0
      %v530 = vmax.f32 %v481, 0.0
      %v531 = vmax.f32 %v483, 0.0
      %v532 = vmax.f32 %v486, 0.0
      %v533 = vmax.f32 %v488, 0.0
      %v534 = vmax.f32 %v491, 0.0
      %v535 = vmax.f32 %v493, 0.0
      %v536 = vmax.f32 %v496, 0.0
      %v537 = vmax.f32 %v498, 0.0
      %v538 = vmax.f32 %v501, 0.0
      %v539 = vmax.f32 %v503, 0.0
      %v540 = vmax.f32 %v506, 0.0
      %v541 = vmax.f32 %v508, 0.0
      %v542 = vpack.c.bf16 %v510, %v510
      %v543 = vpack.c.bf16 %v511, %v511
      %v544 = vpack.c.bf16 %v512, %v512
      %v545 = vpack.c.bf16 %v513, %v513
      %v546 = vpack.c.bf16 %v514, %v514
      %v547 = vpack.c.bf16 %v515, %v515
      %v548 = vpack.c.bf16 %v516, %v516
      %v549 = vpack.c.bf16 %v517, %v517
      %v550 = vpack.c.bf16 %v518, %v518
      %v551 = vpack.c.bf16 %v519, %v519
      %v552 = vpack.c.bf16 %v520, %v520
      %v553 = vpack.c.bf16 %v521, %v521
      %v554 = vpack.c.bf16 %v522, %v522
      %v555 = vpack.c.bf16 %v523, %v523
      %v556 = vpack.c.bf16 %v524, %v524
      %v557 = vpack.c.bf16 %v525, %v525
      %v558 = vpack.c.bf16 %v526, %v526
      %v559 = vpack.c.bf16 %v527, %v527
      %v560 = vpack.c.bf16 %v528, %v528
      %v561 = vpack.c.bf16 %v529, %v529
      %v562 = vpack.c.bf16 %v530, %v530
      %v563 = vpack.c.bf16 %v531, %v531
      %v564 = vpack.c.bf16 %v532, %v532
      %v565 = vpack.c.bf16 %v533, %v533
      %v566 = vpack.c.bf16 %v534, %v534
      %v567 = vpack.c.bf16 %v535, %v535
      %v568 = vpack.c.bf16 %v536, %v536
      %v569 = vpack.c.bf16 %v537, %v537
      %v570 = vpack.c.bf16 %v538, %v538
      %v571 = vpack.c.bf16 %v539, %v539
      %v572 = vpack.c.bf16 %v540, %v540
      %v573 = vpack.c.bf16 %v541, %v541
      %574 = vst [vmem:[%s223] sm:$0xf] %v542
      %575 = vst [vmem:[%s223 + $0x4] sm:$0xf] %v543
      %576 = vst [vmem:[%s223 + $0x8] sm:$0xf] %v544
      %577 = vst [vmem:[%s223 + $0xc] sm:$0xf] %v545
      %578 = vst [vmem:[%s223 + $0x10] sm:$0xf] %v546
      %579 = vst [vmem:[%s223 + $0x14] sm:$0xf] %v547
      %580 = vst [vmem:[%s223 + $0x18] sm:$0xf] %v548
      %581 = vst [vmem:[%s223 + $0x1c] sm:$0xf] %v549
      %582 = vst [vmem:[%s223 + $0x20] sm:$0xf] %v550
      %583 = vst [vmem:[%s223 + $0x24] sm:$0xf] %v551
      %584 = vst [vmem:[%s223 + $0x28] sm:$0xf] %v552
      %585 = vst [vmem:[%s223 + $0x2c] sm:$0xf] %v553
      %586 = vst [vmem:[%s223 + $0x30] sm:$0xf] %v554
      %587 = vst [vmem:[%s223 + $0x34] sm:$0xf] %v555
      %588 = vst [vmem:[%s223 + $0x38] sm:$0xf] %v556
      %589 = vst [vmem:[%s223 + $0x3c] sm:$0xf] %v557
      %590 = vst [vmem:[%s223 + $0x40] sm:$0xf] %v558
      %591 = vst [vmem:[%s223 + $0x44] sm:$0xf] %v559
      %592 = vst [vmem:[%s223 + $0x48] sm:$0xf] %v560
      %593 = vst [vmem:[%s223 + $0x4c] sm:$0xf] %v561
      %594 = vst [vmem:[%s223 + $0x50] sm:$0xf] %v562
      %595 = vst [vmem:[%s223 + $0x54] sm:$0xf] %v563
      %596 = vst [vmem:[%s223 + $0x58] sm:$0xf] %v564
      %597 = vst [vmem:[%s223 + $0x5c] sm:$0xf] %v565
      %598 = vst [vmem:[%s223 + $0x60] sm:$0xf] %v566
      %599 = vst [vmem:[%s223 + $0x64] sm:$0xf] %v567
      %600 = vst [vmem:[%s223 + $0x68] sm:$0xf] %v568
      %601 = vst [vmem:[%s223 + $0x6c] sm:$0xf] %v569
      %602 = vst [vmem:[%s223 + $0x70] sm:$0xf] %v570
      %603 = vst [vmem:[%s223 + $0x74] sm:$0xf] %v571
      %604 = vst [vmem:[%s223 + $0x78] sm:$0xf] %v572
      %605 = vst [vmem:[%s223 + $0x7c] sm:$0xf] %v573
      %s606 = smul.u32 32, %s18
      %p607 = scmp.lt.s32.totalorder %s606, 255
      %s608 = scalar_select %p607, %s606, 255
      %p609 = scmp.lt.s32.totalorder %s19, 0
      %s610 = scalar_select %p609, %s19, 0
      %s611 = sadd.s32 %s610, %s608
      %s612 = smul.addr %s611, 4
      %s613 = scalar_lea.vmem %s3, %s612
      // Predicated region
      $region33: #{deeplabv3_forward.4} parent=31 // pred_check
        %p614 = pneg %p124
      $region34: #{deeplabv3_forward.4} parent=31 // pred_check_branch
        %616 = sbr.rel (%p614) target = $region36
      $region35: #{deeplabv3_forward.4} parent=31 // pred_region
        %s617 = smul.u32 32, %s18
      $region36: #{deeplabv3_forward.4} parent=31 // pred_fallthru
        _
    $region32: #{deeplabv3_forward.4} parent=5 // pred_fallthru
      _
    %p618 = scmp.le.s32.totalorder 2, %s9
    // Predicated region
    $region37: #{deeplabv3_forward.4} parent=5 // pred_check
      %p619 = pneg %p618
    $region38: #{deeplabv3_forward.4} parent=5 // pred_check_branch
      %621 = sbr.rel (%p619) target = $region40
    $region39: #{deeplabv3_forward.4} parent=5 // pred_region
      %s622 = ssub.s32 %s9, 2
      // Predicated region
      $region41: #{deeplabv3_forward.4} parent=39 // pred_check
        %p623 = pneg %p130
      $region42: #{deeplabv3_forward.4} parent=39 // pred_check_branch
        %625 = sbr.rel (%p623) target = $region44
      $region43: #{deeplabv3_forward.4} parent=39 // pred_region
        %s626 = smul.u32 32, %s20
        %p627 = scmp.lt.s32.totalorder %s626, 255
        %s628 = scalar_select %p627, %s626, 255
        %p629 = scmp.lt.s32.totalorder %s21, 0
        %s630 = scalar_select %p629, %s21, 0
        %s631 = sadd.s32 %s630, %s628
        %s632 = smul.addr %s631, 4
        %s633 = scalar_lea.vmem %s3, %s632
      $region44: #{deeplabv3_forward.4} parent=39 // pred_fallthru
        _
    $region40: #{deeplabv3_forward.4} parent=5 // pred_fallthru
      _
  $region6: #{deeplabv3_forward.4} parent=0 // loop_footer
    %s13 = sadd.s32 1, %s9
  $region7: #{deeplabv3_forward.4} parent=0 // loop_footer_branch
    %8 = sbr.rel target = $region3
  $region8: #{deeplabv3_forward.4} parent=0 // loop_exit
    _

// kernel: deeplabv3_forward.5
$region0: #{deeplabv3_forward.5}
  #allocation0 [shape = 'u32[]', space=smem, size = 0x4, offset = 0x4, fixed_abs, tag = 'smem constant byte address 0x4 - core index']
  #allocation1 [shape = 'u32[72,128]{1,0:T(1,128)}', space=vmem, size = 0x9000, scoped, tag = 'internal scratch']
  %s0 = inlined_call_operand.vmem [shape: bf16[512,256], index: 0, kind: input, shape index: {}]
  %s1 = inlined_call_operand.vmem [shape: bf16[256,128], index: 1, kind: input, shape index: {}]
  %s2 = inlined_call_operand.vmem [shape: f32[1,128], index: 2, kind: input, shape index: {}]
  %s3 = inlined_call_operand.vmem [shape: bf16[512,128], index: 3, kind: output, shape index: {}]
  %s4 = sld [smem:[#allocation0]]
  $region45: #{deeplabv3_forward.5} parent=0
    _
  %s6 = ssub.s32 1, %s4
  %s7 = scalar_select 0, %s6, %s4
  loop: start=0, step=1, limit=4
  $region2: #{deeplabv3_forward.5} parent=0 // loop_pre_header
    _
  $region3: #{deeplabv3_forward.5} parent=0 // loop_header
    %s9 = sphi 0, %s13
    %p10 = scmp.ge.s32.totalorder %s9, 4
    %s16 = sphi 0, %s28
    %s17 = sphi 0, %s24
    %s18 = sphi 0, %s16
    %s19 = sphi 0, %s17
    %s20 = sphi 0, %s18
    %s21 = sphi 0, %s19
    %s31 = sphi 0, %s33
    %s34 = sphi 0, %s31
    %s35 = sphi 0, %s34
    %s51 = sphi 0, %s35
    %s57 = sphi 0, %s59
    %s60 = sphi 0, %s57
    %s61 = sphi 0, %s60
    %s77 = sphi 0, %s61
    %s83 = sphi 0, %s85
    %s86 = sphi 0, %s83
    %s87 = sphi 0, %s86
    %s103 = sphi 0, %s87
    %s111 = sphi 0, %s113
    %s114 = sphi 0, %s111
    %s115 = sphi 0, %s114
    %s131 = sphi 0, %s115
  $region4: #{deeplabv3_forward.5} parent=0 // loop_header_branch
    %12 = sbr.rel (%p10) target = $region8
  $region5: #{deeplabv3_forward.5} parent=0 // loop_body
    %s14 = ssub.s32 %s9, 1
    %s15 = ssub.s32 %s9, 2
    %s22 = sadd.s32 1, %s17
    %p23 = scmp.ge.s32.totalorder %s22, 1
    %s24 = scalar_select %p23, 0, %s22
    %s25 = sadd.s32 1, %s16
    %s26 = scalar_select %p23, %s25, %s16
    %p27 = scmp.ge.s32.totalorder %s26, 2
    %s28 = scalar_select %p27, 0, %s26
    %s29 = ssub.s32 %s16, %s28
    %p30 = scmp.eq.s32.totalorder %s29, 0
    %s32 = sadd.s32 %s31, 1
    %s33 = scalar_select %p30, %s31, %s32
    %p36 = pneg %p30
    %p37 = scmp.eq.s32.totalorder %s9, 1
    %p38 = por %p36, %p37
    %p39 = scmp.ne.s32.totalorder %s31, %s34
    %p40 = scmp.eq.s32.totalorder %s9, 0
    %p41 = por %p39, %p40
    %p42 = scmp.ne.s32.totalorder %s31, %s34
    %p43 = scmp.eq.s32.totalorder %s14, 1
    %p44 = por %p42, %p43
    %p45 = scmp.ne.s32.totalorder %s34, %s35
    %p46 = scmp.eq.s32.totalorder %s14, 0
    %p47 = por %p45, %p46
    %p48 = scmp.ne.s32.totalorder %s34, %s35
    %p49 = scmp.eq.s32.totalorder %s15, 1
    %p50 = por %p48, %p49
    %p52 = scmp.ne.s32.totalorder %s35, %s51
    %p53 = scmp.eq.s32.totalorder %s15, 0
    %p54 = por %p52, %p53
    %s55 = ssub.s32 %s17, %s24
    %p56 = scmp.eq.s32.totalorder %s55, 0
    %s58 = sadd.s32 %s57, 1
    %s59 = scalar_select %p56, %s57, %s58
    %p62 = pneg %p56
    %p63 = scmp.eq.s32.totalorder %s9, 1
    %p64 = por %p62, %p63
    %p65 = scmp.ne.s32.totalorder %s57, %s60
    %p66 = scmp.eq.s32.totalorder %s9, 0
    %p67 = por %p65, %p66
    %p68 = scmp.ne.s32.totalorder %s57, %s60
    %p69 = scmp.eq.s32.totalorder %s14, 1
    %p70 = por %p68, %p69
    %p71 = scmp.ne.s32.totalorder %s60, %s61
    %p72 = scmp.eq.s32.totalorder %s14, 0
    %p73 = por %p71, %p72
    %p74 = scmp.ne.s32.totalorder %s60, %s61
    %p75 = scmp.eq.s32.totalorder %s15, 1
    %p76 = por %p74, %p75
    %p78 = scmp.ne.s32.totalorder %s61, %s77
    %p79 = scmp.eq.s32.totalorder %s15, 0
    %p80 = por %p78, %p79
    %s81 = ssub.s32 %s17, %s24
    %p82 = scmp.eq.s32.totalorder %s81, 0
    %s84 = sadd.s32 %s83, 1
    %s85 = scalar_select %p82, %s83, %s84
    %p88 = pneg %p82
    %p89 = scmp.eq.s32.totalorder %s9, 1
    %p90 = por %p88, %p89
    %p91 = scmp.ne.s32.totalorder %s83, %s86
    %p92 = scmp.eq.s32.totalorder %s9, 0
    %p93 = por %p91, %p92
    %p94 = scmp.ne.s32.totalorder %s83, %s86
    %p95 = scmp.eq.s32.totalorder %s14, 1
    %p96 = por %p94, %p95
    %p97 = scmp.ne.s32.totalorder %s86, %s87
    %p98 = scmp.eq.s32.totalorder %s14, 0
    %p99 = por %p97, %p98
    %p100 = scmp.ne.s32.totalorder %s86, %s87
    %p101 = scmp.eq.s32.totalorder %s15, 1
    %p102 = por %p100, %p101
    %p104 = scmp.ne.s32.totalorder %s87, %s103
    %p105 = scmp.eq.s32.totalorder %s15, 0
    %p106 = por %p104, %p105
    %s107 = ssub.s32 %s16, %s28
    %s108 = ssub.s32 %s17, %s24
    %s109 = sor.u32 %s107, %s108
    %p110 = scmp.eq.s32.totalorder %s109, 0
    %s112 = sadd.s32 %s111, 1
    %s113 = scalar_select %p110, %s111, %s112
    %p116 = pneg %p110
    %p117 = scmp.eq.s32.totalorder %s9, 1
    %p118 = por %p116, %p117
    %p119 = scmp.ne.s32.totalorder %s111, %s114
    %p120 = scmp.eq.s32.totalorder %s9, 0
    %p121 = por %p119, %p120
    %p122 = scmp.ne.s32.totalorder %s111, %s114
    %p123 = scmp.eq.s32.totalorder %s14, 1
    %p124 = por %p122, %p123
    %p125 = scmp.ne.s32.totalorder %s114, %s115
    %p126 = scmp.eq.s32.totalorder %s14, 0
    %p127 = por %p125, %p126
    %p128 = scmp.ne.s32.totalorder %s114, %s115
    %p129 = scmp.eq.s32.totalorder %s15, 1
    %p130 = por %p128, %p129
    %p132 = scmp.ne.s32.totalorder %s115, %s131
    %p133 = scmp.eq.s32.totalorder %s15, 0
    %p134 = por %p132, %p133
    %p135 = scmp.le.s32.totalorder 1, %s9
    %p136 = scmp.lt.s32.totalorder %s9, 3
    %p137 = pnand %p135, %p136
    %p138 = pneg %p137
    // Predicated region
    $region9: #{deeplabv3_forward.5} parent=5 // pred_check
      _
    $region10: #{deeplabv3_forward.5} parent=5 // pred_check_branch
      %140 = sbr.rel (%p137) target = $region12
    $region11: #{deeplabv3_forward.5} parent=5 // pred_region
      %s141 = ssub.s32 %s9, 1
      // Predicated region
      $region13: #{deeplabv3_forward.5} parent=11 // pred_check
        %p142 = pneg %p73
      $region14: #{deeplabv3_forward.5} parent=11 // pred_check_branch
        %144 = sbr.rel (%p142) target = $region16
      $region15: #{deeplabv3_forward.5} parent=11 // pred_region
        %p145 = scmp.lt.s32.totalorder %s19, 0
        %s146 = scalar_select %p145, %s19, 0
        %s147 = smul.addr %s146, 4
        %s148 = scalar_lea.vmem %s1, %s147
      $region16: #{deeplabv3_forward.5} parent=11 // pred_fallthru
        _
      // Predicated region
      $region17: #{deeplabv3_forward.5} parent=11 // pred_check
        %p149 = pneg %p99
      $region18: #{deeplabv3_forward.5} parent=11 // pred_check_branch
        %151 = sbr.rel (%p149) target = $region20
      $region19: #{deeplabv3_forward.5} parent=11 // pred_region
        %p152 = scmp.lt.s32.totalorder %s19, 0
        %s153 = scalar_select %p152, %s19, 0
        %s154 = scalar_lea.vmem %s2, %s153
      $region20: #{deeplabv3_forward.5} parent=11 // pred_fallthru
        _
    $region12: #{deeplabv3_forward.5} parent=5 // pred_fallthru
      _
    %p155 = scmp.lt.s32.totalorder %s9, 2
    // Predicated region
    $region21: #{deeplabv3_forward.5} parent=5 // pred_check
      %p156 = pneg %p155
    $region22: #{deeplabv3_forward.5} parent=5 // pred_check_branch
      %158 = sbr.rel (%p156) target = $region24
    $region23: #{deeplabv3_forward.5} parent=5 // pred_region
      // Predicated region
      $region25: #{deeplabv3_forward.5} parent=23 // pred_check
        %p159 = pneg %p41
      $region26: #{deeplabv3_forward.5} parent=23 // pred_check_branch
        %161 = sbr.rel (%p159) target = $region28
      $region27: #{deeplabv3_forward.5} parent=23 // pred_region
        %s162 = smul.u32 32, %s16
        %p163 = scmp.lt.s32.totalorder %s162, 63
        %s164 = scalar_select %p163, %s162, 63
        %s165 = smul.addr %s164, 2
        %s166 = smul.addr %s165, 4
        %s167 = scalar_lea.vmem %s0, %s166
        %s168 = smul.u32 32, %s16
      $region28: #{deeplabv3_forward.5} parent=23 // pred_fallthru
        _
    $region24: #{deeplabv3_forward.5} parent=5 // pred_fallthru
      _
    %p169 = scmp.le.s32.totalorder 1, %s9
    %p170 = scmp.lt.s32.totalorder %s9, 3
    %p171 = pnand %p169, %p170
    %p172 = pneg %p171
    // Predicated region
    $region29: #{deeplabv3_forward.5} parent=5 // pred_check
      _
    $region30: #{deeplabv3_forward.5} parent=5 // pred_check_branch
      %174 = sbr.rel (%p171) target = $region32
    $region31: #{deeplabv3_forward.5} parent=5 // pred_region
      %s175 = ssub.s32 %s9, 1
      %s176 = smul.u32 32, %s18
      %p177 = scmp.lt.s32.totalorder %s176, 63
      %s178 = scalar_select %p177, %s176, 63
      %s179 = smul.addr %s178, 2
      %s180 = smul.addr %s179, 4
      %s181 = scalar_lea.vmem %s0, %s180
      %p182 = pneg %p47
      %p183 = pneg %p44
      %p184 = scmp.lt.s32.totalorder %s19, 0
      %s185 = scalar_select %p184, %s19, 0
      %s186 = smul.addr %s185, 4
      %s187 = scalar_lea.vmem %s1, %s186
      %p188 = pneg %p73
      %p189 = pneg %p70
      %p190 = scmp.lt.s32.totalorder %s19, 0
      %s191 = scalar_select %p190, %s19, 0
      %s192 = scalar_lea.vmem %s2, %s191
      %p193 = pneg %p99
      %p194 = pneg %p96
      %p195 = pneg %p127
      %p196 = pneg %p124
      %s197 = smul.u32 32, %s18
      %p198 = scmp.lt.s32.totalorder %s197, 63
      %s199 = scalar_select %p198, %s197, 63
      %p200 = scmp.lt.s32.totalorder %s19, 0
      %s201 = scalar_select %p200, %s19, 0
      %s202 = sadd.s32 %s201, %s199
      %s203 = smul.addr %s202, 4
      %s204 = scalar_lea.vmem %s3, %s203
      %s205 = smul.u32 32, %s18
      %p206 = scmp.lt.s32.totalorder %s205, 63
      %s207 = scalar_select %p206, %s205, 63
      %s208 = smul.addr %s207, 2
      %s209 = smul.addr %s208, 4
      %s210 = scalar_lea.vmem %s0, %s209
      %s211 = smul.u32 32, %s18
      %p212 = scmp.lt.s32.totalorder %s19, 0
      %s213 = scalar_select %p212, %s19, 0
      %s214 = smul.addr %s213, 4
      %s215 = scalar_lea.vmem %s1, %s214
      %p216 = scmp.lt.s32.totalorder %s19, 0
      %s217 = scalar_select %p216, %s19, 0
      %s218 = scalar_lea.vmem %s2, %s217
      %s219 = smul.u32 32, %s18
      %p220 = scmp.lt.s32.totalorder %s219, 63
      %s221 = scalar_select %p220, %s219, 63
      %p222 = scmp.lt.s32.totalorder %s19, 0
      %s223 = scalar_select %p222, %s19, 0
      %s224 = sadd.s32 %s223, %s221
      %s225 = smul.addr %s224, 4
      %s226 = scalar_lea.vmem %s3, %s225
      %s227 = smul.u32 32, %s18
      %v228 = vld [vmem:[%s210] sm:$0xff]
      %v229 = vld [vmem:[%s210 + $0x8] sm:$0xff]
      %v230 = vld [vmem:[%s210 + $0x10] sm:$0xff]
      %v231 = vld [vmem:[%s210 + $0x18] sm:$0xff]
      %v232 = vld [vmem:[%s210 + $0x20] sm:$0xff]
      %v233 = vld [vmem:[%s210 + $0x28] sm:$0xff]
      %v234 = vld [vmem:[%s210 + $0x30] sm:$0xff]
      %v235 = vld [vmem:[%s210 + $0x38] sm:$0xff]
      %v236 = vld [vmem:[%s210 + $0x40] sm:$0xff]
      %v237 = vld [vmem:[%s210 + $0x48] sm:$0xff]
      %v238 = vld [vmem:[%s210 + $0x50] sm:$0xff]
      %v239 = vld [vmem:[%s210 + $0x58] sm:$0xff]
      %v240 = vld [vmem:[%s210 + $0x60] sm:$0xff]
      %v241 = vld [vmem:[%s210 + $0x68] sm:$0xff]
      %v242 = vld [vmem:[%s210 + $0x70] sm:$0xff]
      %v243 = vld [vmem:[%s210 + $0x78] sm:$0xff]
      %v244 = vld [vmem:[%s210 + $0x80] sm:$0xff]
      %v245 = vld [vmem:[%s210 + $0x88] sm:$0xff]
      %v246 = vld [vmem:[%s210 + $0x90] sm:$0xff]
      %v247 = vld [vmem:[%s210 + $0x98] sm:$0xff]
      %v248 = vld [vmem:[%s210 + $0xa0] sm:$0xff]
      %v249 = vld [vmem:[%s210 + $0xa8] sm:$0xff]
      %v250 = vld [vmem:[%s210 + $0xb0] sm:$0xff]
      %v251 = vld [vmem:[%s210 + $0xb8] sm:$0xff]
      %v252 = vld [vmem:[%s210 + $0xc0] sm:$0xff]
      %v253 = vld [vmem:[%s210 + $0xc8] sm:$0xff]
      %v254 = vld [vmem:[%s210 + $0xd0] sm:$0xff]
      %v255 = vld [vmem:[%s210 + $0xd8] sm:$0xff]
      %v256 = vld [vmem:[%s210 + $0xe0] sm:$0xff]
      %v257 = vld [vmem:[%s210 + $0xe8] sm:$0xff]
      %v258 = vld [vmem:[%s210 + $0xf0] sm:$0xff]
      %v259 = vld [vmem:[%s210 + $0xf8] sm:$0xff]
      %v260 = vld [vmem:[%s215] sm:$0xf]
      %v261 = vld [vmem:[%s215 + $0x4] sm:$0xf]
      %v262 = vld [vmem:[%s215 + $0x8] sm:$0xf]
      %v263 = vld [vmem:[%s215 + $0xc] sm:$0xf]
      %v264 = vld [vmem:[%s215 + $0x10] sm:$0xf]
      %v265 = vld [vmem:[%s215 + $0x14] sm:$0xf]
      %v266 = vld [vmem:[%s215 + $0x18] sm:$0xf]
      %v267 = vld [vmem:[%s215 + $0x1c] sm:$0xf]
      %v268 = vld [vmem:[%s215 + $0x20] sm:$0xf]
      %v269 = vld [vmem:[%s215 + $0x24] sm:$0xf]
      %v270 = vld [vmem:[%s215 + $0x28] sm:$0xf]
      %v271 = vld [vmem:[%s215 + $0x2c] sm:$0xf]
      %v272 = vld [vmem:[%s215 + $0x30] sm:$0xf]
      %v273 = vld [vmem:[%s215 + $0x34] sm:$0xf]
      %v274 = vld [vmem:[%s215 + $0x38] sm:$0xf]
      %v275 = vld [vmem:[%s215 + $0x3c] sm:$0xf]
      %v276 = vld [vmem:[%s215 + $0x40] sm:$0xf]
      %v277 = vld [vmem:[%s215 + $0x44] sm:$0xf]
      %v278 = vld [vmem:[%s215 + $0x48] sm:$0xf]
      %v279 = vld [vmem:[%s215 + $0x4c] sm:$0xf]
      %v280 = vld [vmem:[%s215 + $0x50] sm:$0xf]
      %v281 = vld [vmem:[%s215 + $0x54] sm:$0xf]
      %v282 = vld [vmem:[%s215 + $0x58] sm:$0xf]
      %v283 = vld [vmem:[%s215 + $0x5c] sm:$0xf]
      %v284 = vld [vmem:[%s215 + $0x60] sm:$0xf]
      %v285 = vld [vmem:[%s215 + $0x64] sm:$0xf]
      %v286 = vld [vmem:[%s215 + $0x68] sm:$0xf]
      %v287 = vld [vmem:[%s215 + $0x6c] sm:$0xf]
      %v288 = vld [vmem:[%s215 + $0x70] sm:$0xf]
      %v289 = vld [vmem:[%s215 + $0x74] sm:$0xf]
      %v290 = vld [vmem:[%s215 + $0x78] sm:$0xf]
      %v291 = vld [vmem:[%s215 + $0x7c] sm:$0xf]
      %v292 = vld [vmem:[%s218] sm:$0x1]
      %v294 = vperm.slane %v292, 0
      %v328 = vunpack.c.l.b16 %v228
      %v329 = vunpack.c.h.b16 %v228
      %v330 = vunpack.c.l.b16 %v229
      %v331 = vunpack.c.h.b16 %v229
      %v332 = vunpack.c.l.b16 %v230
      %v333 = vunpack.c.h.b16 %v230
      %v334 = vunpack.c.l.b16 %v231
      %v335 = vunpack.c.h.b16 %v231
      %v336 = vunpack.c.l.b16 %v232
      %v337 = vunpack.c.h.b16 %v232
      %v338 = vunpack.c.l.b16 %v233
      %v339 = vunpack.c.h.b16 %v233
      %v340 = vunpack.c.l.b16 %v234
      %v341 = vunpack.c.h.b16 %v234
      %v342 = vunpack.c.l.b16 %v235
      %v343 = vunpack.c.h.b16 %v235
      %v344 = vunpack.c.l.b16 %v236
      %v345 = vunpack.c.h.b16 %v236
      %v346 = vunpack.c.l.b16 %v237
      %v347 = vunpack.c.h.b16 %v237
      %v348 = vunpack.c.l.b16 %v238
      %v349 = vunpack.c.h.b16 %v238
      %v350 = vunpack.c.l.b16 %v239
      %v351 = vunpack.c.h.b16 %v239
      %v352 = vunpack.c.l.b16 %v240
      %v353 = vunpack.c.h.b16 %v240
      %v354 = vunpack.c.l.b16 %v241
      %v355 = vunpack.c.h.b16 %v241
      %v356 = vunpack.c.l.b16 %v242
      %v357 = vunpack.c.h.b16 %v242
      %v358 = vunpack.c.l.b16 %v243
      %v359 = vunpack.c.h.b16 %v243
      %v360 = vunpack.c.l.b16 %v244
      %v361 = vunpack.c.h.b16 %v244
      %v362 = vunpack.c.l.b16 %v245
      %v363 = vunpack.c.h.b16 %v245
      %v364 = vunpack.c.l.b16 %v246
      %v365 = vunpack.c.h.b16 %v246
      %v366 = vunpack.c.l.b16 %v247
      %v367 = vunpack.c.h.b16 %v247
      %v368 = vunpack.c.l.b16 %v248
      %v369 = vunpack.c.h.b16 %v248
      %v370 = vunpack.c.l.b16 %v249
      %v371 = vunpack.c.h.b16 %v249
      %v372 = vunpack.c.l.b16 %v250
      %v373 = vunpack.c.h.b16 %v250
      %v374 = vunpack.c.l.b16 %v251
      %v375 = vunpack.c.h.b16 %v251
      %v376 = vunpack.c.l.b16 %v252
      %v377 = vunpack.c.h.b16 %v252
      %v378 = vunpack.c.l.b16 %v253
      %v379 = vunpack.c.h.b16 %v253
      %v380 = vunpack.c.l.b16 %v254
      %v381 = vunpack.c.h.b16 %v254
      %v382 = vunpack.c.l.b16 %v255
      %v383 = vunpack.c.h.b16 %v255
      %v384 = vunpack.c.l.b16 %v256
      %v385 = vunpack.c.h.b16 %v256
      %v386 = vunpack.c.l.b16 %v257
      %v387 = vunpack.c.h.b16 %v257
      %v388 = vunpack.c.l.b16 %v258
      %v389 = vunpack.c.h.b16 %v258
      %v390 = vunpack.c.l.b16 %v259
      %v391 = vunpack.c.h.b16 %v259
      %v392 = vpack.c.b16 %v330, %v328
      %v393 = vpack.c.b16 %v331, %v329
      %v394 = vpack.c.b16 %v334, %v332
      %v395 = vpack.c.b16 %v335, %v333
      %v396 = vpack.c.b16 %v338, %v336
      %v397 = vpack.c.b16 %v339, %v337
      %v398 = vpack.c.b16 %v342, %v340
      %v399 = vpack.c.b16 %v343, %v341
      %v400 = vpack.c.b16 %v346, %v344
      %v401 = vpack.c.b16 %v347, %v345
      %v402 = vpack.c.b16 %v350, %v348
      %v403 = vpack.c.b16 %v351, %v349
      %v404 = vpack.c.b16 %v354, %v352
      %v405 = vpack.c.b16 %v355, %v353
      %v406 = vpack.c.b16 %v358, %v356
      %v407 = vpack.c.b16 %v359, %v357
      %v408 = vpack.c.b16 %v362, %v360
      %v409 = vpack.c.b16 %v363, %v361
      %v410 = vpack.c.b16 %v366, %v364
      %v411 = vpack.c.b16 %v367, %v365
      %v412 = vpack.c.b16 %v370, %v368
      %v413 = vpack.c.b16 %v371, %v369
      %v414 = vpack.c.b16 %v374, %v372
      %v415 = vpack.c.b16 %v375, %v373
      %v416 = vpack.c.b16 %v378, %v376
      %v417 = vpack.c.b16 %v379, %v377
      %v418 = vpack.c.b16 %v382, %v380
      %v419 = vpack.c.b16 %v383, %v381
      %v420 = vpack.c.b16 %v386, %v384
      %v421 = vpack.c.b16 %v387, %v385
      %v422 = vpack.c.b16 %v390, %v388
      %v423 = vpack.c.b16 %v391, %v389
      %v488 = vunpack.c.l.b16 %v260
      %v489 = vunpack.c.l.b16 %v261
      %v490 = vunpack.c.l.b16 %v262
      %v491 = vunpack.c.l.b16 %v263
      %v492 = vunpack.c.l.b16 %v264
      %v493 = vunpack.c.l.b16 %v265
      %v494 = vunpack.c.l.b16 %v266
      %v495 = vunpack.c.l.b16 %v267
      %v496 = vunpack.c.l.b16 %v268
      %v497 = vunpack.c.l.b16 %v269
      %v498 = vunpack.c.l.b16 %v270
      %v499 = vunpack.c.l.b16 %v271
      %v500 = vunpack.c.l.b16 %v272
      %v501 = vunpack.c.l.b16 %v273
      %v502 = vunpack.c.l.b16 %v274
      %v503 = vunpack.c.l.b16 %v275
      %v504 = vunpack.c.l.b16 %v276
      %v505 = vunpack.c.l.b16 %v277
      %v506 = vunpack.c.l.b16 %v278
      %v507 = vunpack.c.l.b16 %v279
      %v508 = vunpack.c.l.b16 %v280
      %v509 = vunpack.c.l.b16 %v281
      %v510 = vunpack.c.l.b16 %v282
      %v511 = vunpack.c.l.b16 %v283
      %v512 = vunpack.c.l.b16 %v284
      %v513 = vunpack.c.l.b16 %v285
      %v514 = vunpack.c.l.b16 %v286
      %v515 = vunpack.c.l.b16 %v287
      %v516 = vunpack.c.l.b16 %v288
      %v517 = vunpack.c.l.b16 %v289
      %v518 = vunpack.c.l.b16 %v290
      %v519 = vunpack.c.l.b16 %v291
      %v520 = vpack.c.b16 %v489, %v488
      %v521 = vpack.c.b16 %v491, %v490
      %v522 = vpack.c.b16 %v493, %v492
      %v523 = vpack.c.b16 %v495, %v494
      %v524 = vpack.c.b16 %v497, %v496
      %v525 = vpack.c.b16 %v499, %v498
      %v526 = vpack.c.b16 %v501, %v500
      %v527 = vpack.c.b16 %v503, %v502
      %v528 = vpack.c.b16 %v505, %v504
      %v529 = vpack.c.b16 %v507, %v506
      %v530 = vpack.c.b16 %v509, %v508
      %v531 = vpack.c.b16 %v511, %v510
      %v532 = vpack.c.b16 %v513, %v512
      %v533 = vpack.c.b16 %v515, %v514
      %v534 = vpack.c.b16 %v517, %v516
      %v535 = vpack.c.b16 %v519, %v518
      %552 = vmatpush.bf16.msra.mxu0 %v527
      %553 = vmatpush.bf16.msra.mxu0 %v526
      %554 = vmatpush.bf16.msra.mxu0 %v525
      %555 = vmatpush.bf16.msra.mxu0 %v524
      %556 = vmatpush.bf16.msra.mxu0 %v523
      %557 = vmatpush.bf16.msra.mxu0 %v522
      %558 = vmatpush.bf16.msra.mxu0 %v521
      %559 = vmatpush.bf16.msra.mxu0 %v520
      %560 = vmatmul.bf16.gmra.mxu0 %v392
      %v561 = vpop.f32.mrf.mxu0
      %v562 = vadd.f32 %v294, %v561
      %v563 = vpop.f32.mrf.mxu0
      %v564 = vadd.f32 %v294, %v563
      %565 = vmatmul.bf16.gmra.mxu0 %v394
      %v566 = vpop.f32.mrf.mxu0
      %v567 = vadd.f32 %v294, %v566
      %v568 = vpop.f32.mrf.mxu0
      %v569 = vadd.f32 %v294, %v568
      %570 = vmatmul.bf16.gmra.mxu0 %v396
      %v571 = vpop.f32.mrf.mxu0
      %v572 = vadd.f32 %v294, %v571
      %v573 = vpop.f32.mrf.mxu0
      %v574 = vadd.f32 %v294, %v573
      %575 = vmatmul.bf16.gmra.mxu0 %v398
      %v576 = vpop.f32.mrf.mxu0
      %v577 = vadd.f32 %v294, %v576
      %v578 = vpop.f32.mrf.mxu0
      %v579 = vadd.f32 %v294, %v578
      %580 = vmatmul.bf16.gmra.mxu0 %v400
      %v581 = vpop.f32.mrf.mxu0
      %v582 = vadd.f32 %v294, %v581
      %v583 = vpop.f32.mrf.mxu0
      %v584 = vadd.f32 %v294, %v583
      %585 = vmatmul.bf16.gmra.mxu0 %v402
      %v586 = vpop.f32.mrf.mxu0
      %v587 = vadd.f32 %v294, %v586
      %v588 = vpop.f32.mrf.mxu0
      %v589 = vadd.f32 %v294, %v588
      %590 = vmatmul.bf16.gmra.mxu0 %v404
      %v591 = vpop.f32.mrf.mxu0
      %v592 = vadd.f32 %v294, %v591
      %v593 = vpop.f32.mrf.mxu0
      %v594 = vadd.f32 %v294, %v593
      %595 = vmatmul.bf16.gmra.mxu0 %v406
      %v596 = vpop.f32.mrf.mxu0
      %v597 = vadd.f32 %v294, %v596
      %v598 = vpop.f32.mrf.mxu0
      %v599 = vadd.f32 %v294, %v598
      %600 = vmatmul.bf16.gmra.mxu0 %v408
      %v601 = vpop.f32.mrf.mxu0
      %v602 = vadd.f32 %v294, %v601
      %v603 = vpop.f32.mrf.mxu0
      %v604 = vadd.f32 %v294, %v603
      %605 = vmatmul.bf16.gmra.mxu0 %v410
      %v606 = vpop.f32.mrf.mxu0
      %v607 = vadd.f32 %v294, %v606
      %v608 = vpop.f32.mrf.mxu0
      %v609 = vadd.f32 %v294, %v608
      %610 = vmatmul.bf16.gmra.mxu0 %v412
      %v611 = vpop.f32.mrf.mxu0
      %v612 = vadd.f32 %v294, %v611
      %v613 = vpop.f32.mrf.mxu0
      %v614 = vadd.f32 %v294, %v613
      %615 = vmatmul.bf16.gmra.mxu0 %v414
      %v616 = vpop.f32.mrf.mxu0
      %v617 = vadd.f32 %v294, %v616
      %v618 = vpop.f32.mrf.mxu0
      %v619 = vadd.f32 %v294, %v618
      %620 = vmatmul.bf16.gmra.mxu0 %v416
      %v621 = vpop.f32.mrf.mxu0
      %v622 = vadd.f32 %v294, %v621
      %v623 = vpop.f32.mrf.mxu0
      %v624 = vadd.f32 %v294, %v623
      %625 = vmatmul.bf16.gmra.mxu0 %v418
      %v626 = vpop.f32.mrf.mxu0
      %v627 = vadd.f32 %v294, %v626
      %v628 = vpop.f32.mrf.mxu0
      %v629 = vadd.f32 %v294, %v628
      %630 = vmatmul.bf16.gmra.mxu0 %v420
      %v631 = vpop.f32.mrf.mxu0
      %v632 = vadd.f32 %v294, %v631
      %v633 = vpop.f32.mrf.mxu0
      %v634 = vadd.f32 %v294, %v633
      %635 = vmatmul.bf16.gmra.mxu0 %v422
      %v636 = vpop.f32.mrf.mxu0
      %v637 = vadd.f32 %v294, %v636
      %v638 = vpop.f32.mrf.mxu0
      %v639 = vadd.f32 %v294, %v638
      %640 = vdwg.mxu0
      %641 = vmatpush.bf16.msra.mxu0 %v535
      %642 = vmatpush.bf16.msra.mxu0 %v534
      %643 = vmatpush.bf16.msra.mxu0 %v533
      %644 = vmatpush.bf16.msra.mxu0 %v532
      %645 = vmatpush.bf16.msra.mxu0 %v531
      %646 = vmatpush.bf16.msra.mxu0 %v530
      %647 = vmatpush.bf16.msra.mxu0 %v529
      %648 = vmatpush.bf16.msra.mxu0 %v528
      %649 = vmatmul.bf16.gmra.mxu0 %v393
      %v650 = vpop.f32.mrf.mxu0
      %v651 = vadd.f32 %v562, %v650
      %v652 = vpop.f32.mrf.mxu0
      %v653 = vadd.f32 %v564, %v652
      %654 = vmatmul.bf16.gmra.mxu0 %v395
      %v655 = vpop.f32.mrf.mxu0
      %v656 = vadd.f32 %v567, %v655
      %v657 = vpop.f32.mrf.mxu0
      %v658 = vadd.f32 %v569, %v657
      %659 = vmatmul.bf16.gmra.mxu0 %v397
      %v660 = vpop.f32.mrf.mxu0
      %v661 = vadd.f32 %v572, %v660
      %v662 = vpop.f32.mrf.mxu0
      %v663 = vadd.f32 %v574, %v662
      %664 = vmatmul.bf16.gmra.mxu0 %v399
      %v665 = vpop.f32.mrf.mxu0
      %v666 = vadd.f32 %v577, %v665
      %v667 = vpop.f32.mrf.mxu0
      %v668 = vadd.f32 %v579, %v667
      %669 = vmatmul.bf16.gmra.mxu0 %v401
      %v670 = vpop.f32.mrf.mxu0
      %v671 = vadd.f32 %v582, %v670
      %v672 = vpop.f32.mrf.mxu0
      %v673 = vadd.f32 %v584, %v672
      %674 = vmatmul.bf16.gmra.mxu0 %v403
      %v675 = vpop.f32.mrf.mxu0
      %v676 = vadd.f32 %v587, %v675
      %v677 = vpop.f32.mrf.mxu0
      %v678 = vadd.f32 %v589, %v677
      %679 = vmatmul.bf16.gmra.mxu0 %v405
      %v680 = vpop.f32.mrf.mxu0
      %v681 = vadd.f32 %v592, %v680
      %v682 = vpop.f32.mrf.mxu0
      %v683 = vadd.f32 %v594, %v682
      %684 = vmatmul.bf16.gmra.mxu0 %v407
      %v685 = vpop.f32.mrf.mxu0
      %v686 = vadd.f32 %v597, %v685
      %v687 = vpop.f32.mrf.mxu0
      %v688 = vadd.f32 %v599, %v687
      %689 = vmatmul.bf16.gmra.mxu0 %v409
      %v690 = vpop.f32.mrf.mxu0
      %v691 = vadd.f32 %v602, %v690
      %v692 = vpop.f32.mrf.mxu0
      %v693 = vadd.f32 %v604, %v692
      %694 = vmatmul.bf16.gmra.mxu0 %v411
      %v695 = vpop.f32.mrf.mxu0
      %v696 = vadd.f32 %v607, %v695
      %v697 = vpop.f32.mrf.mxu0
      %v698 = vadd.f32 %v609, %v697
      %699 = vmatmul.bf16.gmra.mxu0 %v413
      %v700 = vpop.f32.mrf.mxu0
      %v701 = vadd.f32 %v612, %v700
      %v702 = vpop.f32.mrf.mxu0
      %v703 = vadd.f32 %v614, %v702
      %704 = vmatmul.bf16.gmra.mxu0 %v415
      %v705 = vpop.f32.mrf.mxu0
      %v706 = vadd.f32 %v617, %v705
      %v707 = vpop.f32.mrf.mxu0
      %v708 = vadd.f32 %v619, %v707
      %709 = vmatmul.bf16.gmra.mxu0 %v417
      %v710 = vpop.f32.mrf.mxu0
      %v711 = vadd.f32 %v622, %v710
      %v712 = vpop.f32.mrf.mxu0
      %v713 = vadd.f32 %v624, %v712
      %714 = vmatmul.bf16.gmra.mxu0 %v419
      %v715 = vpop.f32.mrf.mxu0
      %v716 = vadd.f32 %v627, %v715
      %v717 = vpop.f32.mrf.mxu0
      %v718 = vadd.f32 %v629, %v717
      %719 = vmatmul.bf16.gmra.mxu0 %v421
      %v720 = vpop.f32.mrf.mxu0
      %v721 = vadd.f32 %v632, %v720
      %v722 = vpop.f32.mrf.mxu0
      %v723 = vadd.f32 %v634, %v722
      %724 = vmatmul.bf16.gmra.mxu0 %v423
      %v725 = vpop.f32.mrf.mxu0
      %v726 = vadd.f32 %v637, %v725
      %v727 = vpop.f32.mrf.mxu0
      %v728 = vadd.f32 %v639, %v727
      %729 = vdwg.mxu0
      %v730 = vmax.f32 %v651, 0.0
      %v731 = vmax.f32 %v653, 0.0
      %v732 = vmax.f32 %v656, 0.0
      %v733 = vmax.f32 %v658, 0.0
      %v734 = vmax.f32 %v661, 0.0
      %v735 = vmax.f32 %v663, 0.0
      %v736 = vmax.f32 %v666, 0.0
      %v737 = vmax.f32 %v668, 0.0
      %v738 = vmax.f32 %v671, 0.0
      %v739 = vmax.f32 %v673, 0.0
      %v740 = vmax.f32 %v676, 0.0
      %v741 = vmax.f32 %v678, 0.0
      %v742 = vmax.f32 %v681, 0.0
      %v743 = vmax.f32 %v683, 0.0
      %v744 = vmax.f32 %v686, 0.0
      %v745 = vmax.f32 %v688, 0.0
      %v746 = vmax.f32 %v691, 0.0
      %v747 = vmax.f32 %v693, 0.0
      %v748 = vmax.f32 %v696, 0.0
      %v749 = vmax.f32 %v698, 0.0
      %v750 = vmax.f32 %v701, 0.0
      %v751 = vmax.f32 %v703, 0.0
      %v752 = vmax.f32 %v706, 0.0
      %v753 = vmax.f32 %v708, 0.0
      %v754 = vmax.f32 %v711, 0.0
      %v755 = vmax.f32 %v713, 0.0
      %v756 = vmax.f32 %v716, 0.0
      %v757 = vmax.f32 %v718, 0.0
      %v758 = vmax.f32 %v721, 0.0
      %v759 = vmax.f32 %v723, 0.0
      %v760 = vmax.f32 %v726, 0.0
      %v761 = vmax.f32 %v728, 0.0
      %v762 = vpack.c.bf16 %v730, %v730
      %v763 = vpack.c.bf16 %v731, %v731
      %v764 = vpack.c.bf16 %v732, %v732
      %v765 = vpack.c.bf16 %v733, %v733
      %v766 = vpack.c.bf16 %v734, %v734
      %v767 = vpack.c.bf16 %v735, %v735
      %v768 = vpack.c.bf16 %v736, %v736
      %v769 = vpack.c.bf16 %v737, %v737
      %v770 = vpack.c.bf16 %v738, %v738
      %v771 = vpack.c.bf16 %v739, %v739
      %v772 = vpack.c.bf16 %v740, %v740
      %v773 = vpack.c.bf16 %v741, %v741
      %v774 = vpack.c.bf16 %v742, %v742
      %v775 = vpack.c.bf16 %v743, %v743
      %v776 = vpack.c.bf16 %v744, %v744
      %v777 = vpack.c.bf16 %v745, %v745
      %v778 = vpack.c.bf16 %v746, %v746
      %v779 = vpack.c.bf16 %v747, %v747
      %v780 = vpack.c.bf16 %v748, %v748
      %v781 = vpack.c.bf16 %v749, %v749
      %v782 = vpack.c.bf16 %v750, %v750
      %v783 = vpack.c.bf16 %v751, %v751
      %v784 = vpack.c.bf16 %v752, %v752
      %v785 = vpack.c.bf16 %v753, %v753
      %v786 = vpack.c.bf16 %v754, %v754
      %v787 = vpack.c.bf16 %v755, %v755
      %v788 = vpack.c.bf16 %v756, %v756
      %v789 = vpack.c.bf16 %v757, %v757
      %v790 = vpack.c.bf16 %v758, %v758
      %v791 = vpack.c.bf16 %v759, %v759
      %v792 = vpack.c.bf16 %v760, %v760
      %v793 = vpack.c.bf16 %v761, %v761
      %794 = vst [vmem:[%s226] sm:$0xf] %v762
      %795 = vst [vmem:[%s226 + $0x4] sm:$0xf] %v763
      %796 = vst [vmem:[%s226 + $0x8] sm:$0xf] %v764
      %797 = vst [vmem:[%s226 + $0xc] sm:$0xf] %v765
      %798 = vst [vmem:[%s226 + $0x10] sm:$0xf] %v766
      %799 = vst [vmem:[%s226 + $0x14] sm:$0xf] %v767
      %800 = vst [vmem:[%s226 + $0x18] sm:$0xf] %v768
      %801 = vst [vmem:[%s226 + $0x1c] sm:$0xf] %v769
      %802 = vst [vmem:[%s226 + $0x20] sm:$0xf] %v770
      %803 = vst [vmem:[%s226 + $0x24] sm:$0xf] %v771
      %804 = vst [vmem:[%s226 + $0x28] sm:$0xf] %v772
      %805 = vst [vmem:[%s226 + $0x2c] sm:$0xf] %v773
      %806 = vst [vmem:[%s226 + $0x30] sm:$0xf] %v774
      %807 = vst [vmem:[%s226 + $0x34] sm:$0xf] %v775
      %808 = vst [vmem:[%s226 + $0x38] sm:$0xf] %v776
      %809 = vst [vmem:[%s226 + $0x3c] sm:$0xf] %v777
      %810 = vst [vmem:[%s226 + $0x40] sm:$0xf] %v778
      %811 = vst [vmem:[%s226 + $0x44] sm:$0xf] %v779
      %812 = vst [vmem:[%s226 + $0x48] sm:$0xf] %v780
      %813 = vst [vmem:[%s226 + $0x4c] sm:$0xf] %v781
      %814 = vst [vmem:[%s226 + $0x50] sm:$0xf] %v782
      %815 = vst [vmem:[%s226 + $0x54] sm:$0xf] %v783
      %816 = vst [vmem:[%s226 + $0x58] sm:$0xf] %v784
      %817 = vst [vmem:[%s226 + $0x5c] sm:$0xf] %v785
      %818 = vst [vmem:[%s226 + $0x60] sm:$0xf] %v786
      %819 = vst [vmem:[%s226 + $0x64] sm:$0xf] %v787
      %820 = vst [vmem:[%s226 + $0x68] sm:$0xf] %v788
      %821 = vst [vmem:[%s226 + $0x6c] sm:$0xf] %v789
      %822 = vst [vmem:[%s226 + $0x70] sm:$0xf] %v790
      %823 = vst [vmem:[%s226 + $0x74] sm:$0xf] %v791
      %824 = vst [vmem:[%s226 + $0x78] sm:$0xf] %v792
      %825 = vst [vmem:[%s226 + $0x7c] sm:$0xf] %v793
      %s826 = smul.u32 32, %s18
      %p827 = scmp.lt.s32.totalorder %s826, 63
      %s828 = scalar_select %p827, %s826, 63
      %p829 = scmp.lt.s32.totalorder %s19, 0
      %s830 = scalar_select %p829, %s19, 0
      %s831 = sadd.s32 %s830, %s828
      %s832 = smul.addr %s831, 4
      %s833 = scalar_lea.vmem %s3, %s832
      // Predicated region
      $region33: #{deeplabv3_forward.5} parent=31 // pred_check
        %p834 = pneg %p124
      $region34: #{deeplabv3_forward.5} parent=31 // pred_check_branch
        %836 = sbr.rel (%p834) target = $region36
      $region35: #{deeplabv3_forward.5} parent=31 // pred_region
        %s837 = smul.u32 32, %s18
      $region36: #{deeplabv3_forward.5} parent=31 // pred_fallthru
        _
    $region32: #{deeplabv3_forward.5} parent=5 // pred_fallthru
      _
    %p838 = scmp.le.s32.totalorder 2, %s9
    // Predicated region
    $region37: #{deeplabv3_forward.5} parent=5 // pred_check
      %p839 = pneg %p838
    $region38: #{deeplabv3_forward.5} parent=5 // pred_check_branch
      %841 = sbr.rel (%p839) target = $region40
    $region39: #{deeplabv3_forward.5} parent=5 // pred_region
      %s842 = ssub.s32 %s9, 2
      // Predicated region
      $region41: #{deeplabv3_forward.5} parent=39 // pred_check
        %p843 = pneg %p130
      $region42: #{deeplabv3_forward.5} parent=39 // pred_check_branch
        %845 = sbr.rel (%p843) target = $region44
      $region43: #{deeplabv3_forward.5} parent=39 // pred_region
        %s846 = smul.u32 32, %s20
        %p847 = scmp.lt.s32.totalorder %s846, 63
        %s848 = scalar_select %p847, %s846, 63
        %p849 = scmp.lt.s32.totalorder %s21, 0
        %s850 = scalar_select %p849, %s21, 0
        %s851 = sadd.s32 %s850, %s848
        %s852 = smul.addr %s851, 4
        %s853 = scalar_lea.vmem %s3, %s852
      $region44: #{deeplabv3_forward.5} parent=39 // pred_fallthru
        _
    $region40: #{deeplabv3_forward.5} parent=5 // pred_fallthru
      _
  $region6: #{deeplabv3_forward.5} parent=0 // loop_footer
    %s13 = sadd.s32 1, %s9
  $region7: #{deeplabv3_forward.5} parent=0 // loop_footer_branch
    %8 = sbr.rel target = $region3
  $region8: #{deeplabv3_forward.5} parent=0 // loop_exit
    _

// kernel: deeplabv3_forward.6
$region0: #{deeplabv3_forward.6}
  #allocation0 [shape = 'u32[]', space=smem, size = 0x4, offset = 0x4, fixed_abs, tag = 'smem constant byte address 0x4 - core index']
  #allocation1 [shape = 'u32[72,128]{1,0:T(1,128)}', space=vmem, size = 0x9000, scoped, tag = 'internal scratch']
  %s0 = inlined_call_operand.vmem [shape: bf16[128,384], index: 0, kind: input, shape index: {}]
  %s1 = inlined_call_operand.vmem [shape: bf16[384,128], index: 1, kind: input, shape index: {}]
  %s2 = inlined_call_operand.vmem [shape: f32[1,128], index: 2, kind: input, shape index: {}]
  %s3 = inlined_call_operand.vmem [shape: bf16[128,128], index: 3, kind: output, shape index: {}]
  %s4 = sld [smem:[#allocation0]]
  $region45: #{deeplabv3_forward.6} parent=0
    _
  %s6 = ssub.s32 1, %s4
  %s7 = scalar_select 0, %s6, %s4
  loop: start=0, step=1, limit=4
  $region2: #{deeplabv3_forward.6} parent=0 // loop_pre_header
    _
  $region3: #{deeplabv3_forward.6} parent=0 // loop_header
    %s9 = sphi 0, %s13
    %p10 = scmp.ge.s32.totalorder %s9, 4
    %s16 = sphi 0, %s28
    %s17 = sphi 0, %s24
    %s18 = sphi 0, %s16
    %s19 = sphi 0, %s17
    %s20 = sphi 0, %s18
    %s21 = sphi 0, %s19
    %s31 = sphi 0, %s33
    %s34 = sphi 0, %s31
    %s35 = sphi 0, %s34
    %s51 = sphi 0, %s35
    %s57 = sphi 0, %s59
    %s60 = sphi 0, %s57
    %s61 = sphi 0, %s60
    %s77 = sphi 0, %s61
    %s83 = sphi 0, %s85
    %s86 = sphi 0, %s83
    %s87 = sphi 0, %s86
    %s103 = sphi 0, %s87
    %s111 = sphi 0, %s113
    %s114 = sphi 0, %s111
    %s115 = sphi 0, %s114
    %s131 = sphi 0, %s115
  $region4: #{deeplabv3_forward.6} parent=0 // loop_header_branch
    %12 = sbr.rel (%p10) target = $region8
  $region5: #{deeplabv3_forward.6} parent=0 // loop_body
    %s14 = ssub.s32 %s9, 1
    %s15 = ssub.s32 %s9, 2
    %s22 = sadd.s32 1, %s17
    %p23 = scmp.ge.s32.totalorder %s22, 1
    %s24 = scalar_select %p23, 0, %s22
    %s25 = sadd.s32 1, %s16
    %s26 = scalar_select %p23, %s25, %s16
    %p27 = scmp.ge.s32.totalorder %s26, 2
    %s28 = scalar_select %p27, 0, %s26
    %s29 = ssub.s32 %s16, %s28
    %p30 = scmp.eq.s32.totalorder %s29, 0
    %s32 = sadd.s32 %s31, 1
    %s33 = scalar_select %p30, %s31, %s32
    %p36 = pneg %p30
    %p37 = scmp.eq.s32.totalorder %s9, 1
    %p38 = por %p36, %p37
    %p39 = scmp.ne.s32.totalorder %s31, %s34
    %p40 = scmp.eq.s32.totalorder %s9, 0
    %p41 = por %p39, %p40
    %p42 = scmp.ne.s32.totalorder %s31, %s34
    %p43 = scmp.eq.s32.totalorder %s14, 1
    %p44 = por %p42, %p43
    %p45 = scmp.ne.s32.totalorder %s34, %s35
    %p46 = scmp.eq.s32.totalorder %s14, 0
    %p47 = por %p45, %p46
    %p48 = scmp.ne.s32.totalorder %s34, %s35
    %p49 = scmp.eq.s32.totalorder %s15, 1
    %p50 = por %p48, %p49
    %p52 = scmp.ne.s32.totalorder %s35, %s51
    %p53 = scmp.eq.s32.totalorder %s15, 0
    %p54 = por %p52, %p53
    %s55 = ssub.s32 %s17, %s24
    %p56 = scmp.eq.s32.totalorder %s55, 0
    %s58 = sadd.s32 %s57, 1
    %s59 = scalar_select %p56, %s57, %s58
    %p62 = pneg %p56
    %p63 = scmp.eq.s32.totalorder %s9, 1
    %p64 = por %p62, %p63
    %p65 = scmp.ne.s32.totalorder %s57, %s60
    %p66 = scmp.eq.s32.totalorder %s9, 0
    %p67 = por %p65, %p66
    %p68 = scmp.ne.s32.totalorder %s57, %s60
    %p69 = scmp.eq.s32.totalorder %s14, 1
    %p70 = por %p68, %p69
    %p71 = scmp.ne.s32.totalorder %s60, %s61
    %p72 = scmp.eq.s32.totalorder %s14, 0
    %p73 = por %p71, %p72
    %p74 = scmp.ne.s32.totalorder %s60, %s61
    %p75 = scmp.eq.s32.totalorder %s15, 1
    %p76 = por %p74, %p75
    %p78 = scmp.ne.s32.totalorder %s61, %s77
    %p79 = scmp.eq.s32.totalorder %s15, 0
    %p80 = por %p78, %p79
    %s81 = ssub.s32 %s17, %s24
    %p82 = scmp.eq.s32.totalorder %s81, 0
    %s84 = sadd.s32 %s83, 1
    %s85 = scalar_select %p82, %s83, %s84
    %p88 = pneg %p82
    %p89 = scmp.eq.s32.totalorder %s9, 1
    %p90 = por %p88, %p89
    %p91 = scmp.ne.s32.totalorder %s83, %s86
    %p92 = scmp.eq.s32.totalorder %s9, 0
    %p93 = por %p91, %p92
    %p94 = scmp.ne.s32.totalorder %s83, %s86
    %p95 = scmp.eq.s32.totalorder %s14, 1
    %p96 = por %p94, %p95
    %p97 = scmp.ne.s32.totalorder %s86, %s87
    %p98 = scmp.eq.s32.totalorder %s14, 0
    %p99 = por %p97, %p98
    %p100 = scmp.ne.s32.totalorder %s86, %s87
    %p101 = scmp.eq.s32.totalorder %s15, 1
    %p102 = por %p100, %p101
    %p104 = scmp.ne.s32.totalorder %s87, %s103
    %p105 = scmp.eq.s32.totalorder %s15, 0
    %p106 = por %p104, %p105
    %s107 = ssub.s32 %s16, %s28
    %s108 = ssub.s32 %s17, %s24
    %s109 = sor.u32 %s107, %s108
    %p110 = scmp.eq.s32.totalorder %s109, 0
    %s112 = sadd.s32 %s111, 1
    %s113 = scalar_select %p110, %s111, %s112
    %p116 = pneg %p110
    %p117 = scmp.eq.s32.totalorder %s9, 1
    %p118 = por %p116, %p117
    %p119 = scmp.ne.s32.totalorder %s111, %s114
    %p120 = scmp.eq.s32.totalorder %s9, 0
    %p121 = por %p119, %p120
    %p122 = scmp.ne.s32.totalorder %s111, %s114
    %p123 = scmp.eq.s32.totalorder %s14, 1
    %p124 = por %p122, %p123
    %p125 = scmp.ne.s32.totalorder %s114, %s115
    %p126 = scmp.eq.s32.totalorder %s14, 0
    %p127 = por %p125, %p126
    %p128 = scmp.ne.s32.totalorder %s114, %s115
    %p129 = scmp.eq.s32.totalorder %s15, 1
    %p130 = por %p128, %p129
    %p132 = scmp.ne.s32.totalorder %s115, %s131
    %p133 = scmp.eq.s32.totalorder %s15, 0
    %p134 = por %p132, %p133
    %p135 = scmp.le.s32.totalorder 1, %s9
    %p136 = scmp.lt.s32.totalorder %s9, 3
    %p137 = pnand %p135, %p136
    %p138 = pneg %p137
    // Predicated region
    $region9: #{deeplabv3_forward.6} parent=5 // pred_check
      _
    $region10: #{deeplabv3_forward.6} parent=5 // pred_check_branch
      %140 = sbr.rel (%p137) target = $region12
    $region11: #{deeplabv3_forward.6} parent=5 // pred_region
      %s141 = ssub.s32 %s9, 1
      // Predicated region
      $region13: #{deeplabv3_forward.6} parent=11 // pred_check
        %p142 = pneg %p73
      $region14: #{deeplabv3_forward.6} parent=11 // pred_check_branch
        %144 = sbr.rel (%p142) target = $region16
      $region15: #{deeplabv3_forward.6} parent=11 // pred_region
        %p145 = scmp.lt.s32.totalorder %s19, 0
        %s146 = scalar_select %p145, %s19, 0
        %s147 = smul.addr %s146, 4
        %s148 = scalar_lea.vmem %s1, %s147
      $region16: #{deeplabv3_forward.6} parent=11 // pred_fallthru
        _
      // Predicated region
      $region17: #{deeplabv3_forward.6} parent=11 // pred_check
        %p149 = pneg %p99
      $region18: #{deeplabv3_forward.6} parent=11 // pred_check_branch
        %151 = sbr.rel (%p149) target = $region20
      $region19: #{deeplabv3_forward.6} parent=11 // pred_region
        %p152 = scmp.lt.s32.totalorder %s19, 0
        %s153 = scalar_select %p152, %s19, 0
        %s154 = scalar_lea.vmem %s2, %s153
      $region20: #{deeplabv3_forward.6} parent=11 // pred_fallthru
        _
    $region12: #{deeplabv3_forward.6} parent=5 // pred_fallthru
      _
    %p155 = scmp.lt.s32.totalorder %s9, 2
    // Predicated region
    $region21: #{deeplabv3_forward.6} parent=5 // pred_check
      %p156 = pneg %p155
    $region22: #{deeplabv3_forward.6} parent=5 // pred_check_branch
      %158 = sbr.rel (%p156) target = $region24
    $region23: #{deeplabv3_forward.6} parent=5 // pred_region
      // Predicated region
      $region25: #{deeplabv3_forward.6} parent=23 // pred_check
        %p159 = pneg %p41
      $region26: #{deeplabv3_forward.6} parent=23 // pred_check_branch
        %161 = sbr.rel (%p159) target = $region28
      $region27: #{deeplabv3_forward.6} parent=23 // pred_region
        %s162 = smul.u32 8, %s16
        %p163 = scmp.lt.s32.totalorder %s162, 15
        %s164 = scalar_select %p163, %s162, 15
        %s165 = smul.addr %s164, 3
        %s166 = smul.addr %s165, 4
        %s167 = scalar_lea.vmem %s0, %s166
        %s168 = smul.u32 8, %s16
      $region28: #{deeplabv3_forward.6} parent=23 // pred_fallthru
        _
    $region24: #{deeplabv3_forward.6} parent=5 // pred_fallthru
      _
    %p169 = scmp.le.s32.totalorder 1, %s9
    %p170 = scmp.lt.s32.totalorder %s9, 3
    %p171 = pnand %p169, %p170
    %p172 = pneg %p171
    // Predicated region
    $region29: #{deeplabv3_forward.6} parent=5 // pred_check
      _
    $region30: #{deeplabv3_forward.6} parent=5 // pred_check_branch
      %174 = sbr.rel (%p171) target = $region32
    $region31: #{deeplabv3_forward.6} parent=5 // pred_region
      %s175 = ssub.s32 %s9, 1
      %s176 = smul.u32 8, %s18
      %p177 = scmp.lt.s32.totalorder %s176, 15
      %s178 = scalar_select %p177, %s176, 15
      %s179 = smul.addr %s178, 3
      %s180 = smul.addr %s179, 4
      %s181 = scalar_lea.vmem %s0, %s180
      %p182 = pneg %p47
      %p183 = pneg %p44
      %p184 = scmp.lt.s32.totalorder %s19, 0
      %s185 = scalar_select %p184, %s19, 0
      %s186 = smul.addr %s185, 4
      %s187 = scalar_lea.vmem %s1, %s186
      %p188 = pneg %p73
      %p189 = pneg %p70
      %p190 = scmp.lt.s32.totalorder %s19, 0
      %s191 = scalar_select %p190, %s19, 0
      %s192 = scalar_lea.vmem %s2, %s191
      %p193 = pneg %p99
      %p194 = pneg %p96
      %p195 = pneg %p127
      %p196 = pneg %p124
      %s197 = smul.u32 8, %s18
      %p198 = scmp.lt.s32.totalorder %s197, 15
      %s199 = scalar_select %p198, %s197, 15
      %p200 = scmp.lt.s32.totalorder %s19, 0
      %s201 = scalar_select %p200, %s19, 0
      %s202 = sadd.s32 %s201, %s199
      %s203 = smul.addr %s202, 4
      %s204 = scalar_lea.vmem %s3, %s203
      %s205 = smul.u32 8, %s18
      %p206 = scmp.lt.s32.totalorder %s205, 15
      %s207 = scalar_select %p206, %s205, 15
      %s208 = smul.addr %s207, 3
      %s209 = smul.addr %s208, 4
      %s210 = scalar_lea.vmem %s0, %s209
      %s211 = smul.u32 8, %s18
      %p212 = scmp.lt.s32.totalorder %s19, 0
      %s213 = scalar_select %p212, %s19, 0
      %s214 = smul.addr %s213, 4
      %s215 = scalar_lea.vmem %s1, %s214
      %p216 = scmp.lt.s32.totalorder %s19, 0
      %s217 = scalar_select %p216, %s19, 0
      %s218 = scalar_lea.vmem %s2, %s217
      %s219 = smul.u32 8, %s18
      %p220 = scmp.lt.s32.totalorder %s219, 15
      %s221 = scalar_select %p220, %s219, 15
      %p222 = scmp.lt.s32.totalorder %s19, 0
      %s223 = scalar_select %p222, %s19, 0
      %s224 = sadd.s32 %s223, %s221
      %s225 = smul.addr %s224, 4
      %s226 = scalar_lea.vmem %s3, %s225
      %s227 = smul.u32 8, %s18
      %v228 = vld [vmem:[%s210] sm:$0xff]
      %v229 = vld [vmem:[%s210 + $0x8] sm:$0xf]
      %v230 = vld [vmem:[%s210 + $0xc] sm:$0xff]
      %v231 = vld [vmem:[%s210 + $0x14] sm:$0xf]
      %v232 = vld [vmem:[%s210 + $0x18] sm:$0xff]
      %v233 = vld [vmem:[%s210 + $0x20] sm:$0xf]
      %v234 = vld [vmem:[%s210 + $0x24] sm:$0xff]
      %v235 = vld [vmem:[%s210 + $0x2c] sm:$0xf]
      %v236 = vld [vmem:[%s210 + $0x30] sm:$0xff]
      %v237 = vld [vmem:[%s210 + $0x38] sm:$0xf]
      %v238 = vld [vmem:[%s210 + $0x3c] sm:$0xff]
      %v239 = vld [vmem:[%s210 + $0x44] sm:$0xf]
      %v240 = vld [vmem:[%s210 + $0x48] sm:$0xff]
      %v241 = vld [vmem:[%s210 + $0x50] sm:$0xf]
      %v242 = vld [vmem:[%s210 + $0x54] sm:$0xff]
      %v243 = vld [vmem:[%s210 + $0x5c] sm:$0xf]
      %v244 = vld [vmem:[%s215] sm:$0xf]
      %v245 = vld [vmem:[%s215 + $0x4] sm:$0xf]
      %v246 = vld [vmem:[%s215 + $0x8] sm:$0xf]
      %v247 = vld [vmem:[%s215 + $0xc] sm:$0xf]
      %v248 = vld [vmem:[%s215 + $0x10] sm:$0xf]
      %v249 = vld [vmem:[%s215 + $0x14] sm:$0xf]
      %v250 = vld [vmem:[%s215 + $0x18] sm:$0xf]
      %v251 = vld [vmem:[%s215 + $0x1c] sm:$0xf]
      %v252 = vld [vmem:[%s215 + $0x20] sm:$0xf]
      %v253 = vld [vmem:[%s215 + $0x24] sm:$0xf]
      %v254 = vld [vmem:[%s215 + $0x28] sm:$0xf]
      %v255 = vld [vmem:[%s215 + $0x2c] sm:$0xf]
      %v256 = vld [vmem:[%s215 + $0x30] sm:$0xf]
      %v257 = vld [vmem:[%s215 + $0x34] sm:$0xf]
      %v258 = vld [vmem:[%s215 + $0x38] sm:$0xf]
      %v259 = vld [vmem:[%s215 + $0x3c] sm:$0xf]
      %v260 = vld [vmem:[%s215 + $0x40] sm:$0xf]
      %v261 = vld [vmem:[%s215 + $0x44] sm:$0xf]
      %v262 = vld [vmem:[%s215 + $0x48] sm:$0xf]
      %v263 = vld [vmem:[%s215 + $0x4c] sm:$0xf]
      %v264 = vld [vmem:[%s215 + $0x50] sm:$0xf]
      %v265 = vld [vmem:[%s215 + $0x54] sm:$0xf]
      %v266 = vld [vmem:[%s215 + $0x58] sm:$0xf]
      %v267 = vld [vmem:[%s215 + $0x5c] sm:$0xf]
      %v268 = vld [vmem:[%s215 + $0x60] sm:$0xf]
      %v269 = vld [vmem:[%s215 + $0x64] sm:$0xf]
      %v270 = vld [vmem:[%s215 + $0x68] sm:$0xf]
      %v271 = vld [vmem:[%s215 + $0x6c] sm:$0xf]
      %v272 = vld [vmem:[%s215 + $0x70] sm:$0xf]
      %v273 = vld [vmem:[%s215 + $0x74] sm:$0xf]
      %v274 = vld [vmem:[%s215 + $0x78] sm:$0xf]
      %v275 = vld [vmem:[%s215 + $0x7c] sm:$0xf]
      %v276 = vld [vmem:[%s215 + $0x80] sm:$0xf]
      %v277 = vld [vmem:[%s215 + $0x84] sm:$0xf]
      %v278 = vld [vmem:[%s215 + $0x88] sm:$0xf]
      %v279 = vld [vmem:[%s215 + $0x8c] sm:$0xf]
      %v280 = vld [vmem:[%s215 + $0x90] sm:$0xf]
      %v281 = vld [vmem:[%s215 + $0x94] sm:$0xf]
      %v282 = vld [vmem:[%s215 + $0x98] sm:$0xf]
      %v283 = vld [vmem:[%s215 + $0x9c] sm:$0xf]
      %v284 = vld [vmem:[%s215 + $0xa0] sm:$0xf]
      %v285 = vld [vmem:[%s215 + $0xa4] sm:$0xf]
      %v286 = vld [vmem:[%s215 + $0xa8] sm:$0xf]
      %v287 = vld [vmem:[%s215 + $0xac] sm:$0xf]
      %v288 = vld [vmem:[%s215 + $0xb0] sm:$0xf]
      %v289 = vld [vmem:[%s215 + $0xb4] sm:$0xf]
      %v290 = vld [vmem:[%s215 + $0xb8] sm:$0xf]
      %v291 = vld [vmem:[%s215 + $0xbc] sm:$0xf]
      %v292 = vld [vmem:[%s218] sm:$0x1]
      %v294 = vperm.slane %v292, 0
      %v312 = vunpack.c.l.b16 %v228
      %v313 = vunpack.c.h.b16 %v228
      %v314 = vunpack.c.l.b16 %v229
      %v315 = vunpack.c.l.b16 %v230
      %v316 = vunpack.c.h.b16 %v230
      %v317 = vunpack.c.l.b16 %v231
      %v318 = vunpack.c.l.b16 %v232
      %v319 = vunpack.c.h.b16 %v232
      %v320 = vunpack.c.l.b16 %v233
      %v321 = vunpack.c.l.b16 %v234
      %v322 = vunpack.c.h.b16 %v234
      %v323 = vunpack.c.l.b16 %v235
      %v324 = vunpack.c.l.b16 %v236
      %v325 = vunpack.c.h.b16 %v236
      %v326 = vunpack.c.l.b16 %v237
      %v327 = vunpack.c.l.b16 %v238
      %v328 = vunpack.c.h.b16 %v238
      %v329 = vunpack.c.l.b16 %v239
      %v330 = vunpack.c.l.b16 %v240
      %v331 = vunpack.c.h.b16 %v240
      %v332 = vunpack.c.l.b16 %v241
      %v333 = vunpack.c.l.b16 %v242
      %v334 = vunpack.c.h.b16 %v242
      %v335 = vunpack.c.l.b16 %v243
      %v336 = vpack.c.b16 %v315, %v312
      %v337 = vpack.c.b16 %v316, %v313
      %v338 = vpack.c.b16 %v317, %v314
      %v339 = vpack.c.b16 %v321, %v318
      %v340 = vpack.c.b16 %v322, %v319
      %v341 = vpack.c.b16 %v323, %v320
      %v342 = vpack.c.b16 %v327, %v324
      %v343 = vpack.c.b16 %v328, %v325
      %v344 = vpack.c.b16 %v329, %v326
      %v345 = vpack.c.b16 %v333, %v330
      %v346 = vpack.c.b16 %v334, %v331
      %v347 = vpack.c.b16 %v335, %v332
      %v408 = vunpack.c.l.b16 %v244
      %v409 = vunpack.c.l.b16 %v245
      %v410 = vunpack.c.l.b16 %v246
      %v411 = vunpack.c.l.b16 %v247
      %v412 = vunpack.c.l.b16 %v248
      %v413 = vunpack.c.l.b16 %v249
      %v414 = vunpack.c.l.b16 %v250
      %v415 = vunpack.c.l.b16 %v251
      %v416 = vunpack.c.l.b16 %v252
      %v417 = vunpack.c.l.b16 %v253
      %v418 = vunpack.c.l.b16 %v254
      %v419 = vunpack.c.l.b16 %v255
      %v420 = vunpack.c.l.b16 %v256
      %v421 = vunpack.c.l.b16 %v257
      %v422 = vunpack.c.l.b16 %v258
      %v423 = vunpack.c.l.b16 %v259
      %v424 = vunpack.c.l.b16 %v260
      %v425 = vunpack.c.l.b16 %v261
      %v426 = vunpack.c.l.b16 %v262
      %v427 = vunpack.c.l.b16 %v263
      %v428 = vunpack.c.l.b16 %v264
      %v429 = vunpack.c.l.b16 %v265
      %v430 = vunpack.c.l.b16 %v266
      %v431 = vunpack.c.l.b16 %v267
      %v432 = vunpack.c.l.b16 %v268
      %v433 = vunpack.c.l.b16 %v269
      %v434 = vunpack.c.l.b16 %v270
      %v435 = vunpack.c.l.b16 %v271
      %v436 = vunpack.c.l.b16 %v272
      %v437 = vunpack.c.l.b16 %v273
      %v438 = vunpack.c.l.b16 %v274
      %v439 = vunpack.c.l.b16 %v275
      %v440 = vunpack.c.l.b16 %v276
      %v441 = vunpack.c.l.b16 %v277
      %v442 = vunpack.c.l.b16 %v278
      %v443 = vunpack.c.l.b16 %v279
      %v444 = vunpack.c.l.b16 %v280
      %v445 = vunpack.c.l.b16 %v281
      %v446 = vunpack.c.l.b16 %v282
      %v447 = vunpack.c.l.b16 %v283
      %v448 = vunpack.c.l.b16 %v284
      %v449 = vunpack.c.l.b16 %v285
      %v450 = vunpack.c.l.b16 %v286
      %v451 = vunpack.c.l.b16 %v287
      %v452 = vunpack.c.l.b16 %v288
      %v453 = vunpack.c.l.b16 %v289
      %v454 = vunpack.c.l.b16 %v290
      %v455 = vunpack.c.l.b16 %v291
      %v456 = vpack.c.b16 %v409, %v408
      %v457 = vpack.c.b16 %v411, %v410
      %v458 = vpack.c.b16 %v413, %v412
      %v459 = vpack.c.b16 %v415, %v414
      %v460 = vpack.c.b16 %v417, %v416
      %v461 = vpack.c.b16 %v419, %v418
      %v462 = vpack.c.b16 %v421, %v420
      %v463 = vpack.c.b16 %v423, %v422
      %v464 = vpack.c.b16 %v425, %v424
      %v465 = vpack.c.b16 %v427, %v426
      %v466 = vpack.c.b16 %v429, %v428
      %v467 = vpack.c.b16 %v431, %v430
      %v468 = vpack.c.b16 %v433, %v432
      %v469 = vpack.c.b16 %v435, %v434
      %v470 = vpack.c.b16 %v437, %v436
      %v471 = vpack.c.b16 %v439, %v438
      %v472 = vpack.c.b16 %v441, %v440
      %v473 = vpack.c.b16 %v443, %v442
      %v474 = vpack.c.b16 %v445, %v444
      %v475 = vpack.c.b16 %v447, %v446
      %v476 = vpack.c.b16 %v449, %v448
      %v477 = vpack.c.b16 %v451, %v450
      %v478 = vpack.c.b16 %v453, %v452
      %v479 = vpack.c.b16 %v455, %v454
      %504 = vmatpush.bf16.msra.mxu0 %v463
      %505 = vmatpush.bf16.msra.mxu0 %v462
      %506 = vmatpush.bf16.msra.mxu0 %v461
      %507 = vmatpush.bf16.msra.mxu0 %v460
      %508 = vmatpush.bf16.msra.mxu0 %v459
      %509 = vmatpush.bf16.msra.mxu0 %v458
      %510 = vmatpush.bf16.msra.mxu0 %v457
      %511 = vmatpush.bf16.msra.mxu0 %v456
      %512 = vmatmul.bf16.gmra.mxu0 %v336
      %v513 = vpop.f32.mrf.mxu0
      %v514 = vadd.f32 %v294, %v513
      %v515 = vpop.f32.mrf.mxu0
      %v516 = vadd.f32 %v294, %v515
      %517 = vmatmul.bf16.gmra.mxu0 %v339
      %v518 = vpop.f32.mrf.mxu0
      %v519 = vadd.f32 %v294, %v518
      %v520 = vpop.f32.mrf.mxu0
      %v521 = vadd.f32 %v294, %v520
      %522 = vmatmul.bf16.gmra.mxu0 %v342
      %v523 = vpop.f32.mrf.mxu0
      %v524 = vadd.f32 %v294, %v523
      %v525 = vpop.f32.mrf.mxu0
      %v526 = vadd.f32 %v294, %v525
      %527 = vmatmul.bf16.gmra.mxu0 %v345
      %v528 = vpop.f32.mrf.mxu0
      %v529 = vadd.f32 %v294, %v528
      %v530 = vpop.f32.mrf.mxu0
      %v531 = vadd.f32 %v294, %v530
      %532 = vdwg.mxu0
      %533 = vmatpush.bf16.msra.mxu0 %v471
      %534 = vmatpush.bf16.msra.mxu0 %v470
      %535 = vmatpush.bf16.msra.mxu0 %v469
      %536 = vmatpush.bf16.msra.mxu0 %v468
      %537 = vmatpush.bf16.msra.mxu0 %v467
      %538 = vmatpush.bf16.msra.mxu0 %v466
      %539 = vmatpush.bf16.msra.mxu0 %v465
      %540 = vmatpush.bf16.msra.mxu0 %v464
      %541 = vmatmul.bf16.gmra.mxu0 %v337
      %v542 = vpop.f32.mrf.mxu0
      %v543 = vadd.f32 %v514, %v542
      %v544 = vpop.f32.mrf.mxu0
      %v545 = vadd.f32 %v516, %v544
      %546 = vmatmul.bf16.gmra.mxu0 %v340
      %v547 = vpop.f32.mrf.mxu0
      %v548 = vadd.f32 %v519, %v547
      %v549 = vpop.f32.mrf.mxu0
      %v550 = vadd.f32 %v521, %v549
      %551 = vmatmul.bf16.gmra.mxu0 %v343
      %v552 = vpop.f32.mrf.mxu0
      %v553 = vadd.f32 %v524, %v552
      %v554 = vpop.f32.mrf.mxu0
      %v555 = vadd.f32 %v526, %v554
      %556 = vmatmul.bf16.gmra.mxu0 %v346
      %v557 = vpop.f32.mrf.mxu0
      %v558 = vadd.f32 %v529, %v557
      %v559 = vpop.f32.mrf.mxu0
      %v560 = vadd.f32 %v531, %v559
      %561 = vdwg.mxu0
      %562 = vmatpush.bf16.msra.mxu0 %v479
      %563 = vmatpush.bf16.msra.mxu0 %v478
      %564 = vmatpush.bf16.msra.mxu0 %v477
      %565 = vmatpush.bf16.msra.mxu0 %v476
      %566 = vmatpush.bf16.msra.mxu0 %v475
      %567 = vmatpush.bf16.msra.mxu0 %v474
      %568 = vmatpush.bf16.msra.mxu0 %v473
      %569 = vmatpush.bf16.msra.mxu0 %v472
      %570 = vmatmul.bf16.gmra.mxu0 %v338
      %v571 = vpop.f32.mrf.mxu0
      %v572 = vadd.f32 %v543, %v571
      %v573 = vpop.f32.mrf.mxu0
      %v574 = vadd.f32 %v545, %v573
      %575 = vmatmul.bf16.gmra.mxu0 %v341
      %v576 = vpop.f32.mrf.mxu0
      %v577 = vadd.f32 %v548, %v576
      %v578 = vpop.f32.mrf.mxu0
      %v579 = vadd.f32 %v550, %v578
      %580 = vmatmul.bf16.gmra.mxu0 %v344
      %v581 = vpop.f32.mrf.mxu0
      %v582 = vadd.f32 %v553, %v581
      %v583 = vpop.f32.mrf.mxu0
      %v584 = vadd.f32 %v555, %v583
      %585 = vmatmul.bf16.gmra.mxu0 %v347
      %v586 = vpop.f32.mrf.mxu0
      %v587 = vadd.f32 %v558, %v586
      %v588 = vpop.f32.mrf.mxu0
      %v589 = vadd.f32 %v560, %v588
      %590 = vdwg.mxu0
      %v591 = vmax.f32 %v572, 0.0
      %v592 = vmax.f32 %v574, 0.0
      %v593 = vmax.f32 %v577, 0.0
      %v594 = vmax.f32 %v579, 0.0
      %v595 = vmax.f32 %v582, 0.0
      %v596 = vmax.f32 %v584, 0.0
      %v597 = vmax.f32 %v587, 0.0
      %v598 = vmax.f32 %v589, 0.0
      %v599 = vpack.c.bf16 %v591, %v591
      %v600 = vpack.c.bf16 %v592, %v592
      %v601 = vpack.c.bf16 %v593, %v593
      %v602 = vpack.c.bf16 %v594, %v594
      %v603 = vpack.c.bf16 %v595, %v595
      %v604 = vpack.c.bf16 %v596, %v596
      %v605 = vpack.c.bf16 %v597, %v597
      %v606 = vpack.c.bf16 %v598, %v598
      %607 = vst [vmem:[%s226] sm:$0xf] %v599
      %608 = vst [vmem:[%s226 + $0x4] sm:$0xf] %v600
      %609 = vst [vmem:[%s226 + $0x8] sm:$0xf] %v601
      %610 = vst [vmem:[%s226 + $0xc] sm:$0xf] %v602
      %611 = vst [vmem:[%s226 + $0x10] sm:$0xf] %v603
      %612 = vst [vmem:[%s226 + $0x14] sm:$0xf] %v604
      %613 = vst [vmem:[%s226 + $0x18] sm:$0xf] %v605
      %614 = vst [vmem:[%s226 + $0x1c] sm:$0xf] %v606
      %s615 = smul.u32 8, %s18
      %p616 = scmp.lt.s32.totalorder %s615, 15
      %s617 = scalar_select %p616, %s615, 15
      %p618 = scmp.lt.s32.totalorder %s19, 0
      %s619 = scalar_select %p618, %s19, 0
      %s620 = sadd.s32 %s619, %s617
      %s621 = smul.addr %s620, 4
      %s622 = scalar_lea.vmem %s3, %s621
      // Predicated region
      $region33: #{deeplabv3_forward.6} parent=31 // pred_check
        %p623 = pneg %p124
      $region34: #{deeplabv3_forward.6} parent=31 // pred_check_branch
        %625 = sbr.rel (%p623) target = $region36
      $region35: #{deeplabv3_forward.6} parent=31 // pred_region
        %s626 = smul.u32 8, %s18
      $region36: #{deeplabv3_forward.6} parent=31 // pred_fallthru
        _
    $region32: #{deeplabv3_forward.6} parent=5 // pred_fallthru
      _
    %p627 = scmp.le.s32.totalorder 2, %s9
    // Predicated region
    $region37: #{deeplabv3_forward.6} parent=5 // pred_check
      %p628 = pneg %p627
    $region38: #{deeplabv3_forward.6} parent=5 // pred_check_branch
      %630 = sbr.rel (%p628) target = $region40
    $region39: #{deeplabv3_forward.6} parent=5 // pred_region
      %s631 = ssub.s32 %s9, 2
      // Predicated region
      $region41: #{deeplabv3_forward.6} parent=39 // pred_check
        %p632 = pneg %p130
      $region42: #{deeplabv3_forward.6} parent=39 // pred_check_branch
        %634 = sbr.rel (%p632) target = $region44
      $region43: #{deeplabv3_forward.6} parent=39 // pred_region
        %s635 = smul.u32 8, %s20
        %p636 = scmp.lt.s32.totalorder %s635, 15
        %s637 = scalar_select %p636, %s635, 15
        %p638 = scmp.lt.s32.totalorder %s21, 0
        %s639 = scalar_select %p638, %s21, 0
        %s640 = sadd.s32 %s639, %s637
        %s641 = smul.addr %s640, 4
        %s642 = scalar_lea.vmem %s3, %s641
      $region44: #{deeplabv3_forward.6} parent=39 // pred_fallthru
        _
    $region40: #{deeplabv3_forward.6} parent=5 // pred_fallthru
      _
  $region6: #{deeplabv3_forward.6} parent=0 // loop_footer
    %s13 = sadd.s32 1, %s9
  $region7: #{deeplabv3_forward.6} parent=0 // loop_footer_branch
    %8 = sbr.rel target = $region3
  $region8: #{deeplabv3_forward.6} parent=0 // loop_exit
    _

// kernel: deeplabv3_forward.7
$region0: #{deeplabv3_forward.7}
  #allocation0 [shape = 'u32[]', space=smem, size = 0x4, offset = 0x4, fixed_abs, tag = 'smem constant byte address 0x4 - core index']
  #allocation1 [shape = 'u32[72,128]{1,0:T(1,128)}', space=vmem, size = 0x9000, scoped, tag = 'internal scratch']
  %s0 = inlined_call_operand.vmem [shape: bf16[32,128], index: 0, kind: input, shape index: {}]
  %s1 = inlined_call_operand.vmem [shape: bf16[128,32], index: 1, kind: input, shape index: {}]
  %s2 = inlined_call_operand.vmem [shape: f32[1,32], index: 2, kind: input, shape index: {}]
  %s3 = inlined_call_operand.vmem [shape: bf16[32,1152], index: 3, kind: input, shape index: {}, may-alias: {3,6,9}]
  %s4 = inlined_call_operand.vmem [shape: bf16[1152,32], index: 4, kind: input, shape index: {}]
  %s5 = inlined_call_operand.vmem [shape: f32[1,32], index: 5, kind: input, shape index: {}]
  %s6 = inlined_call_operand.vmem [shape: bf16[32,1152], index: 6, kind: input, shape index: {}, may-alias: {3,6,9}]
  %s7 = inlined_call_operand.vmem [shape: bf16[1152,32], index: 7, kind: input, shape index: {}]
  %s8 = inlined_call_operand.vmem [shape: f32[1,32], index: 8, kind: input, shape index: {}]
  %s9 = inlined_call_operand.vmem [shape: bf16[32,1152], index: 9, kind: input, shape index: {}, may-alias: {3,6,9}]
  %s10 = inlined_call_operand.vmem [shape: bf16[1152,32], index: 10, kind: input, shape index: {}]
  %s11 = inlined_call_operand.vmem [shape: f32[1,32], index: 11, kind: input, shape index: {}]
  %s12 = inlined_call_operand.vmem [shape: bf16[32,32], index: 12, kind: output, shape index: {0}]
  %s13 = inlined_call_operand.vmem [shape: bf16[32,32], index: 13, kind: output, shape index: {1}]
  %s14 = inlined_call_operand.vmem [shape: bf16[32,32], index: 14, kind: output, shape index: {2}]
  %s15 = inlined_call_operand.vmem [shape: bf16[32,32], index: 15, kind: output, shape index: {3}]
  %16 = xla_tuple %s12, %s13, %s14, %s15
  %s17 = sld [smem:[#allocation0]]
  $region105: #{deeplabv3_forward.7} parent=0
    _
  %s19 = ssub.s32 1, %s17
  %s20 = scalar_select 0, %s19, %s17
  loop: start=0, step=1, limit=4
  $region2: #{deeplabv3_forward.7} parent=0 // loop_pre_header
    _
  $region3: #{deeplabv3_forward.7} parent=0 // loop_header
    %s22 = sphi 0, %s26
    %p23 = scmp.ge.s32.totalorder %s22, 4
    %s32 = sphi 0, %s34
    %s35 = sphi 0, %s32
    %s36 = sphi 0, %s35
    %s52 = sphi 0, %s36
    %s56 = sphi 0, %s56
    %s58 = sphi 0, %s56
    %s59 = sphi 0, %s58
    %s73 = sphi 0, %s59
    %s77 = sphi 0, %s77
    %s79 = sphi 0, %s77
    %s80 = sphi 0, %s79
    %s94 = sphi 0, %s80
    %s100 = sphi 0, %s102
    %s103 = sphi 0, %s100
    %s104 = sphi 0, %s103
    %s120 = sphi 0, %s104
    %s124 = sphi 0, %s124
    %s126 = sphi 0, %s124
    %s127 = sphi 0, %s126
    %s141 = sphi 0, %s127
    %s145 = sphi 0, %s145
    %s147 = sphi 0, %s145
    %s148 = sphi 0, %s147
    %s162 = sphi 0, %s148
    %s168 = sphi 0, %s170
    %s171 = sphi 0, %s168
    %s172 = sphi 0, %s171
    %s188 = sphi 0, %s172
    %s192 = sphi 0, %s192
    %s194 = sphi 0, %s192
    %s195 = sphi 0, %s194
    %s209 = sphi 0, %s195
    %s213 = sphi 0, %s213
    %s215 = sphi 0, %s213
    %s216 = sphi 0, %s215
    %s230 = sphi 0, %s216
    %s236 = sphi 0, %s238
    %s239 = sphi 0, %s236
    %s240 = sphi 0, %s239
    %s256 = sphi 0, %s240
    %s260 = sphi 0, %s260
    %s262 = sphi 0, %s260
    %s263 = sphi 0, %s262
    %s277 = sphi 0, %s263
    %s281 = sphi 0, %s281
    %s283 = sphi 0, %s281
    %s284 = sphi 0, %s283
    %s298 = sphi 0, %s284
    %s304 = sphi 0, %s306
    %s307 = sphi 0, %s304
    %s308 = sphi 0, %s307
    %s324 = sphi 0, %s308
    %s330 = sphi 0, %s332
    %s333 = sphi 0, %s330
    %s334 = sphi 0, %s333
    %s350 = sphi 0, %s334
    %s356 = sphi 0, %s358
    %s359 = sphi 0, %s356
    %s360 = sphi 0, %s359
    %s376 = sphi 0, %s360
    %s382 = sphi 0, %s384
    %s385 = sphi 0, %s382
    %s386 = sphi 0, %s385
    %s402 = sphi 0, %s386
  $region4: #{deeplabv3_forward.7} parent=0 // loop_header_branch
    %25 = sbr.rel (%p23) target = $region8
  $region5: #{deeplabv3_forward.7} parent=0 // loop_body
    %s27 = ssub.s32 %s22, 1
    %s28 = ssub.s32 %s22, 2
    %s29 = sadd.s32 %s22, 1
    %s30 = ssub.s32 %s22, %s29
    %p31 = scmp.eq.s32.totalorder %s30, 0
    %s33 = sadd.s32 %s32, 1
    %s34 = scalar_select %p31, %s32, %s33
    %p37 = pneg %p31
    %p38 = scmp.eq.s32.totalorder %s22, 1
    %p39 = por %p37, %p38
    %p40 = scmp.ne.s32.totalorder %s32, %s35
    %p41 = scmp.eq.s32.totalorder %s22, 0
    %p42 = por %p40, %p41
    %p43 = scmp.ne.s32.totalorder %s32, %s35
    %p44 = scmp.eq.s32.totalorder %s27, 1
    %p45 = por %p43, %p44
    %p46 = scmp.ne.s32.totalorder %s35, %s36
    %p47 = scmp.eq.s32.totalorder %s27, 0
    %p48 = por %p46, %p47
    %p49 = scmp.ne.s32.totalorder %s35, %s36
    %p50 = scmp.eq.s32.totalorder %s28, 1
    %p51 = por %p49, %p50
    %p53 = scmp.ne.s32.totalorder %s36, %s52
    %p54 = scmp.eq.s32.totalorder %s28, 0
    %p55 = por %p53, %p54
    %s57 = sadd.s32 %s56, 1
    %p60 = scmp.eq.s32.totalorder %s22, 1
    %p61 = scmp.ne.s32.totalorder %s56, %s58
    %p62 = scmp.eq.s32.totalorder %s22, 0
    %p63 = por %p61, %p62
    %p64 = scmp.ne.s32.totalorder %s56, %s58
    %p65 = scmp.eq.s32.totalorder %s27, 1
    %p66 = por %p64, %p65
    %p67 = scmp.ne.s32.totalorder %s58, %s59
    %p68 = scmp.eq.s32.totalorder %s27, 0
    %p69 = por %p67, %p68
    %p70 = scmp.ne.s32.totalorder %s58, %s59
    %p71 = scmp.eq.s32.totalorder %s28, 1
    %p72 = por %p70, %p71
    %p74 = scmp.ne.s32.totalorder %s59, %s73
    %p75 = scmp.eq.s32.totalorder %s28, 0
    %p76 = por %p74, %p75
    %s78 = sadd.s32 %s77, 1
    %p81 = scmp.eq.s32.totalorder %s22, 1
    %p82 = scmp.ne.s32.totalorder %s77, %s79
    %p83 = scmp.eq.s32.totalorder %s22, 0
    %p84 = por %p82, %p83
    %p85 = scmp.ne.s32.totalorder %s77, %s79
    %p86 = scmp.eq.s32.totalorder %s27, 1
    %p87 = por %p85, %p86
    %p88 = scmp.ne.s32.totalorder %s79, %s80
    %p89 = scmp.eq.s32.totalorder %s27, 0
    %p90 = por %p88, %p89
    %p91 = scmp.ne.s32.totalorder %s79, %s80
    %p92 = scmp.eq.s32.totalorder %s28, 1
    %p93 = por %p91, %p92
    %p95 = scmp.ne.s32.totalorder %s80, %s94
    %p96 = scmp.eq.s32.totalorder %s28, 0
    %p97 = por %p95, %p96
    %s98 = ssub.s32 %s22, %s29
    %p99 = scmp.eq.s32.totalorder %s98, 0
    %s101 = sadd.s32 %s100, 1
    %s102 = scalar_select %p99, %s100, %s101
    %p105 = pneg %p99
    %p106 = scmp.eq.s32.totalorder %s22, 1
    %p107 = por %p105, %p106
    %p108 = scmp.ne.s32.totalorder %s100, %s103
    %p109 = scmp.eq.s32.totalorder %s22, 0
    %p110 = por %p108, %p109
    %p111 = scmp.ne.s32.totalorder %s100, %s103
    %p112 = scmp.eq.s32.totalorder %s27, 1
    %p113 = por %p111, %p112
    %p114 = scmp.ne.s32.totalorder %s103, %s104
    %p115 = scmp.eq.s32.totalorder %s27, 0
    %p116 = por %p114, %p115
    %p117 = scmp.ne.s32.totalorder %s103, %s104
    %p118 = scmp.eq.s32.totalorder %s28, 1
    %p119 = por %p117, %p118
    %p121 = scmp.ne.s32.totalorder %s104, %s120
    %p122 = scmp.eq.s32.totalorder %s28, 0
    %p123 = por %p121, %p122
    %s125 = sadd.s32 %s124, 1
    %p128 = scmp.eq.s32.totalorder %s22, 1
    %p129 = scmp.ne.s32.totalorder %s124, %s126
    %p130 = scmp.eq.s32.totalorder %s22, 0
    %p131 = por %p129, %p130
    %p132 = scmp.ne.s32.totalorder %s124, %s126
    %p133 = scmp.eq.s32.totalorder %s27, 1
    %p134 = por %p132, %p133
    %p135 = scmp.ne.s32.totalorder %s126, %s127
    %p136 = scmp.eq.s32.totalorder %s27, 0
    %p137 = por %p135, %p136
    %p138 = scmp.ne.s32.totalorder %s126, %s127
    %p139 = scmp.eq.s32.totalorder %s28, 1
    %p140 = por %p138, %p139
    %p142 = scmp.ne.s32.totalorder %s127, %s141
    %p143 = scmp.eq.s32.totalorder %s28, 0
    %p144 = por %p142, %p143
    %s146 = sadd.s32 %s145, 1
    %p149 = scmp.eq.s32.totalorder %s22, 1
    %p150 = scmp.ne.s32.totalorder %s145, %s147
    %p151 = scmp.eq.s32.totalorder %s22, 0
    %p152 = por %p150, %p151
    %p153 = scmp.ne.s32.totalorder %s145, %s147
    %p154 = scmp.eq.s32.totalorder %s27, 1
    %p155 = por %p153, %p154
    %p156 = scmp.ne.s32.totalorder %s147, %s148
    %p157 = scmp.eq.s32.totalorder %s27, 0
    %p158 = por %p156, %p157
    %p159 = scmp.ne.s32.totalorder %s147, %s148
    %p160 = scmp.eq.s32.totalorder %s28, 1
    %p161 = por %p159, %p160
    %p163 = scmp.ne.s32.totalorder %s148, %s162
    %p164 = scmp.eq.s32.totalorder %s28, 0
    %p165 = por %p163, %p164
    %s166 = ssub.s32 %s22, %s29
    %p167 = scmp.eq.s32.totalorder %s166, 0
    %s169 = sadd.s32 %s168, 1
    %s170 = scalar_select %p167, %s168, %s169
    %p173 = pneg %p167
    %p174 = scmp.eq.s32.totalorder %s22, 1
    %p175 = por %p173, %p174
    %p176 = scmp.ne.s32.totalorder %s168, %s171
    %p177 = scmp.eq.s32.totalorder %s22, 0
    %p178 = por %p176, %p177
    %p179 = scmp.ne.s32.totalorder %s168, %s171
    %p180 = scmp.eq.s32.totalorder %s27, 1
    %p181 = por %p179, %p180
    %p182 = scmp.ne.s32.totalorder %s171, %s172
    %p183 = scmp.eq.s32.totalorder %s27, 0
    %p184 = por %p182, %p183
    %p185 = scmp.ne.s32.totalorder %s171, %s172
    %p186 = scmp.eq.s32.totalorder %s28, 1
    %p187 = por %p185, %p186
    %p189 = scmp.ne.s32.totalorder %s172, %s188
    %p190 = scmp.eq.s32.totalorder %s28, 0
    %p191 = por %p189, %p190
    %s193 = sadd.s32 %s192, 1
    %p196 = scmp.eq.s32.totalorder %s22, 1
    %p197 = scmp.ne.s32.totalorder %s192, %s194
    %p198 = scmp.eq.s32.totalorder %s22, 0
    %p199 = por %p197, %p198
    %p200 = scmp.ne.s32.totalorder %s192, %s194
    %p201 = scmp.eq.s32.totalorder %s27, 1
    %p202 = por %p200, %p201
    %p203 = scmp.ne.s32.totalorder %s194, %s195
    %p204 = scmp.eq.s32.totalorder %s27, 0
    %p205 = por %p203, %p204
    %p206 = scmp.ne.s32.totalorder %s194, %s195
    %p207 = scmp.eq.s32.totalorder %s28, 1
    %p208 = por %p206, %p207
    %p210 = scmp.ne.s32.totalorder %s195, %s209
    %p211 = scmp.eq.s32.totalorder %s28, 0
    %p212 = por %p210, %p211
    %s214 = sadd.s32 %s213, 1
    %p217 = scmp.eq.s32.totalorder %s22, 1
    %p218 = scmp.ne.s32.totalorder %s213, %s215
    %p219 = scmp.eq.s32.totalorder %s22, 0
    %p220 = por %p218, %p219
    %p221 = scmp.ne.s32.totalorder %s213, %s215
    %p222 = scmp.eq.s32.totalorder %s27, 1
    %p223 = por %p221, %p222
    %p224 = scmp.ne.s32.totalorder %s215, %s216
    %p225 = scmp.eq.s32.totalorder %s27, 0
    %p226 = por %p224, %p225
    %p227 = scmp.ne.s32.totalorder %s215, %s216
    %p228 = scmp.eq.s32.totalorder %s28, 1
    %p229 = por %p227, %p228
    %p231 = scmp.ne.s32.totalorder %s216, %s230
    %p232 = scmp.eq.s32.totalorder %s28, 0
    %p233 = por %p231, %p232
    %s234 = ssub.s32 %s22, %s29
    %p235 = scmp.eq.s32.totalorder %s234, 0
    %s237 = sadd.s32 %s236, 1
    %s238 = scalar_select %p235, %s236, %s237
    %p241 = pneg %p235
    %p242 = scmp.eq.s32.totalorder %s22, 1
    %p243 = por %p241, %p242
    %p244 = scmp.ne.s32.totalorder %s236, %s239
    %p245 = scmp.eq.s32.totalorder %s22, 0
    %p246 = por %p244, %p245
    %p247 = scmp.ne.s32.totalorder %s236, %s239
    %p248 = scmp.eq.s32.totalorder %s27, 1
    %p249 = por %p247, %p248
    %p250 = scmp.ne.s32.totalorder %s239, %s240
    %p251 = scmp.eq.s32.totalorder %s27, 0
    %p252 = por %p250, %p251
    %p253 = scmp.ne.s32.totalorder %s239, %s240
    %p254 = scmp.eq.s32.totalorder %s28, 1
    %p255 = por %p253, %p254
    %p257 = scmp.ne.s32.totalorder %s240, %s256
    %p258 = scmp.eq.s32.totalorder %s28, 0
    %p259 = por %p257, %p258
    %s261 = sadd.s32 %s260, 1
    %p264 = scmp.eq.s32.totalorder %s22, 1
    %p265 = scmp.ne.s32.totalorder %s260, %s262
    %p266 = scmp.eq.s32.totalorder %s22, 0
    %p267 = por %p265, %p266
    %p268 = scmp.ne.s32.totalorder %s260, %s262
    %p269 = scmp.eq.s32.totalorder %s27, 1
    %p270 = por %p268, %p269
    %p271 = scmp.ne.s32.totalorder %s262, %s263
    %p272 = scmp.eq.s32.totalorder %s27, 0
    %p273 = por %p271, %p272
    %p274 = scmp.ne.s32.totalorder %s262, %s263
    %p275 = scmp.eq.s32.totalorder %s28, 1
    %p276 = por %p274, %p275
    %p278 = scmp.ne.s32.totalorder %s263, %s277
    %p279 = scmp.eq.s32.totalorder %s28, 0
    %p280 = por %p278, %p279
    %s282 = sadd.s32 %s281, 1
    %p285 = scmp.eq.s32.totalorder %s22, 1
    %p286 = scmp.ne.s32.totalorder %s281, %s283
    %p287 = scmp.eq.s32.totalorder %s22, 0
    %p288 = por %p286, %p287
    %p289 = scmp.ne.s32.totalorder %s281, %s283
    %p290 = scmp.eq.s32.totalorder %s27, 1
    %p291 = por %p289, %p290
    %p292 = scmp.ne.s32.totalorder %s283, %s284
    %p293 = scmp.eq.s32.totalorder %s27, 0
    %p294 = por %p292, %p293
    %p295 = scmp.ne.s32.totalorder %s283, %s284
    %p296 = scmp.eq.s32.totalorder %s28, 1
    %p297 = por %p295, %p296
    %p299 = scmp.ne.s32.totalorder %s284, %s298
    %p300 = scmp.eq.s32.totalorder %s28, 0
    %p301 = por %p299, %p300
    %s302 = ssub.s32 %s22, %s29
    %p303 = scmp.eq.s32.totalorder %s302, 0
    %s305 = sadd.s32 %s304, 1
    %s306 = scalar_select %p303, %s304, %s305
    %p309 = pneg %p303
    %p310 = scmp.eq.s32.totalorder %s22, 1
    %p311 = por %p309, %p310
    %p312 = scmp.ne.s32.totalorder %s304, %s307
    %p313 = scmp.eq.s32.totalorder %s22, 0
    %p314 = por %p312, %p313
    %p315 = scmp.ne.s32.totalorder %s304, %s307
    %p316 = scmp.eq.s32.totalorder %s27, 1
    %p317 = por %p315, %p316
    %p318 = scmp.ne.s32.totalorder %s307, %s308
    %p319 = scmp.eq.s32.totalorder %s27, 0
    %p320 = por %p318, %p319
    %p321 = scmp.ne.s32.totalorder %s307, %s308
    %p322 = scmp.eq.s32.totalorder %s28, 1
    %p323 = por %p321, %p322
    %p325 = scmp.ne.s32.totalorder %s308, %s324
    %p326 = scmp.eq.s32.totalorder %s28, 0
    %p327 = por %p325, %p326
    %s328 = ssub.s32 %s22, %s29
    %p329 = scmp.eq.s32.totalorder %s328, 0
    %s331 = sadd.s32 %s330, 1
    %s332 = scalar_select %p329, %s330, %s331
    %p335 = pneg %p329
    %p336 = scmp.eq.s32.totalorder %s22, 1
    %p337 = por %p335, %p336
    %p338 = scmp.ne.s32.totalorder %s330, %s333
    %p339 = scmp.eq.s32.totalorder %s22, 0
    %p340 = por %p338, %p339
    %p341 = scmp.ne.s32.totalorder %s330, %s333
    %p342 = scmp.eq.s32.totalorder %s27, 1
    %p343 = por %p341, %p342
    %p344 = scmp.ne.s32.totalorder %s333, %s334
    %p345 = scmp.eq.s32.totalorder %s27, 0
    %p346 = por %p344, %p345
    %p347 = scmp.ne.s32.totalorder %s333, %s334
    %p348 = scmp.eq.s32.totalorder %s28, 1
    %p349 = por %p347, %p348
    %p351 = scmp.ne.s32.totalorder %s334, %s350
    %p352 = scmp.eq.s32.totalorder %s28, 0
    %p353 = por %p351, %p352
    %s354 = ssub.s32 %s22, %s29
    %p355 = scmp.eq.s32.totalorder %s354, 0
    %s357 = sadd.s32 %s356, 1
    %s358 = scalar_select %p355, %s356, %s357
    %p361 = pneg %p355
    %p362 = scmp.eq.s32.totalorder %s22, 1
    %p363 = por %p361, %p362
    %p364 = scmp.ne.s32.totalorder %s356, %s359
    %p365 = scmp.eq.s32.totalorder %s22, 0
    %p366 = por %p364, %p365
    %p367 = scmp.ne.s32.totalorder %s356, %s359
    %p368 = scmp.eq.s32.totalorder %s27, 1
    %p369 = por %p367, %p368
    %p370 = scmp.ne.s32.totalorder %s359, %s360
    %p371 = scmp.eq.s32.totalorder %s27, 0
    %p372 = por %p370, %p371
    %p373 = scmp.ne.s32.totalorder %s359, %s360
    %p374 = scmp.eq.s32.totalorder %s28, 1
    %p375 = por %p373, %p374
    %p377 = scmp.ne.s32.totalorder %s360, %s376
    %p378 = scmp.eq.s32.totalorder %s28, 0
    %p379 = por %p377, %p378
    %s380 = ssub.s32 %s22, %s29
    %p381 = scmp.eq.s32.totalorder %s380, 0
    %s383 = sadd.s32 %s382, 1
    %s384 = scalar_select %p381, %s382, %s383
    %p387 = pneg %p381
    %p388 = scmp.eq.s32.totalorder %s22, 1
    %p389 = por %p387, %p388
    %p390 = scmp.ne.s32.totalorder %s382, %s385
    %p391 = scmp.eq.s32.totalorder %s22, 0
    %p392 = por %p390, %p391
    %p393 = scmp.ne.s32.totalorder %s382, %s385
    %p394 = scmp.eq.s32.totalorder %s27, 1
    %p395 = por %p393, %p394
    %p396 = scmp.ne.s32.totalorder %s385, %s386
    %p397 = scmp.eq.s32.totalorder %s27, 0
    %p398 = por %p396, %p397
    %p399 = scmp.ne.s32.totalorder %s385, %s386
    %p400 = scmp.eq.s32.totalorder %s28, 1
    %p401 = por %p399, %p400
    %p403 = scmp.ne.s32.totalorder %s386, %s402
    %p404 = scmp.eq.s32.totalorder %s28, 0
    %p405 = por %p403, %p404
    %p406 = scmp.le.s32.totalorder 1, %s22
    %p407 = scmp.lt.s32.totalorder %s22, 3
    %p408 = pnand %p406, %p407
    %p409 = pneg %p408
    // Predicated region
    $region9: #{deeplabv3_forward.7} parent=5 // pred_check
      _
    $region10: #{deeplabv3_forward.7} parent=5 // pred_check_branch
      %411 = sbr.rel (%p408) target = $region12
    $region11: #{deeplabv3_forward.7} parent=5 // pred_region
      %s412 = ssub.s32 %s22, 1
      // Predicated region
      $region13: #{deeplabv3_forward.7} parent=11 // pred_check
        %p413 = pneg %p69
      $region14: #{deeplabv3_forward.7} parent=11 // pred_check_branch
        %415 = sbr.rel (%p413) target = $region16
      $region15: #{deeplabv3_forward.7} parent=11 // pred_region
        _
      $region16: #{deeplabv3_forward.7} parent=11 // pred_fallthru
        _
      // Predicated region
      $region17: #{deeplabv3_forward.7} parent=11 // pred_check
        %p416 = pneg %p90
      $region18: #{deeplabv3_forward.7} parent=11 // pred_check_branch
        %418 = sbr.rel (%p416) target = $region20
      $region19: #{deeplabv3_forward.7} parent=11 // pred_region
        _
      $region20: #{deeplabv3_forward.7} parent=11 // pred_fallthru
        _
      // Predicated region
      $region21: #{deeplabv3_forward.7} parent=11 // pred_check
        %p419 = pneg %p137
      $region22: #{deeplabv3_forward.7} parent=11 // pred_check_branch
        %421 = sbr.rel (%p419) target = $region24
      $region23: #{deeplabv3_forward.7} parent=11 // pred_region
        _
      $region24: #{deeplabv3_forward.7} parent=11 // pred_fallthru
        _
      // Predicated region
      $region25: #{deeplabv3_forward.7} parent=11 // pred_check
        %p422 = pneg %p158
      $region26: #{deeplabv3_forward.7} parent=11 // pred_check_branch
        %424 = sbr.rel (%p422) target = $region28
      $region27: #{deeplabv3_forward.7} parent=11 // pred_region
        _
      $region28: #{deeplabv3_forward.7} parent=11 // pred_fallthru
        _
      // Predicated region
      $region29: #{deeplabv3_forward.7} parent=11 // pred_check
        %p425 = pneg %p205
      $region30: #{deeplabv3_forward.7} parent=11 // pred_check_branch
        %427 = sbr.rel (%p425) target = $region32
      $region31: #{deeplabv3_forward.7} parent=11 // pred_region
        _
      $region32: #{deeplabv3_forward.7} parent=11 // pred_fallthru
        _
      // Predicated region
      $region33: #{deeplabv3_forward.7} parent=11 // pred_check
        %p428 = pneg %p226
      $region34: #{deeplabv3_forward.7} parent=11 // pred_check_branch
        %430 = sbr.rel (%p428) target = $region36
      $region35: #{deeplabv3_forward.7} parent=11 // pred_region
        _
      $region36: #{deeplabv3_forward.7} parent=11 // pred_fallthru
        _
      // Predicated region
      $region37: #{deeplabv3_forward.7} parent=11 // pred_check
        %p431 = pneg %p273
      $region38: #{deeplabv3_forward.7} parent=11 // pred_check_branch
        %433 = sbr.rel (%p431) target = $region40
      $region39: #{deeplabv3_forward.7} parent=11 // pred_region
        _
      $region40: #{deeplabv3_forward.7} parent=11 // pred_fallthru
        _
      // Predicated region
      $region41: #{deeplabv3_forward.7} parent=11 // pred_check
        %p434 = pneg %p294
      $region42: #{deeplabv3_forward.7} parent=11 // pred_check_branch
        %436 = sbr.rel (%p434) target = $region44
      $region43: #{deeplabv3_forward.7} parent=11 // pred_region
        _
      $region44: #{deeplabv3_forward.7} parent=11 // pred_fallthru
        _
    $region12: #{deeplabv3_forward.7} parent=5 // pred_fallthru
      _
    %p437 = scmp.lt.s32.totalorder %s22, 2
    // Predicated region
    $region45: #{deeplabv3_forward.7} parent=5 // pred_check
      %p438 = pneg %p437
    $region46: #{deeplabv3_forward.7} parent=5 // pred_check_branch
      %440 = sbr.rel (%p438) target = $region48
    $region47: #{deeplabv3_forward.7} parent=5 // pred_region
      // Predicated region
      $region49: #{deeplabv3_forward.7} parent=47 // pred_check
        %p441 = pneg %p42
      $region50: #{deeplabv3_forward.7} parent=47 // pred_check_branch
        %443 = sbr.rel (%p441) target = $region52
      $region51: #{deeplabv3_forward.7} parent=47 // pred_region
        %s444 = smul.u32 2, %s22
        %p445 = scmp.lt.s32.totalorder %s444, 3
        %s446 = scalar_select %p445, %s444, 3
        %s447 = smul.addr %s446, 4
        %s448 = scalar_lea.vmem %s0, %s447
        %s449 = smul.u32 2, %s22
      $region52: #{deeplabv3_forward.7} parent=47 // pred_fallthru
        _
      // Predicated region
      $region53: #{deeplabv3_forward.7} parent=47 // pred_check
        %p450 = pneg %p110
      $region54: #{deeplabv3_forward.7} parent=47 // pred_check_branch
        %452 = sbr.rel (%p450) target = $region56
      $region55: #{deeplabv3_forward.7} parent=47 // pred_region
        %s453 = smul.u32 2, %s22
        %p454 = scmp.lt.s32.totalorder %s453, 3
        %s455 = scalar_select %p454, %s453, 3
        %s456 = smul.addr %s455, 9
        %s457 = smul.addr %s456, 4
        %s458 = scalar_lea.vmem %s3, %s457
        %s459 = smul.u32 2, %s22
      $region56: #{deeplabv3_forward.7} parent=47 // pred_fallthru
        _
      // Predicated region
      $region57: #{deeplabv3_forward.7} parent=47 // pred_check
        %p460 = pneg %p178
      $region58: #{deeplabv3_forward.7} parent=47 // pred_check_branch
        %462 = sbr.rel (%p460) target = $region60
      $region59: #{deeplabv3_forward.7} parent=47 // pred_region
        %s463 = smul.u32 2, %s22
        %p464 = scmp.lt.s32.totalorder %s463, 3
        %s465 = scalar_select %p464, %s463, 3
        %s466 = smul.addr %s465, 9
        %s467 = smul.addr %s466, 4
        %s468 = scalar_lea.vmem %s6, %s467
        %s469 = smul.u32 2, %s22
      $region60: #{deeplabv3_forward.7} parent=47 // pred_fallthru
        _
      // Predicated region
      $region61: #{deeplabv3_forward.7} parent=47 // pred_check
        %p470 = pneg %p246
      $region62: #{deeplabv3_forward.7} parent=47 // pred_check_branch
        %472 = sbr.rel (%p470) target = $region64
      $region63: #{deeplabv3_forward.7} parent=47 // pred_region
        %s473 = smul.u32 2, %s22
        %p474 = scmp.lt.s32.totalorder %s473, 3
        %s475 = scalar_select %p474, %s473, 3
        %s476 = smul.addr %s475, 9
        %s477 = smul.addr %s476, 4
        %s478 = scalar_lea.vmem %s9, %s477
        %s479 = smul.u32 2, %s22
      $region64: #{deeplabv3_forward.7} parent=47 // pred_fallthru
        _
    $region48: #{deeplabv3_forward.7} parent=5 // pred_fallthru
      _
    %p480 = scmp.le.s32.totalorder 1, %s22
    %p481 = scmp.lt.s32.totalorder %s22, 3
    %p482 = pnand %p480, %p481
    %p483 = pneg %p482
    // Predicated region
    $region65: #{deeplabv3_forward.7} parent=5 // pred_check
      _
    $region66: #{deeplabv3_forward.7} parent=5 // pred_check_branch
      %485 = sbr.rel (%p482) target = $region68
    $region67: #{deeplabv3_forward.7} parent=5 // pred_region
      %s486 = ssub.s32 %s22, 1
      %s487 = smul.u32 2, %s27
      %p488 = scmp.lt.s32.totalorder %s487, 3
      %s489 = scalar_select %p488, %s487, 3
      %s490 = smul.addr %s489, 4
      %s491 = scalar_lea.vmem %s0, %s490
      %p492 = pneg %p48
      %p493 = pneg %p45
      %p494 = pneg %p69
      %p495 = pneg %p66
      %p496 = pneg %p90
      %p497 = pneg %p87
      %s498 = smul.u32 2, %s27
      %p499 = scmp.lt.s32.totalorder %s498, 3
      %s500 = scalar_select %p499, %s498, 3
      %s501 = smul.addr %s500, 9
      %s502 = smul.addr %s501, 4
      %s503 = scalar_lea.vmem %s3, %s502
      %p504 = pneg %p116
      %p505 = pneg %p113
      %p506 = pneg %p137
      %p507 = pneg %p134
      %p508 = pneg %p158
      %p509 = pneg %p155
      %s510 = smul.u32 2, %s27
      %p511 = scmp.lt.s32.totalorder %s510, 3
      %s512 = scalar_select %p511, %s510, 3
      %s513 = smul.addr %s512, 9
      %s514 = smul.addr %s513, 4
      %s515 = scalar_lea.vmem %s6, %s514
      %p516 = pneg %p184
      %p517 = pneg %p181
      %p518 = pneg %p205
      %p519 = pneg %p202
      %p520 = pneg %p226
      %p521 = pneg %p223
      %s522 = smul.u32 2, %s27
      %p523 = scmp.lt.s32.totalorder %s522, 3
      %s524 = scalar_select %p523, %s522, 3
      %s525 = smul.addr %s524, 9
      %s526 = smul.addr %s525, 4
      %s527 = scalar_lea.vmem %s9, %s526
      %p528 = pneg %p252
      %p529 = pneg %p249
      %p530 = pneg %p273
      %p531 = pneg %p270
      %p532 = pneg %p294
      %p533 = pneg %p291
      %p534 = pneg %p320
      %p535 = pneg %p317
      %s536 = smul.u32 2, %s27
      %p537 = scmp.lt.s32.totalorder %s536, 3
      %s538 = scalar_select %p537, %s536, 3
      %s539 = smul.addr %s538, 4
      %s540 = scalar_lea.vmem %s12, %s539
      %p541 = pneg %p346
      %p542 = pneg %p343
      %s543 = smul.u32 2, %s27
      %p544 = scmp.lt.s32.totalorder %s543, 3
      %s545 = scalar_select %p544, %s543, 3
      %s546 = smul.addr %s545, 4
      %s547 = scalar_lea.vmem %s13, %s546
      %p548 = pneg %p372
      %p549 = pneg %p369
      %s550 = smul.u32 2, %s27
      %p551 = scmp.lt.s32.totalorder %s550, 3
      %s552 = scalar_select %p551, %s550, 3
      %s553 = smul.addr %s552, 4
      %s554 = scalar_lea.vmem %s14, %s553
      %p555 = pneg %p398
      %p556 = pneg %p395
      %s557 = smul.u32 2, %s27
      %p558 = scmp.lt.s32.totalorder %s557, 3
      %s559 = scalar_select %p558, %s557, 3
      %s560 = smul.addr %s559, 4
      %s561 = scalar_lea.vmem %s15, %s560
      %s562 = smul.u32 2, %s27
      %p563 = scmp.lt.s32.totalorder %s562, 3
      %s564 = scalar_select %p563, %s562, 3
      %s565 = smul.addr %s564, 4
      %s566 = scalar_lea.vmem %s0, %s565
      %s567 = smul.u32 2, %s27
      %s568 = smul.u32 2, %s27
      %p569 = scmp.lt.s32.totalorder %s568, 3
      %s570 = scalar_select %p569, %s568, 3
      %s571 = smul.addr %s570, 9
      %s572 = smul.addr %s571, 4
      %s573 = scalar_lea.vmem %s3, %s572
      %s574 = smul.u32 2, %s27
      %s575 = smul.u32 2, %s27
      %p576 = scmp.lt.s32.totalorder %s575, 3
      %s577 = scalar_select %p576, %s575, 3
      %s578 = smul.addr %s577, 9
      %s579 = smul.addr %s578, 4
      %s580 = scalar_lea.vmem %s6, %s579
      %s581 = smul.u32 2, %s27
      %s582 = smul.u32 2, %s27
      %p583 = scmp.lt.s32.totalorder %s582, 3
      %s584 = scalar_select %p583, %s582, 3
      %s585 = smul.addr %s584, 9
      %s586 = smul.addr %s585, 4
      %s587 = scalar_lea.vmem %s9, %s586
      %s588 = smul.u32 2, %s27
      %s589 = smul.u32 2, %s27
      %p590 = scmp.lt.s32.totalorder %s589, 3
      %s591 = scalar_select %p590, %s589, 3
      %s592 = smul.addr %s591, 4
      %s593 = scalar_lea.vmem %s12, %s592
      %s594 = smul.u32 2, %s27
      %s595 = smul.u32 2, %s27
      %p596 = scmp.lt.s32.totalorder %s595, 3
      %s597 = scalar_select %p596, %s595, 3
      %s598 = smul.addr %s597, 4
      %s599 = scalar_lea.vmem %s13, %s598
      %s600 = smul.u32 2, %s27
      %s601 = smul.u32 2, %s27
      %p602 = scmp.lt.s32.totalorder %s601, 3
      %s603 = scalar_select %p602, %s601, 3
      %s604 = smul.addr %s603, 4
      %s605 = scalar_lea.vmem %s14, %s604
      %s606 = smul.u32 2, %s27
      %s607 = smul.u32 2, %s27
      %p608 = scmp.lt.s32.totalorder %s607, 3
      %s609 = scalar_select %p608, %s607, 3
      %s610 = smul.addr %s609, 4
      %s611 = scalar_lea.vmem %s15, %s610
      %s612 = smul.u32 2, %s27
      %v613 = vld [vmem:[%s566] sm:$0xf]
      %v614 = vld [vmem:[%s566 + $0x4] sm:$0xf]
      %v615 = vld [vmem:[%s1] sm:$0xf]
      %v616 = vld [vmem:[%s1 + $0x4] sm:$0xf]
      %v617 = vld [vmem:[%s1 + $0x8] sm:$0xf]
      %v618 = vld [vmem:[%s1 + $0xc] sm:$0xf]
      %v619 = vld [vmem:[%s1 + $0x10] sm:$0xf]
      %v620 = vld [vmem:[%s1 + $0x14] sm:$0xf]
      %v621 = vld [vmem:[%s1 + $0x18] sm:$0xf]
      %v622 = vld [vmem:[%s1 + $0x1c] sm:$0xf]
      %v623 = vld [vmem:[%s1 + $0x20] sm:$0xf]
      %v624 = vld [vmem:[%s1 + $0x24] sm:$0xf]
      %v625 = vld [vmem:[%s1 + $0x28] sm:$0xf]
      %v626 = vld [vmem:[%s1 + $0x2c] sm:$0xf]
      %v627 = vld [vmem:[%s1 + $0x30] sm:$0xf]
      %v628 = vld [vmem:[%s1 + $0x34] sm:$0xf]
      %v629 = vld [vmem:[%s1 + $0x38] sm:$0xf]
      %v630 = vld [vmem:[%s1 + $0x3c] sm:$0xf]
      %v631 = vld [vmem:[%s2] sm:$0x1]
      %v633 = vperm.slane %v631, 0
      %v637 = vunpack.c.l.b16 %v613
      %v638 = vunpack.c.l.b16 %v614
      %v639 = vpack.c.b16 %v638, %v637
      %v657 = vunpack.c.l.b16 %v615
      %v658 = vunpack.c.l.b16 %v616
      %v659 = vunpack.c.l.b16 %v617
      %v660 = vunpack.c.l.b16 %v618
      %v661 = vunpack.c.l.b16 %v619
      %v662 = vunpack.c.l.b16 %v620
      %v663 = vunpack.c.l.b16 %v621
      %v664 = vunpack.c.l.b16 %v622
      %v665 = vunpack.c.l.b16 %v623
      %v666 = vunpack.c.l.b16 %v624
      %v667 = vunpack.c.l.b16 %v625
      %v668 = vunpack.c.l.b16 %v626
      %v669 = vunpack.c.l.b16 %v627
      %v670 = vunpack.c.l.b16 %v628
      %v671 = vunpack.c.l.b16 %v629
      %v672 = vunpack.c.l.b16 %v630
      %v673 = vpack.c.b16 %v658, %v657
      %v674 = vpack.c.b16 %v660, %v659
      %v675 = vpack.c.b16 %v662, %v661
      %v676 = vpack.c.b16 %v664, %v663
      %v677 = vpack.c.b16 %v666, %v665
      %v678 = vpack.c.b16 %v668, %v667
      %v679 = vpack.c.b16 %v670, %v669
      %v680 = vpack.c.b16 %v672, %v671
      %689 = vmatpush.bf16.msra.mxu0 %v680
      %690 = vmatpush.bf16.msra.mxu0 %v679
      %691 = vmatpush.bf16.msra.mxu0 %v678
      %692 = vmatpush.bf16.msra.mxu0 %v677
      %693 = vmatpush.bf16.msra.mxu0 %v676
      %694 = vmatpush.bf16.msra.mxu0 %v675
      %695 = vmatpush.bf16.msra.mxu0 %v674
      %696 = vmatpush.bf16.msra.mxu0 %v673
      %697 = vmatmul.bf16.gmra.mxu0 %v639
      %v698 = vpop.f32.mrf.mxu0
      %v699 = vadd.f32 %v633, %v698
      %v700 = vpop.f32.mrf.mxu0
      %v701 = vadd.f32 %v633, %v700
      %702 = vdwg.mxu0
      %v703 = vmax.f32 %v699, 0.0
      %v704 = vmax.f32 %v701, 0.0
      %v705 = vpack.c.bf16 %v703, %v703
      %v706 = vpack.c.bf16 %v704, %v704
      %vm707 = vcmask 257024
      %708 = vst.msk [vmem:[%s593] sm:$0xf] %vm707, %v705
      %709 = vst.msk [vmem:[%s593 + $0x4] sm:$0xf] %vm707, %v706
      %v710 = vld [vmem:[%s573] sm:$0xff]
      %v711 = vld [vmem:[%s573 + $0x8] sm:$0xff]
      %v712 = vld [vmem:[%s573 + $0x10] sm:$0xff]
      %v713 = vld [vmem:[%s573 + $0x18] sm:$0xff]
      %v714 = vld [vmem:[%s573 + $0x20] sm:$0xf]
      %v715 = vld [vmem:[%s573 + $0x24] sm:$0xff]
      %v716 = vld [vmem:[%s573 + $0x2c] sm:$0xff]
      %v717 = vld [vmem:[%s573 + $0x34] sm:$0xff]
      %v718 = vld [vmem:[%s573 + $0x3c] sm:$0xff]
      %v719 = vld [vmem:[%s573 + $0x44] sm:$0xf]
      %v720 = vld [vmem:[%s4] sm:$0xf]
      %v721 = vld [vmem:[%s4 + $0x4] sm:$0xf]
      %v722 = vld [vmem:[%s4 + $0x8] sm:$0xf]
      %v723 = vld [vmem:[%s4 + $0xc] sm:$0xf]
      %v724 = vld [vmem:[%s4 + $0x10] sm:$0xf]
      %v725 = vld [vmem:[%s4 + $0x14] sm:$0xf]
      %v726 = vld [vmem:[%s4 + $0x18] sm:$0xf]
      %v727 = vld [vmem:[%s4 + $0x1c] sm:$0xf]
      %v728 = vld [vmem:[%s4 + $0x20] sm:$0xf]
      %v729 = vld [vmem:[%s4 + $0x24] sm:$0xf]
      %v730 = vld [vmem:[%s4 + $0x28] sm:$0xf]
      %v731 = vld [vmem:[%s4 + $0x2c] sm:$0xf]
      %v732 = vld [vmem:[%s4 + $0x30] sm:$0xf]
      %v733 = vld [vmem:[%s4 + $0x34] sm:$0xf]
      %v734 = vld [vmem:[%s4 + $0x38] sm:$0xf]
      %v735 = vld [vmem:[%s4 + $0x3c] sm:$0xf]
      %v736 = vld [vmem:[%s4 + $0x40] sm:$0xf]
      %v737 = vld [vmem:[%s4 + $0x44] sm:$0xf]
      %v738 = vld [vmem:[%s4 + $0x48] sm:$0xf]
      %v739 = vld [vmem:[%s4 + $0x4c] sm:$0xf]
      %v740 = vld [vmem:[%s4 + $0x50] sm:$0xf]
      %v741 = vld [vmem:[%s4 + $0x54] sm:$0xf]
      %v742 = vld [vmem:[%s4 + $0x58] sm:$0xf]
      %v743 = vld [vmem:[%s4 + $0x5c] sm:$0xf]
      %v744 = vld [vmem:[%s4 + $0x60] sm:$0xf]
      %v745 = vld [vmem:[%s4 + $0x64] sm:$0xf]
      %v746 = vld [vmem:[%s4 + $0x68] sm:$0xf]
      %v747 = vld [vmem:[%s4 + $0x6c] sm:$0xf]
      %v748 = vld [vmem:[%s4 + $0x70] sm:$0xf]
      %v749 = vld [vmem:[%s4 + $0x74] sm:$0xf]
      %v750 = vld [vmem:[%s4 + $0x78] sm:$0xf]
      %v751 = vld [vmem:[%s4 + $0x7c] sm:$0xf]
      %v752 = vld [vmem:[%s4 + $0x80] sm:$0xf]
      %v753 = vld [vmem:[%s4 + $0x84] sm:$0xf]
      %v754 = vld [vmem:[%s4 + $0x88] sm:$0xf]
      %v755 = vld [vmem:[%s4 + $0x8c] sm:$0xf]
      %v756 = vld [vmem:[%s4 + $0x90] sm:$0xf]
      %v757 = vld [vmem:[%s4 + $0x94] sm:$0xf]
      %v758 = vld [vmem:[%s4 + $0x98] sm:$0xf]
      %v759 = vld [vmem:[%s4 + $0x9c] sm:$0xf]
      %v760 = vld [vmem:[%s4 + $0xa0] sm:$0xf]
      %v761 = vld [vmem:[%s4 + $0xa4] sm:$0xf]
      %v762 = vld [vmem:[%s4 + $0xa8] sm:$0xf]
      %v763 = vld [vmem:[%s4 + $0xac] sm:$0xf]
      %v764 = vld [vmem:[%s4 + $0xb0] sm:$0xf]
      %v765 = vld [vmem:[%s4 + $0xb4] sm:$0xf]
      %v766 = vld [vmem:[%s4 + $0xb8] sm:$0xf]
      %v767 = vld [vmem:[%s4 + $0xbc] sm:$0xf]
      %v768 = vld [vmem:[%s4 + $0xc0] sm:$0xf]
      %v769 = vld [vmem:[%s4 + $0xc4] sm:$0xf]
      %v770 = vld [vmem:[%s4 + $0xc8] sm:$0xf]
      %v771 = vld [vmem:[%s4 + $0xcc] sm:$0xf]
      %v772 = vld [vmem:[%s4 + $0xd0] sm:$0xf]
      %v773 = vld [vmem:[%s4 + $0xd4] sm:$0xf]
      %v774 = vld [vmem:[%s4 + $0xd8] sm:$0xf]
      %v775 = vld [vmem:[%s4 + $0xdc] sm:$0xf]
      %v776 = vld [vmem:[%s4 + $0xe0] sm:$0xf]
      %v777 = vld [vmem:[%s4 + $0xe4] sm:$0xf]
      %v778 = vld [vmem:[%s4 + $0xe8] sm:$0xf]
      %v779 = vld [vmem:[%s4 + $0xec] sm:$0xf]
      %v780 = vld [vmem:[%s4 + $0xf0] sm:$0xf]
      %v781 = vld [vmem:[%s4 + $0xf4] sm:$0xf]
      %v782 = vld [vmem:[%s4 + $0xf8] sm:$0xf]
      %v783 = vld [vmem:[%s4 + $0xfc] sm:$0xf]
      %v784 = vld [vmem:[%s4 + $0x100] sm:$0xf]
      %v785 = vld [vmem:[%s4 + $0x104] sm:$0xf]
      %v786 = vld [vmem:[%s4 + $0x108] sm:$0xf]
      %v787 = vld [vmem:[%s4 + $0x10c] sm:$0xf]
      %v788 = vld [vmem:[%s4 + $0x110] sm:$0xf]
      %v789 = vld [vmem:[%s4 + $0x114] sm:$0xf]
      %v790 = vld [vmem:[%s4 + $0x118] sm:$0xf]
      %v791 = vld [vmem:[%s4 + $0x11c] sm:$0xf]
      %v792 = vld [vmem:[%s4 + $0x120] sm:$0xf]
      %v793 = vld [vmem:[%s4 + $0x124] sm:$0xf]
      %v794 = vld [vmem:[%s4 + $0x128] sm:$0xf]
      %v795 = vld [vmem:[%s4 + $0x12c] sm:$0xf]
      %v796 = vld [vmem:[%s4 + $0x130] sm:$0xf]
      %v797 = vld [vmem:[%s4 + $0x134] sm:$0xf]
      %v798 = vld [vmem:[%s4 + $0x138] sm:$0xf]
      %v799 = vld [vmem:[%s4 + $0x13c] sm:$0xf]
      %v800 = vld [vmem:[%s4 + $0x140] sm:$0xf]
      %v801 = vld [vmem:[%s4 + $0x144] sm:$0xf]
      %v802 = vld [vmem:[%s4 + $0x148] sm:$0xf]
      %v803 = vld [vmem:[%s4 + $0x14c] sm:$0xf]
      %v804 = vld [vmem:[%s4 + $0x150] sm:$0xf]
      %v805 = vld [vmem:[%s4 + $0x154] sm:$0xf]
      %v806 = vld [vmem:[%s4 + $0x158] sm:$0xf]
      %v807 = vld [vmem:[%s4 + $0x15c] sm:$0xf]
      %v808 = vld [vmem:[%s4 + $0x160] sm:$0xf]
      %v809 = vld [vmem:[%s4 + $0x164] sm:$0xf]
      %v810 = vld [vmem:[%s4 + $0x168] sm:$0xf]
      %v811 = vld [vmem:[%s4 + $0x16c] sm:$0xf]
      %v812 = vld [vmem:[%s4 + $0x170] sm:$0xf]
      %v813 = vld [vmem:[%s4 + $0x174] sm:$0xf]
      %v814 = vld [vmem:[%s4 + $0x178] sm:$0xf]
      %v815 = vld [vmem:[%s4 + $0x17c] sm:$0xf]
      %v816 = vld [vmem:[%s4 + $0x180] sm:$0xf]
      %v817 = vld [vmem:[%s4 + $0x184] sm:$0xf]
      %v818 = vld [vmem:[%s4 + $0x188] sm:$0xf]
      %v819 = vld [vmem:[%s4 + $0x18c] sm:$0xf]
      %v820 = vld [vmem:[%s4 + $0x190] sm:$0xf]
      %v821 = vld [vmem:[%s4 + $0x194] sm:$0xf]
      %v822 = vld [vmem:[%s4 + $0x198] sm:$0xf]
      %v823 = vld [vmem:[%s4 + $0x19c] sm:$0xf]
      %v824 = vld [vmem:[%s4 + $0x1a0] sm:$0xf]
      %v825 = vld [vmem:[%s4 + $0x1a4] sm:$0xf]
      %v826 = vld [vmem:[%s4 + $0x1a8] sm:$0xf]
      %v827 = vld [vmem:[%s4 + $0x1ac] sm:$0xf]
      %v828 = vld [vmem:[%s4 + $0x1b0] sm:$0xf]
      %v829 = vld [vmem:[%s4 + $0x1b4] sm:$0xf]
      %v830 = vld [vmem:[%s4 + $0x1b8] sm:$0xf]
      %v831 = vld [vmem:[%s4 + $0x1bc] sm:$0xf]
      %v832 = vld [vmem:[%s4 + $0x1c0] sm:$0xf]
      %v833 = vld [vmem:[%s4 + $0x1c4] sm:$0xf]
      %v834 = vld [vmem:[%s4 + $0x1c8] sm:$0xf]
      %v835 = vld [vmem:[%s4 + $0x1cc] sm:$0xf]
      %v836 = vld [vmem:[%s4 + $0x1d0] sm:$0xf]
      %v837 = vld [vmem:[%s4 + $0x1d4] sm:$0xf]
      %v838 = vld [vmem:[%s4 + $0x1d8] sm:$0xf]
      %v839 = vld [vmem:[%s4 + $0x1dc] sm:$0xf]
      %v840 = vld [vmem:[%s4 + $0x1e0] sm:$0xf]
      %v841 = vld [vmem:[%s4 + $0x1e4] sm:$0xf]
      %v842 = vld [vmem:[%s4 + $0x1e8] sm:$0xf]
      %v843 = vld [vmem:[%s4 + $0x1ec] sm:$0xf]
      %v844 = vld [vmem:[%s4 + $0x1f0] sm:$0xf]
      %v845 = vld [vmem:[%s4 + $0x1f4] sm:$0xf]
      %v846 = vld [vmem:[%s4 + $0x1f8] sm:$0xf]
      %v847 = vld [vmem:[%s4 + $0x1fc] sm:$0xf]
      %v848 = vld [vmem:[%s4 + $0x200] sm:$0xf]
      %v849 = vld [vmem:[%s4 + $0x204] sm:$0xf]
      %v850 = vld [vmem:[%s4 + $0x208] sm:$0xf]
      %v851 = vld [vmem:[%s4 + $0x20c] sm:$0xf]
      %v852 = vld [vmem:[%s4 + $0x210] sm:$0xf]
      %v853 = vld [vmem:[%s4 + $0x214] sm:$0xf]
      %v854 = vld [vmem:[%s4 + $0x218] sm:$0xf]
      %v855 = vld [vmem:[%s4 + $0x21c] sm:$0xf]
      %v856 = vld [vmem:[%s4 + $0x220] sm:$0xf]
      %v857 = vld [vmem:[%s4 + $0x224] sm:$0xf]
      %v858 = vld [vmem:[%s4 + $0x228] sm:$0xf]
      %v859 = vld [vmem:[%s4 + $0x22c] sm:$0xf]
      %v860 = vld [vmem:[%s4 + $0x230] sm:$0xf]
      %v861 = vld [vmem:[%s4 + $0x234] sm:$0xf]
      %v862 = vld [vmem:[%s4 + $0x238] sm:$0xf]
      %v863 = vld [vmem:[%s4 + $0x23c] sm:$0xf]
      %v864 = vld [vmem:[%s5] sm:$0x1]
      %v866 = vperm.slane %v864, 0
      %v878 = vunpack.c.l.b16 %v710
      %v879 = vunpack.c.h.b16 %v710
      %v880 = vunpack.c.l.b16 %v711
      %v881 = vunpack.c.h.b16 %v711
      %v882 = vunpack.c.l.b16 %v712
      %v883 = vunpack.c.h.b16 %v712
      %v884 = vunpack.c.l.b16 %v713
      %v885 = vunpack.c.h.b16 %v713
      %v886 = vunpack.c.l.b16 %v714
      %v887 = vunpack.c.l.b16 %v715
      %v888 = vunpack.c.h.b16 %v715
      %v889 = vunpack.c.l.b16 %v716
      %v890 = vunpack.c.h.b16 %v716
      %v891 = vunpack.c.l.b16 %v717
      %v892 = vunpack.c.h.b16 %v717
      %v893 = vunpack.c.l.b16 %v718
      %v894 = vunpack.c.h.b16 %v718
      %v895 = vunpack.c.l.b16 %v719
      %v896 = vpack.c.b16 %v887, %v878
      %v897 = vpack.c.b16 %v888, %v879
      %v898 = vpack.c.b16 %v889, %v880
      %v899 = vpack.c.b16 %v890, %v881
      %v900 = vpack.c.b16 %v891, %v882
      %v901 = vpack.c.b16 %v892, %v883
      %v902 = vpack.c.b16 %v893, %v884
      %v903 = vpack.c.b16 %v894, %v885
      %v904 = vpack.c.b16 %v895, %v886
      %v1058 = vunpack.c.l.b16 %v720
      %v1059 = vunpack.c.l.b16 %v721
      %v1060 = vunpack.c.l.b16 %v722
      %v1061 = vunpack.c.l.b16 %v723
      %v1062 = vunpack.c.l.b16 %v724
      %v1063 = vunpack.c.l.b16 %v725
      %v1064 = vunpack.c.l.b16 %v726
      %v1065 = vunpack.c.l.b16 %v727
      %v1066 = vunpack.c.l.b16 %v728
      %v1067 = vunpack.c.l.b16 %v729
      %v1068 = vunpack.c.l.b16 %v730
      %v1069 = vunpack.c.l.b16 %v731
      %v1070 = vunpack.c.l.b16 %v732
      %v1071 = vunpack.c.l.b16 %v733
      %v1072 = vunpack.c.l.b16 %v734
      %v1073 = vunpack.c.l.b16 %v735
      %v1074 = vunpack.c.l.b16 %v736
      %v1075 = vunpack.c.l.b16 %v737
      %v1076 = vunpack.c.l.b16 %v738
      %v1077 = vunpack.c.l.b16 %v739
      %v1078 = vunpack.c.l.b16 %v740
      %v1079 = vunpack.c.l.b16 %v741
      %v1080 = vunpack.c.l.b16 %v742
      %v1081 = vunpack.c.l.b16 %v743
      %v1082 = vunpack.c.l.b16 %v744
      %v1083 = vunpack.c.l.b16 %v745
      %v1084 = vunpack.c.l.b16 %v746
      %v1085 = vunpack.c.l.b16 %v747
      %v1086 = vunpack.c.l.b16 %v748
      %v1087 = vunpack.c.l.b16 %v749
      %v1088 = vunpack.c.l.b16 %v750
      %v1089 = vunpack.c.l.b16 %v751
      %v1090 = vunpack.c.l.b16 %v752
      %v1091 = vunpack.c.l.b16 %v753
      %v1092 = vunpack.c.l.b16 %v754
      %v1093 = vunpack.c.l.b16 %v755
      %v1094 = vunpack.c.l.b16 %v756
      %v1095 = vunpack.c.l.b16 %v757
      %v1096 = vunpack.c.l.b16 %v758
      %v1097 = vunpack.c.l.b16 %v759
      %v1098 = vunpack.c.l.b16 %v760
      %v1099 = vunpack.c.l.b16 %v761
      %v1100 = vunpack.c.l.b16 %v762
      %v1101 = vunpack.c.l.b16 %v763
      %v1102 = vunpack.c.l.b16 %v764
      %v1103 = vunpack.c.l.b16 %v765
      %v1104 = vunpack.c.l.b16 %v766
      %v1105 = vunpack.c.l.b16 %v767
      %v1106 = vunpack.c.l.b16 %v768
      %v1107 = vunpack.c.l.b16 %v769
      %v1108 = vunpack.c.l.b16 %v770
      %v1109 = vunpack.c.l.b16 %v771
      %v1110 = vunpack.c.l.b16 %v772
      %v1111 = vunpack.c.l.b16 %v773
      %v1112 = vunpack.c.l.b16 %v774
      %v1113 = vunpack.c.l.b16 %v775
      %v1114 = vunpack.c.l.b16 %v776
      %v1115 = vunpack.c.l.b16 %v777
      %v1116 = vunpack.c.l.b16 %v778
      %v1117 = vunpack.c.l.b16 %v779
      %v1118 = vunpack.c.l.b16 %v780
      %v1119 = vunpack.c.l.b16 %v781
      %v1120 = vunpack.c.l.b16 %v782
      %v1121 = vunpack.c.l.b16 %v783
      %v1122 = vunpack.c.l.b16 %v784
      %v1123 = vunpack.c.l.b16 %v785
      %v1124 = vunpack.c.l.b16 %v786
      %v1125 = vunpack.c.l.b16 %v787
      %v1126 = vunpack.c.l.b16 %v788
      %v1127 = vunpack.c.l.b16 %v789
      %v1128 = vunpack.c.l.b16 %v790
      %v1129 = vunpack.c.l.b16 %v791
      %v1130 = vunpack.c.l.b16 %v792
      %v1131 = vunpack.c.l.b16 %v793
      %v1132 = vunpack.c.l.b16 %v794
      %v1133 = vunpack.c.l.b16 %v795
      %v1134 = vunpack.c.l.b16 %v796
      %v1135 = vunpack.c.l.b16 %v797
      %v1136 = vunpack.c.l.b16 %v798
      %v1137 = vunpack.c.l.b16 %v799
      %v1138 = vunpack.c.l.b16 %v800
      %v1139 = vunpack.c.l.b16 %v801
      %v1140 = vunpack.c.l.b16 %v802
      %v1141 = vunpack.c.l.b16 %v803
      %v1142 = vunpack.c.l.b16 %v804
      %v1143 = vunpack.c.l.b16 %v805
      %v1144 = vunpack.c.l.b16 %v806
      %v1145 = vunpack.c.l.b16 %v807
      %v1146 = vunpack.c.l.b16 %v808
      %v1147 = vunpack.c.l.b16 %v809
      %v1148 = vunpack.c.l.b16 %v810
      %v1149 = vunpack.c.l.b16 %v811
      %v1150 = vunpack.c.l.b16 %v812
      %v1151 = vunpack.c.l.b16 %v813
      %v1152 = vunpack.c.l.b16 %v814
      %v1153 = vunpack.c.l.b16 %v815
      %v1154 = vunpack.c.l.b16 %v816
      %v1155 = vunpack.c.l.b16 %v817
      %v1156 = vunpack.c.l.b16 %v818
      %v1157 = vunpack.c.l.b16 %v819
      %v1158 = vunpack.c.l.b16 %v820
      %v1159 = vunpack.c.l.b16 %v821
      %v1160 = vunpack.c.l.b16 %v822
      %v1161 = vunpack.c.l.b16 %v823
      %v1162 = vunpack.c.l.b16 %v824
      %v1163 = vunpack.c.l.b16 %v825
      %v1164 = vunpack.c.l.b16 %v826
      %v1165 = vunpack.c.l.b16 %v827
      %v1166 = vunpack.c.l.b16 %v828
      %v1167 = vunpack.c.l.b16 %v829
      %v1168 = vunpack.c.l.b16 %v830
      %v1169 = vunpack.c.l.b16 %v831
      %v1170 = vunpack.c.l.b16 %v832
      %v1171 = vunpack.c.l.b16 %v833
      %v1172 = vunpack.c.l.b16 %v834
      %v1173 = vunpack.c.l.b16 %v835
      %v1174 = vunpack.c.l.b16 %v836
      %v1175 = vunpack.c.l.b16 %v837
      %v1176 = vunpack.c.l.b16 %v838
      %v1177 = vunpack.c.l.b16 %v839
      %v1178 = vunpack.c.l.b16 %v840
      %v1179 = vunpack.c.l.b16 %v841
      %v1180 = vunpack.c.l.b16 %v842
      %v1181 = vunpack.c.l.b16 %v843
      %v1182 = vunpack.c.l.b16 %v844
      %v1183 = vunpack.c.l.b16 %v845
      %v1184 = vunpack.c.l.b16 %v846
      %v1185 = vunpack.c.l.b16 %v847
      %v1186 = vunpack.c.l.b16 %v848
      %v1187 = vunpack.c.l.b16 %v849
      %v1188 = vunpack.c.l.b16 %v850
      %v1189 = vunpack.c.l.b16 %v851
      %v1190 = vunpack.c.l.b16 %v852
      %v1191 = vunpack.c.l.b16 %v853
      %v1192 = vunpack.c.l.b16 %v854
      %v1193 = vunpack.c.l.b16 %v855
      %v1194 = vunpack.c.l.b16 %v856
      %v1195 = vunpack.c.l.b16 %v857
      %v1196 = vunpack.c.l.b16 %v858
      %v1197 = vunpack.c.l.b16 %v859
      %v1198 = vunpack.c.l.b16 %v860
      %v1199 = vunpack.c.l.b16 %v861
      %v1200 = vunpack.c.l.b16 %v862
      %v1201 = vunpack.c.l.b16 %v863
      %v1202 = vpack.c.b16 %v1059, %v1058
      %v1203 = vpack.c.b16 %v1061, %v1060
      %v1204 = vpack.c.b16 %v1063, %v1062
      %v1205 = vpack.c.b16 %v1065, %v1064
      %v1206 = vpack.c.b16 %v1067, %v1066
      %v1207 = vpack.c.b16 %v1069, %v1068
      %v1208 = vpack.c.b16 %v1071, %v1070
      %v1209 = vpack.c.b16 %v1073, %v1072
      %v1210 = vpack.c.b16 %v1075, %v1074
      %v1211 = vpack.c.b16 %v1077, %v1076
      %v1212 = vpack.c.b16 %v1079, %v1078
      %v1213 = vpack.c.b16 %v1081, %v1080
      %v1214 = vpack.c.b16 %v1083, %v1082
      %v1215 = vpack.c.b16 %v1085, %v1084
      %v1216 = vpack.c.b16 %v1087, %v1086
      %v1217 = vpack.c.b16 %v1089, %v1088
      %v1218 = vpack.c.b16 %v1091, %v1090
      %v1219 = vpack.c.b16 %v1093, %v1092
      %v1220 = vpack.c.b16 %v1095, %v1094
      %v1221 = vpack.c.b16 %v1097, %v1096
      %v1222 = vpack.c.b16 %v1099, %v1098
      %v1223 = vpack.c.b16 %v1101, %v1100
      %v1224 = vpack.c.b16 %v1103, %v1102
      %v1225 = vpack.c.b16 %v1105, %v1104
      %v1226 = vpack.c.b16 %v1107, %v1106
      %v1227 = vpack.c.b16 %v1109, %v1108
      %v1228 = vpack.c.b16 %v1111, %v1110
      %v1229 = vpack.c.b16 %v1113, %v1112
      %v1230 = vpack.c.b16 %v1115, %v1114
      %v1231 = vpack.c.b16 %v1117, %v1116
      %v1232 = vpack.c.b16 %v1119, %v1118
      %v1233 = vpack.c.b16 %v1121, %v1120
      %v1234 = vpack.c.b16 %v1123, %v1122
      %v1235 = vpack.c.b16 %v1125, %v1124
      %v1236 = vpack.c.b16 %v1127, %v1126
      %v1237 = vpack.c.b16 %v1129, %v1128
      %v1238 = vpack.c.b16 %v1131, %v1130
      %v1239 = vpack.c.b16 %v1133, %v1132
      %v1240 = vpack.c.b16 %v1135, %v1134
      %v1241 = vpack.c.b16 %v1137, %v1136
      %v1242 = vpack.c.b16 %v1139, %v1138
      %v1243 = vpack.c.b16 %v1141, %v1140
      %v1244 = vpack.c.b16 %v1143, %v1142
      %v1245 = vpack.c.b16 %v1145, %v1144
      %v1246 = vpack.c.b16 %v1147, %v1146
      %v1247 = vpack.c.b16 %v1149, %v1148
      %v1248 = vpack.c.b16 %v1151, %v1150
      %v1249 = vpack.c.b16 %v1153, %v1152
      %v1250 = vpack.c.b16 %v1155, %v1154
      %v1251 = vpack.c.b16 %v1157, %v1156
      %v1252 = vpack.c.b16 %v1159, %v1158
      %v1253 = vpack.c.b16 %v1161, %v1160
      %v1254 = vpack.c.b16 %v1163, %v1162
      %v1255 = vpack.c.b16 %v1165, %v1164
      %v1256 = vpack.c.b16 %v1167, %v1166
      %v1257 = vpack.c.b16 %v1169, %v1168
      %v1258 = vpack.c.b16 %v1171, %v1170
      %v1259 = vpack.c.b16 %v1173, %v1172
      %v1260 = vpack.c.b16 %v1175, %v1174
      %v1261 = vpack.c.b16 %v1177, %v1176
      %v1262 = vpack.c.b16 %v1179, %v1178
      %v1263 = vpack.c.b16 %v1181, %v1180
      %v1264 = vpack.c.b16 %v1183, %v1182
      %v1265 = vpack.c.b16 %v1185, %v1184
      %v1266 = vpack.c.b16 %v1187, %v1186
      %v1267 = vpack.c.b16 %v1189, %v1188
      %v1268 = vpack.c.b16 %v1191, %v1190
      %v1269 = vpack.c.b16 %v1193, %v1192
      %v1270 = vpack.c.b16 %v1195, %v1194
      %v1271 = vpack.c.b16 %v1197, %v1196
      %v1272 = vpack.c.b16 %v1199, %v1198
      %v1273 = vpack.c.b16 %v1201, %v1200
      %1346 = vmatpush.bf16.msra.mxu0 %v1209
      %1347 = vmatpush.bf16.msra.mxu0 %v1208
      %1348 = vmatpush.bf16.msra.mxu0 %v1207
      %1349 = vmatpush.bf16.msra.mxu0 %v1206
      %1350 = vmatpush.bf16.msra.mxu0 %v1205
      %1351 = vmatpush.bf16.msra.mxu0 %v1204
      %1352 = vmatpush.bf16.msra.mxu0 %v1203
      %1353 = vmatpush.bf16.msra.mxu0 %v1202
      %1354 = vmatmul.bf16.gmra.mxu0 %v896
      %v1355 = vpop.f32.mrf.mxu0
      %v1356 = vadd.f32 %v866, %v1355
      %v1357 = vpop.f32.mrf.mxu0
      %v1358 = vadd.f32 %v866, %v1357
      %1359 = vdwg.mxu0
      %1360 = vmatpush.bf16.msra.mxu0 %v1217
      %1361 = vmatpush.bf16.msra.mxu0 %v1216
      %1362 = vmatpush.bf16.msra.mxu0 %v1215
      %1363 = vmatpush.bf16.msra.mxu0 %v1214
      %1364 = vmatpush.bf16.msra.mxu0 %v1213
      %1365 = vmatpush.bf16.msra.mxu0 %v1212
      %1366 = vmatpush.bf16.msra.mxu0 %v1211
      %1367 = vmatpush.bf16.msra.mxu0 %v1210
      %1368 = vmatmul.bf16.gmra.mxu0 %v897
      %v1369 = vpop.f32.mrf.mxu0
      %v1370 = vadd.f32 %v1356, %v1369
      %v1371 = vpop.f32.mrf.mxu0
      %v1372 = vadd.f32 %v1358, %v1371
      %1373 = vdwg.mxu0
      %1374 = vmatpush.bf16.msra.mxu0 %v1225
      %1375 = vmatpush.bf16.msra.mxu0 %v1224
      %1376 = vmatpush.bf16.msra.mxu0 %v1223
      %1377 = vmatpush.bf16.msra.mxu0 %v1222
      %1378 = vmatpush.bf16.msra.mxu0 %v1221
      %1379 = vmatpush.bf16.msra.mxu0 %v1220
      %1380 = vmatpush.bf16.msra.mxu0 %v1219
      %1381 = vmatpush.bf16.msra.mxu0 %v1218
      %1382 = vmatmul.bf16.gmra.mxu0 %v898
      %v1383 = vpop.f32.mrf.mxu0
      %v1384 = vadd.f32 %v1370, %v1383
      %v1385 = vpop.f32.mrf.mxu0
      %v1386 = vadd.f32 %v1372, %v1385
      %1387 = vdwg.mxu0
      %1388 = vmatpush.bf16.msra.mxu0 %v1233
      %1389 = vmatpush.bf16.msra.mxu0 %v1232
      %1390 = vmatpush.bf16.msra.mxu0 %v1231
      %1391 = vmatpush.bf16.msra.mxu0 %v1230
      %1392 = vmatpush.bf16.msra.mxu0 %v1229
      %1393 = vmatpush.bf16.msra.mxu0 %v1228
      %1394 = vmatpush.bf16.msra.mxu0 %v1227
      %1395 = vmatpush.bf16.msra.mxu0 %v1226
      %1396 = vmatmul.bf16.gmra.mxu0 %v899
      %v1397 = vpop.f32.mrf.mxu0
      %v1398 = vadd.f32 %v1384, %v1397
      %v1399 = vpop.f32.mrf.mxu0
      %v1400 = vadd.f32 %v1386, %v1399
      %1401 = vdwg.mxu0
      %1402 = vmatpush.bf16.msra.mxu0 %v1241
      %1403 = vmatpush.bf16.msra.mxu0 %v1240
      %1404 = vmatpush.bf16.msra.mxu0 %v1239
      %1405 = vmatpush.bf16.msra.mxu0 %v1238
      %1406 = vmatpush.bf16.msra.mxu0 %v1237
      %1407 = vmatpush.bf16.msra.mxu0 %v1236
      %1408 = vmatpush.bf16.msra.mxu0 %v1235
      %1409 = vmatpush.bf16.msra.mxu0 %v1234
      %1410 = vmatmul.bf16.gmra.mxu0 %v900
      %v1411 = vpop.f32.mrf.mxu0
      %v1412 = vadd.f32 %v1398, %v1411
      %v1413 = vpop.f32.mrf.mxu0
      %v1414 = vadd.f32 %v1400, %v1413
      %1415 = vdwg.mxu0
      %1416 = vmatpush.bf16.msra.mxu0 %v1249
      %1417 = vmatpush.bf16.msra.mxu0 %v1248
      %1418 = vmatpush.bf16.msra.mxu0 %v1247
      %1419 = vmatpush.bf16.msra.mxu0 %v1246
      %1420 = vmatpush.bf16.msra.mxu0 %v1245
      %1421 = vmatpush.bf16.msra.mxu0 %v1244
      %1422 = vmatpush.bf16.msra.mxu0 %v1243
      %1423 = vmatpush.bf16.msra.mxu0 %v1242
      %1424 = vmatmul.bf16.gmra.mxu0 %v901
      %v1425 = vpop.f32.mrf.mxu0
      %v1426 = vadd.f32 %v1412, %v1425
      %v1427 = vpop.f32.mrf.mxu0
      %v1428 = vadd.f32 %v1414, %v1427
      %1429 = vdwg.mxu0
      %1430 = vmatpush.bf16.msra.mxu0 %v1257
      %1431 = vmatpush.bf16.msra.mxu0 %v1256
      %1432 = vmatpush.bf16.msra.mxu0 %v1255
      %1433 = vmatpush.bf16.msra.mxu0 %v1254
      %1434 = vmatpush.bf16.msra.mxu0 %v1253
      %1435 = vmatpush.bf16.msra.mxu0 %v1252
      %1436 = vmatpush.bf16.msra.mxu0 %v1251
      %1437 = vmatpush.bf16.msra.mxu0 %v1250
      %1438 = vmatmul.bf16.gmra.mxu0 %v902
      %v1439 = vpop.f32.mrf.mxu0
      %v1440 = vadd.f32 %v1426, %v1439
      %v1441 = vpop.f32.mrf.mxu0
      %v1442 = vadd.f32 %v1428, %v1441
      %1443 = vdwg.mxu0
      %1444 = vmatpush.bf16.msra.mxu0 %v1265
      %1445 = vmatpush.bf16.msra.mxu0 %v1264
      %1446 = vmatpush.bf16.msra.mxu0 %v1263
      %1447 = vmatpush.bf16.msra.mxu0 %v1262
      %1448 = vmatpush.bf16.msra.mxu0 %v1261
      %1449 = vmatpush.bf16.msra.mxu0 %v1260
      %1450 = vmatpush.bf16.msra.mxu0 %v1259
      %1451 = vmatpush.bf16.msra.mxu0 %v1258
      %1452 = vmatmul.bf16.gmra.mxu0 %v903
      %v1453 = vpop.f32.mrf.mxu0
      %v1454 = vadd.f32 %v1440, %v1453
      %v1455 = vpop.f32.mrf.mxu0
      %v1456 = vadd.f32 %v1442, %v1455
      %1457 = vdwg.mxu0
      %1458 = vmatpush.bf16.msra.mxu0 %v1273
      %1459 = vmatpush.bf16.msra.mxu0 %v1272
      %1460 = vmatpush.bf16.msra.mxu0 %v1271
      %1461 = vmatpush.bf16.msra.mxu0 %v1270
      %1462 = vmatpush.bf16.msra.mxu0 %v1269
      %1463 = vmatpush.bf16.msra.mxu0 %v1268
      %1464 = vmatpush.bf16.msra.mxu0 %v1267
      %1465 = vmatpush.bf16.msra.mxu0 %v1266
      %1466 = vmatmul.bf16.gmra.mxu0 %v904
      %v1467 = vpop.f32.mrf.mxu0
      %v1468 = vadd.f32 %v1454, %v1467
      %v1469 = vpop.f32.mrf.mxu0
      %v1470 = vadd.f32 %v1456, %v1469
      %1471 = vdwg.mxu0
      %v1472 = vmax.f32 %v1468, 0.0
      %v1473 = vmax.f32 %v1470, 0.0
      %v1474 = vpack.c.bf16 %v1472, %v1472
      %v1475 = vpack.c.bf16 %v1473, %v1473
      %1476 = vst.msk [vmem:[%s599] sm:$0xf] %vm707, %v1474
      %1477 = vst.msk [vmem:[%s599 + $0x4] sm:$0xf] %vm707, %v1475
      %v1478 = vld [vmem:[%s580] sm:$0xff]
      %v1479 = vld [vmem:[%s580 + $0x8] sm:$0xff]
      %v1480 = vld [vmem:[%s580 + $0x10] sm:$0xff]
      %v1481 = vld [vmem:[%s580 + $0x18] sm:$0xff]
      %v1482 = vld [vmem:[%s580 + $0x20] sm:$0xf]
      %v1483 = vld [vmem:[%s580 + $0x24] sm:$0xff]
      %v1484 = vld [vmem:[%s580 + $0x2c] sm:$0xff]
      %v1485 = vld [vmem:[%s580 + $0x34] sm:$0xff]
      %v1486 = vld [vmem:[%s580 + $0x3c] sm:$0xff]
      %v1487 = vld [vmem:[%s580 + $0x44] sm:$0xf]
      %v1488 = vld [vmem:[%s7] sm:$0xf]
      %v1489 = vld [vmem:[%s7 + $0x4] sm:$0xf]
      %v1490 = vld [vmem:[%s7 + $0x8] sm:$0xf]
      %v1491 = vld [vmem:[%s7 + $0xc] sm:$0xf]
      %v1492 = vld [vmem:[%s7 + $0x10] sm:$0xf]
      %v1493 = vld [vmem:[%s7 + $0x14] sm:$0xf]
      %v1494 = vld [vmem:[%s7 + $0x18] sm:$0xf]
      %v1495 = vld [vmem:[%s7 + $0x1c] sm:$0xf]
      %v1496 = vld [vmem:[%s7 + $0x20] sm:$0xf]
      %v1497 = vld [vmem:[%s7 + $0x24] sm:$0xf]
      %v1498 = vld [vmem:[%s7 + $0x28] sm:$0xf]
      %v1499 = vld [vmem:[%s7 + $0x2c] sm:$0xf]
      %v1500 = vld [vmem:[%s7 + $0x30] sm:$0xf]
      %v1501 = vld [vmem:[%s7 + $0x34] sm:$0xf]
      %v1502 = vld [vmem:[%s7 + $0x38] sm:$0xf]
      %v1503 = vld [vmem:[%s7 + $0x3c] sm:$0xf]
      %v1504 = vld [vmem:[%s7 + $0x40] sm:$0xf]
      %v1505 = vld [vmem:[%s7 + $0x44] sm:$0xf]
      %v1506 = vld [vmem:[%s7 + $0x48] sm:$0xf]
      %v1507 = vld [vmem:[%s7 + $0x4c] sm:$0xf]
      %v1508 = vld [vmem:[%s7 + $0x50] sm:$0xf]
      %v1509 = vld [vmem:[%s7 + $0x54] sm:$0xf]
      %v1510 = vld [vmem:[%s7 + $0x58] sm:$0xf]
      %v1511 = vld [vmem:[%s7 + $0x5c] sm:$0xf]
      %v1512 = vld [vmem:[%s7 + $0x60] sm:$0xf]
      %v1513 = vld [vmem:[%s7 + $0x64] sm:$0xf]
      %v1514 = vld [vmem:[%s7 + $0x68] sm:$0xf]
      %v1515 = vld [vmem:[%s7 + $0x6c] sm:$0xf]
      %v1516 = vld [vmem:[%s7 + $0x70] sm:$0xf]
      %v1517 = vld [vmem:[%s7 + $0x74] sm:$0xf]
      %v1518 = vld [vmem:[%s7 + $0x78] sm:$0xf]
      %v1519 = vld [vmem:[%s7 + $0x7c] sm:$0xf]
      %v1520 = vld [vmem:[%s7 + $0x80] sm:$0xf]
      %v1521 = vld [vmem:[%s7 + $0x84] sm:$0xf]
      %v1522 = vld [vmem:[%s7 + $0x88] sm:$0xf]
      %v1523 = vld [vmem:[%s7 + $0x8c] sm:$0xf]
      %v1524 = vld [vmem:[%s7 + $0x90] sm:$0xf]
      %v1525 = vld [vmem:[%s7 + $0x94] sm:$0xf]
      %v1526 = vld [vmem:[%s7 + $0x98] sm:$0xf]
      %v1527 = vld [vmem:[%s7 + $0x9c] sm:$0xf]
      %v1528 = vld [vmem:[%s7 + $0xa0] sm:$0xf]
      %v1529 = vld [vmem:[%s7 + $0xa4] sm:$0xf]
      %v1530 = vld [vmem:[%s7 + $0xa8] sm:$0xf]
      %v1531 = vld [vmem:[%s7 + $0xac] sm:$0xf]
      %v1532 = vld [vmem:[%s7 + $0xb0] sm:$0xf]
      %v1533 = vld [vmem:[%s7 + $0xb4] sm:$0xf]
      %v1534 = vld [vmem:[%s7 + $0xb8] sm:$0xf]
      %v1535 = vld [vmem:[%s7 + $0xbc] sm:$0xf]
      %v1536 = vld [vmem:[%s7 + $0xc0] sm:$0xf]
      %v1537 = vld [vmem:[%s7 + $0xc4] sm:$0xf]
      %v1538 = vld [vmem:[%s7 + $0xc8] sm:$0xf]
      %v1539 = vld [vmem:[%s7 + $0xcc] sm:$0xf]
      %v1540 = vld [vmem:[%s7 + $0xd0] sm:$0xf]
      %v1541 = vld [vmem:[%s7 + $0xd4] sm:$0xf]
      %v1542 = vld [vmem:[%s7 + $0xd8] sm:$0xf]
      %v1543 = vld [vmem:[%s7 + $0xdc] sm:$0xf]
      %v1544 = vld [vmem:[%s7 + $0xe0] sm:$0xf]
      %v1545 = vld [vmem:[%s7 + $0xe4] sm:$0xf]
      %v1546 = vld [vmem:[%s7 + $0xe8] sm:$0xf]
      %v1547 = vld [vmem:[%s7 + $0xec] sm:$0xf]
      %v1548 = vld [vmem:[%s7 + $0xf0] sm:$0xf]
      %v1549 = vld [vmem:[%s7 + $0xf4] sm:$0xf]
      %v1550 = vld [vmem:[%s7 + $0xf8] sm:$0xf]
      %v1551 = vld [vmem:[%s7 + $0xfc] sm:$0xf]
      %v1552 = vld [vmem:[%s7 + $0x100] sm:$0xf]
      %v1553 = vld [vmem:[%s7 + $0x104] sm:$0xf]
      %v1554 = vld [vmem:[%s7 + $0x108] sm:$0xf]
      %v1555 = vld [vmem:[%s7 + $0x10c] sm:$0xf]
      %v1556 = vld [vmem:[%s7 + $0x110] sm:$0xf]
      %v1557 = vld [vmem:[%s7 + $0x114] sm:$0xf]
      %v1558 = vld [vmem:[%s7 + $0x118] sm:$0xf]
      %v1559 = vld [vmem:[%s7 + $0x11c] sm:$0xf]
      %v1560 = vld [vmem:[%s7 + $0x120] sm:$0xf]
      %v1561 = vld [vmem:[%s7 + $0x124] sm:$0xf]
      %v1562 = vld [vmem:[%s7 + $0x128] sm:$0xf]
      %v1563 = vld [vmem:[%s7 + $0x12c] sm:$0xf]
      %v1564 = vld [vmem:[%s7 + $0x130] sm:$0xf]
      %v1565 = vld [vmem:[%s7 + $0x134] sm:$0xf]
      %v1566 = vld [vmem:[%s7 + $0x138] sm:$0xf]
      %v1567 = vld [vmem:[%s7 + $0x13c] sm:$0xf]
      %v1568 = vld [vmem:[%s7 + $0x140] sm:$0xf]
      %v1569 = vld [vmem:[%s7 + $0x144] sm:$0xf]
      %v1570 = vld [vmem:[%s7 + $0x148] sm:$0xf]
      %v1571 = vld [vmem:[%s7 + $0x14c] sm:$0xf]
      %v1572 = vld [vmem:[%s7 + $0x150] sm:$0xf]
      %v1573 = vld [vmem:[%s7 + $0x154] sm:$0xf]
      %v1574 = vld [vmem:[%s7 + $0x158] sm:$0xf]
      %v1575 = vld [vmem:[%s7 + $0x15c] sm:$0xf]
      %v1576 = vld [vmem:[%s7 + $0x160] sm:$0xf]
      %v1577 = vld [vmem:[%s7 + $0x164] sm:$0xf]
      %v1578 = vld [vmem:[%s7 + $0x168] sm:$0xf]
      %v1579 = vld [vmem:[%s7 + $0x16c] sm:$0xf]
      %v1580 = vld [vmem:[%s7 + $0x170] sm:$0xf]
      %v1581 = vld [vmem:[%s7 + $0x174] sm:$0xf]
      %v1582 = vld [vmem:[%s7 + $0x178] sm:$0xf]
      %v1583 = vld [vmem:[%s7 + $0x17c] sm:$0xf]
      %v1584 = vld [vmem:[%s7 + $0x180] sm:$0xf]
      %v1585 = vld [vmem:[%s7 + $0x184] sm:$0xf]
      %v1586 = vld [vmem:[%s7 + $0x188] sm:$0xf]
      %v1587 = vld [vmem:[%s7 + $0x18c] sm:$0xf]
      %v1588 = vld [vmem:[%s7 + $0x190] sm:$0xf]
      %v1589 = vld [vmem:[%s7 + $0x194] sm:$0xf]
      %v1590 = vld [vmem:[%s7 + $0x198] sm:$0xf]
      %v1591 = vld [vmem:[%s7 + $0x19c] sm:$0xf]
      %v1592 = vld [vmem:[%s7 + $0x1a0] sm:$0xf]
      %v1593 = vld [vmem:[%s7 + $0x1a4] sm:$0xf]
      %v1594 = vld [vmem:[%s7 + $0x1a8] sm:$0xf]
      %v1595 = vld [vmem:[%s7 + $0x1ac] sm:$0xf]
      %v1596 = vld [vmem:[%s7 + $0x1b0] sm:$0xf]
      %v1597 = vld [vmem:[%s7 + $0x1b4] sm:$0xf]
      %v1598 = vld [vmem:[%s7 + $0x1b8] sm:$0xf]
      %v1599 = vld [vmem:[%s7 + $0x1bc] sm:$0xf]
      %v1600 = vld [vmem:[%s7 + $0x1c0] sm:$0xf]
      %v1601 = vld [vmem:[%s7 + $0x1c4] sm:$0xf]
      %v1602 = vld [vmem:[%s7 + $0x1c8] sm:$0xf]
      %v1603 = vld [vmem:[%s7 + $0x1cc] sm:$0xf]
      %v1604 = vld [vmem:[%s7 + $0x1d0] sm:$0xf]
      %v1605 = vld [vmem:[%s7 + $0x1d4] sm:$0xf]
      %v1606 = vld [vmem:[%s7 + $0x1d8] sm:$0xf]
      %v1607 = vld [vmem:[%s7 + $0x1dc] sm:$0xf]
      %v1608 = vld [vmem:[%s7 + $0x1e0] sm:$0xf]
      %v1609 = vld [vmem:[%s7 + $0x1e4] sm:$0xf]
      %v1610 = vld [vmem:[%s7 + $0x1e8] sm:$0xf]
      %v1611 = vld [vmem:[%s7 + $0x1ec] sm:$0xf]
      %v1612 = vld [vmem:[%s7 + $0x1f0] sm:$0xf]
      %v1613 = vld [vmem:[%s7 + $0x1f4] sm:$0xf]
      %v1614 = vld [vmem:[%s7 + $0x1f8] sm:$0xf]
      %v1615 = vld [vmem:[%s7 + $0x1fc] sm:$0xf]
      %v1616 = vld [vmem:[%s7 + $0x200] sm:$0xf]
      %v1617 = vld [vmem:[%s7 + $0x204] sm:$0xf]
      %v1618 = vld [vmem:[%s7 + $0x208] sm:$0xf]
      %v1619 = vld [vmem:[%s7 + $0x20c] sm:$0xf]
      %v1620 = vld [vmem:[%s7 + $0x210] sm:$0xf]
      %v1621 = vld [vmem:[%s7 + $0x214] sm:$0xf]
      %v1622 = vld [vmem:[%s7 + $0x218] sm:$0xf]
      %v1623 = vld [vmem:[%s7 + $0x21c] sm:$0xf]
      %v1624 = vld [vmem:[%s7 + $0x220] sm:$0xf]
      %v1625 = vld [vmem:[%s7 + $0x224] sm:$0xf]
      %v1626 = vld [vmem:[%s7 + $0x228] sm:$0xf]
      %v1627 = vld [vmem:[%s7 + $0x22c] sm:$0xf]
      %v1628 = vld [vmem:[%s7 + $0x230] sm:$0xf]
      %v1629 = vld [vmem:[%s7 + $0x234] sm:$0xf]
      %v1630 = vld [vmem:[%s7 + $0x238] sm:$0xf]
      %v1631 = vld [vmem:[%s7 + $0x23c] sm:$0xf]
      %v1632 = vld [vmem:[%s8] sm:$0x1]
      %v1634 = vperm.slane %v1632, 0
      %v1646 = vunpack.c.l.b16 %v1478
      %v1647 = vunpack.c.h.b16 %v1478
      %v1648 = vunpack.c.l.b16 %v1479
      %v1649 = vunpack.c.h.b16 %v1479
      %v1650 = vunpack.c.l.b16 %v1480
      %v1651 = vunpack.c.h.b16 %v1480
      %v1652 = vunpack.c.l.b16 %v1481
      %v1653 = vunpack.c.h.b16 %v1481
      %v1654 = vunpack.c.l.b16 %v1482
      %v1655 = vunpack.c.l.b16 %v1483
      %v1656 = vunpack.c.h.b16 %v1483
      %v1657 = vunpack.c.l.b16 %v1484
      %v1658 = vunpack.c.h.b16 %v1484
      %v1659 = vunpack.c.l.b16 %v1485
      %v1660 = vunpack.c.h.b16 %v1485
      %v1661 = vunpack.c.l.b16 %v1486
      %v1662 = vunpack.c.h.b16 %v1486
      %v1663 = vunpack.c.l.b16 %v1487
      %v1664 = vpack.c.b16 %v1655, %v1646
      %v1665 = vpack.c.b16 %v1656, %v1647
      %v1666 = vpack.c.b16 %v1657, %v1648
      %v1667 = vpack.c.b16 %v1658, %v1649
      %v1668 = vpack.c.b16 %v1659, %v1650
      %v1669 = vpack.c.b16 %v1660, %v1651
      %v1670 = vpack.c.b16 %v1661, %v1652
      %v1671 = vpack.c.b16 %v1662, %v1653
      %v1672 = vpack.c.b16 %v1663, %v1654
      %v1826 = vunpack.c.l.b16 %v1488
      %v1827 = vunpack.c.l.b16 %v1489
      %v1828 = vunpack.c.l.b16 %v1490
      %v1829 = vunpack.c.l.b16 %v1491
      %v1830 = vunpack.c.l.b16 %v1492
      %v1831 = vunpack.c.l.b16 %v1493
      %v1832 = vunpack.c.l.b16 %v1494
      %v1833 = vunpack.c.l.b16 %v1495
      %v1834 = vunpack.c.l.b16 %v1496
      %v1835 = vunpack.c.l.b16 %v1497
      %v1836 = vunpack.c.l.b16 %v1498
      %v1837 = vunpack.c.l.b16 %v1499
      %v1838 = vunpack.c.l.b16 %v1500
      %v1839 = vunpack.c.l.b16 %v1501
      %v1840 = vunpack.c.l.b16 %v1502
      %v1841 = vunpack.c.l.b16 %v1503
      %v1842 = vunpack.c.l.b16 %v1504
      %v1843 = vunpack.c.l.b16 %v1505
      %v1844 = vunpack.c.l.b16 %v1506
      %v1845 = vunpack.c.l.b16 %v1507
      %v1846 = vunpack.c.l.b16 %v1508
      %v1847 = vunpack.c.l.b16 %v1509
      %v1848 = vunpack.c.l.b16 %v1510
      %v1849 = vunpack.c.l.b16 %v1511
      %v1850 = vunpack.c.l.b16 %v1512
      %v1851 = vunpack.c.l.b16 %v1513
      %v1852 = vunpack.c.l.b16 %v1514
      %v1853 = vunpack.c.l.b16 %v1515
      %v1854 = vunpack.c.l.b16 %v1516
      %v1855 = vunpack.c.l.b16 %v1517
      %v1856 = vunpack.c.l.b16 %v1518
      %v1857 = vunpack.c.l.b16 %v1519
      %v1858 = vunpack.c.l.b16 %v1520
      %v1859 = vunpack.c.l.b16 %v1521
      %v1860 = vunpack.c.l.b16 %v1522
      %v1861 = vunpack.c.l.b16 %v1523
      %v1862 = vunpack.c.l.b16 %v1524
      %v1863 = vunpack.c.l.b16 %v1525
      %v1864 = vunpack.c.l.b16 %v1526
      %v1865 = vunpack.c.l.b16 %v1527
      %v1866 = vunpack.c.l.b16 %v1528
      %v1867 = vunpack.c.l.b16 %v1529
      %v1868 = vunpack.c.l.b16 %v1530
      %v1869 = vunpack.c.l.b16 %v1531
      %v1870 = vunpack.c.l.b16 %v1532
      %v1871 = vunpack.c.l.b16 %v1533
      %v1872 = vunpack.c.l.b16 %v1534
      %v1873 = vunpack.c.l.b16 %v1535
      %v1874 = vunpack.c.l.b16 %v1536
      %v1875 = vunpack.c.l.b16 %v1537
      %v1876 = vunpack.c.l.b16 %v1538
      %v1877 = vunpack.c.l.b16 %v1539
      %v1878 = vunpack.c.l.b16 %v1540
      %v1879 = vunpack.c.l.b16 %v1541
      %v1880 = vunpack.c.l.b16 %v1542
      %v1881 = vunpack.c.l.b16 %v1543
      %v1882 = vunpack.c.l.b16 %v1544
      %v1883 = vunpack.c.l.b16 %v1545
      %v1884 = vunpack.c.l.b16 %v1546
      %v1885 = vunpack.c.l.b16 %v1547
      %v1886 = vunpack.c.l.b16 %v1548
      %v1887 = vunpack.c.l.b16 %v1549
      %v1888 = vunpack.c.l.b16 %v1550
      %v1889 = vunpack.c.l.b16 %v1551
      %v1890 = vunpack.c.l.b16 %v1552
      %v1891 = vunpack.c.l.b16 %v1553
      %v1892 = vunpack.c.l.b16 %v1554
      %v1893 = vunpack.c.l.b16 %v1555
      %v1894 = vunpack.c.l.b16 %v1556
      %v1895 = vunpack.c.l.b16 %v1557
      %v1896 = vunpack.c.l.b16 %v1558
      %v1897 = vunpack.c.l.b16 %v1559
      %v1898 = vunpack.c.l.b16 %v1560
      %v1899 = vunpack.c.l.b16 %v1561
      %v1900 = vunpack.c.l.b16 %v1562
      %v1901 = vunpack.c.l.b16 %v1563
      %v1902 = vunpack.c.l.b16 %v1564
      %v1903 = vunpack.c.l.b16 %v1565
      %v1904 = vunpack.c.l.b16 %v1566
      %v1905 = vunpack.c.l.b16 %v1567
      %v1906 = vunpack.c.l.b16 %v1568
      %v1907 = vunpack.c.l.b16 %v1569
      %v1908 = vunpack.c.l.b16 %v1570
      %v1909 = vunpack.c.l.b16 %v1571
      %v1910 = vunpack.c.l.b16 %v1572
      %v1911 = vunpack.c.l.b16 %v1573
      %v1912 = vunpack.c.l.b16 %v1574
      %v1913 = vunpack.c.l.b16 %v1575
      %v1914 = vunpack.c.l.b16 %v1576
      %v1915 = vunpack.c.l.b16 %v1577
      %v1916 = vunpack.c.l.b16 %v1578
      %v1917 = vunpack.c.l.b16 %v1579
      %v1918 = vunpack.c.l.b16 %v1580
      %v1919 = vunpack.c.l.b16 %v1581
      %v1920 = vunpack.c.l.b16 %v1582
      %v1921 = vunpack.c.l.b16 %v1583
      %v1922 = vunpack.c.l.b16 %v1584
      %v1923 = vunpack.c.l.b16 %v1585
      %v1924 = vunpack.c.l.b16 %v1586
      %v1925 = vunpack.c.l.b16 %v1587
      %v1926 = vunpack.c.l.b16 %v1588
      %v1927 = vunpack.c.l.b16 %v1589
      %v1928 = vunpack.c.l.b16 %v1590
      %v1929 = vunpack.c.l.b16 %v1591
      %v1930 = vunpack.c.l.b16 %v1592
      %v1931 = vunpack.c.l.b16 %v1593
      %v1932 = vunpack.c.l.b16 %v1594
      %v1933 = vunpack.c.l.b16 %v1595
      %v1934 = vunpack.c.l.b16 %v1596
      %v1935 = vunpack.c.l.b16 %v1597
      %v1936 = vunpack.c.l.b16 %v1598
      %v1937 = vunpack.c.l.b16 %v1599
      %v1938 = vunpack.c.l.b16 %v1600
      %v1939 = vunpack.c.l.b16 %v1601
      %v1940 = vunpack.c.l.b16 %v1602
      %v1941 = vunpack.c.l.b16 %v1603
      %v1942 = vunpack.c.l.b16 %v1604
      %v1943 = vunpack.c.l.b16 %v1605
      %v1944 = vunpack.c.l.b16 %v1606
      %v1945 = vunpack.c.l.b16 %v1607
      %v1946 = vunpack.c.l.b16 %v1608
      %v1947 = vunpack.c.l.b16 %v1609
      %v1948 = vunpack.c.l.b16 %v1610
      %v1949 = vunpack.c.l.b16 %v1611
      %v1950 = vunpack.c.l.b16 %v1612
      %v1951 = vunpack.c.l.b16 %v1613
      %v1952 = vunpack.c.l.b16 %v1614
      %v1953 = vunpack.c.l.b16 %v1615
      %v1954 = vunpack.c.l.b16 %v1616
      %v1955 = vunpack.c.l.b16 %v1617
      %v1956 = vunpack.c.l.b16 %v1618
      %v1957 = vunpack.c.l.b16 %v1619
      %v1958 = vunpack.c.l.b16 %v1620
      %v1959 = vunpack.c.l.b16 %v1621
      %v1960 = vunpack.c.l.b16 %v1622
      %v1961 = vunpack.c.l.b16 %v1623
      %v1962 = vunpack.c.l.b16 %v1624
      %v1963 = vunpack.c.l.b16 %v1625
      %v1964 = vunpack.c.l.b16 %v1626
      %v1965 = vunpack.c.l.b16 %v1627
      %v1966 = vunpack.c.l.b16 %v1628
      %v1967 = vunpack.c.l.b16 %v1629
      %v1968 = vunpack.c.l.b16 %v1630
      %v1969 = vunpack.c.l.b16 %v1631
      %v1970 = vpack.c.b16 %v1827, %v1826
      %v1971 = vpack.c.b16 %v1829, %v1828
      %v1972 = vpack.c.b16 %v1831, %v1830
      %v1973 = vpack.c.b16 %v1833, %v1832
      %v1974 = vpack.c.b16 %v1835, %v1834
      %v1975 = vpack.c.b16 %v1837, %v1836
      %v1976 = vpack.c.b16 %v1839, %v1838
      %v1977 = vpack.c.b16 %v1841, %v1840
      %v1978 = vpack.c.b16 %v1843, %v1842
      %v1979 = vpack.c.b16 %v1845, %v1844
      %v1980 = vpack.c.b16 %v1847, %v1846
      %v1981 = vpack.c.b16 %v1849, %v1848
      %v1982 = vpack.c.b16 %v1851, %v1850
      %v1983 = vpack.c.b16 %v1853, %v1852
      %v1984 = vpack.c.b16 %v1855, %v1854
      %v1985 = vpack.c.b16 %v1857, %v1856
      %v1986 = vpack.c.b16 %v1859, %v1858
      %v1987 = vpack.c.b16 %v1861, %v1860
      %v1988 = vpack.c.b16 %v1863, %v1862
      %v1989 = vpack.c.b16 %v1865, %v1864
      %v1990 = vpack.c.b16 %v1867, %v1866
      %v1991 = vpack.c.b16 %v1869, %v1868
      %v1992 = vpack.c.b16 %v1871, %v1870
      %v1993 = vpack.c.b16 %v1873, %v1872
      %v1994 = vpack.c.b16 %v1875, %v1874
      %v1995 = vpack.c.b16 %v1877, %v1876
      %v1996 = vpack.c.b16 %v1879, %v1878
      %v1997 = vpack.c.b16 %v1881, %v1880
      %v1998 = vpack.c.b16 %v1883, %v1882
      %v1999 = vpack.c.b16 %v1885, %v1884
      %v2000 = vpack.c.b16 %v1887, %v1886
      %v2001 = vpack.c.b16 %v1889, %v1888
      %v2002 = vpack.c.b16 %v1891, %v1890
      %v2003 = vpack.c.b16 %v1893, %v1892
      %v2004 = vpack.c.b16 %v1895, %v1894
      %v2005 = vpack.c.b16 %v1897, %v1896
      %v2006 = vpack.c.b16 %v1899, %v1898
      %v2007 = vpack.c.b16 %v1901, %v1900
      %v2008 = vpack.c.b16 %v1903, %v1902
      %v2009 = vpack.c.b16 %v1905, %v1904
      %v2010 = vpack.c.b16 %v1907, %v1906
      %v2011 = vpack.c.b16 %v1909, %v1908
      %v2012 = vpack.c.b16 %v1911, %v1910
      %v2013 = vpack.c.b16 %v1913, %v1912
      %v2014 = vpack.c.b16 %v1915, %v1914
      %v2015 = vpack.c.b16 %v1917, %v1916
      %v2016 = vpack.c.b16 %v1919, %v1918
      %v2017 = vpack.c.b16 %v1921, %v1920
      %v2018 = vpack.c.b16 %v1923, %v1922
      %v2019 = vpack.c.b16 %v1925, %v1924
      %v2020 = vpack.c.b16 %v1927, %v1926
      %v2021 = vpack.c.b16 %v1929, %v1928
      %v2022 = vpack.c.b16 %v1931, %v1930
      %v2023 = vpack.c.b16 %v1933, %v1932
      %v2024 = vpack.c.b16 %v1935, %v1934
      %v2025 = vpack.c.b16 %v1937, %v1936
      %v2026 = vpack.c.b16 %v1939, %v1938
      %v2027 = vpack.c.b16 %v1941, %v1940
      %v2028 = vpack.c.b16 %v1943, %v1942
      %v2029 = vpack.c.b16 %v1945, %v1944
      %v2030 = vpack.c.b16 %v1947, %v1946
      %v2031 = vpack.c.b16 %v1949, %v1948
      %v2032 = vpack.c.b16 %v1951, %v1950
      %v2033 = vpack.c.b16 %v1953, %v1952
      %v2034 = vpack.c.b16 %v1955, %v1954
      %v2035 = vpack.c.b16 %v1957, %v1956
      %v2036 = vpack.c.b16 %v1959, %v1958
      %v2037 = vpack.c.b16 %v1961, %v1960
      %v2038 = vpack.c.b16 %v1963, %v1962
      %v2039 = vpack.c.b16 %v1965, %v1964
      %v2040 = vpack.c.b16 %v1967, %v1966
      %v2041 = vpack.c.b16 %v1969, %v1968
      %2114 = vmatpush.bf16.msra.mxu0 %v1977
      %2115 = vmatpush.bf16.msra.mxu0 %v1976
      %2116 = vmatpush.bf16.msra.mxu0 %v1975
      %2117 = vmatpush.bf16.msra.mxu0 %v1974
      %2118 = vmatpush.bf16.msra.mxu0 %v1973
      %2119 = vmatpush.bf16.msra.mxu0 %v1972
      %2120 = vmatpush.bf16.msra.mxu0 %v1971
      %2121 = vmatpush.bf16.msra.mxu0 %v1970
      %2122 = vmatmul.bf16.gmra.mxu0 %v1664
      %v2123 = vpop.f32.mrf.mxu0
      %v2124 = vadd.f32 %v1634, %v2123
      %v2125 = vpop.f32.mrf.mxu0
      %v2126 = vadd.f32 %v1634, %v2125
      %2127 = vdwg.mxu0
      %2128 = vmatpush.bf16.msra.mxu0 %v1985
      %2129 = vmatpush.bf16.msra.mxu0 %v1984
      %2130 = vmatpush.bf16.msra.mxu0 %v1983
      %2131 = vmatpush.bf16.msra.mxu0 %v1982
      %2132 = vmatpush.bf16.msra.mxu0 %v1981
      %2133 = vmatpush.bf16.msra.mxu0 %v1980
      %2134 = vmatpush.bf16.msra.mxu0 %v1979
      %2135 = vmatpush.bf16.msra.mxu0 %v1978
      %2136 = vmatmul.bf16.gmra.mxu0 %v1665
      %v2137 = vpop.f32.mrf.mxu0
      %v2138 = vadd.f32 %v2124, %v2137
      %v2139 = vpop.f32.mrf.mxu0
      %v2140 = vadd.f32 %v2126, %v2139
      %2141 = vdwg.mxu0
      %2142 = vmatpush.bf16.msra.mxu0 %v1993
      %2143 = vmatpush.bf16.msra.mxu0 %v1992
      %2144 = vmatpush.bf16.msra.mxu0 %v1991
      %2145 = vmatpush.bf16.msra.mxu0 %v1990
      %2146 = vmatpush.bf16.msra.mxu0 %v1989
      %2147 = vmatpush.bf16.msra.mxu0 %v1988
      %2148 = vmatpush.bf16.msra.mxu0 %v1987
      %2149 = vmatpush.bf16.msra.mxu0 %v1986
      %2150 = vmatmul.bf16.gmra.mxu0 %v1666
      %v2151 = vpop.f32.mrf.mxu0
      %v2152 = vadd.f32 %v2138, %v2151
      %v2153 = vpop.f32.mrf.mxu0
      %v2154 = vadd.f32 %v2140, %v2153
      %2155 = vdwg.mxu0
      %2156 = vmatpush.bf16.msra.mxu0 %v2001
      %2157 = vmatpush.bf16.msra.mxu0 %v2000
      %2158 = vmatpush.bf16.msra.mxu0 %v1999
      %2159 = vmatpush.bf16.msra.mxu0 %v1998
      %2160 = vmatpush.bf16.msra.mxu0 %v1997
      %2161 = vmatpush.bf16.msra.mxu0 %v1996
      %2162 = vmatpush.bf16.msra.mxu0 %v1995
      %2163 = vmatpush.bf16.msra.mxu0 %v1994
      %2164 = vmatmul.bf16.gmra.mxu0 %v1667
      %v2165 = vpop.f32.mrf.mxu0
      %v2166 = vadd.f32 %v2152, %v2165
      %v2167 = vpop.f32.mrf.mxu0
      %v2168 = vadd.f32 %v2154, %v2167
      %2169 = vdwg.mxu0
      %2170 = vmatpush.bf16.msra.mxu0 %v2009
      %2171 = vmatpush.bf16.msra.mxu0 %v2008
      %2172 = vmatpush.bf16.msra.mxu0 %v2007
      %2173 = vmatpush.bf16.msra.mxu0 %v2006
      %2174 = vmatpush.bf16.msra.mxu0 %v2005
      %2175 = vmatpush.bf16.msra.mxu0 %v2004
      %2176 = vmatpush.bf16.msra.mxu0 %v2003
      %2177 = vmatpush.bf16.msra.mxu0 %v2002
      %2178 = vmatmul.bf16.gmra.mxu0 %v1668
      %v2179 = vpop.f32.mrf.mxu0
      %v2180 = vadd.f32 %v2166, %v2179
      %v2181 = vpop.f32.mrf.mxu0
      %v2182 = vadd.f32 %v2168, %v2181
      %2183 = vdwg.mxu0
      %2184 = vmatpush.bf16.msra.mxu0 %v2017
      %2185 = vmatpush.bf16.msra.mxu0 %v2016
      %2186 = vmatpush.bf16.msra.mxu0 %v2015
      %2187 = vmatpush.bf16.msra.mxu0 %v2014
      %2188 = vmatpush.bf16.msra.mxu0 %v2013
      %2189 = vmatpush.bf16.msra.mxu0 %v2012
      %2190 = vmatpush.bf16.msra.mxu0 %v2011
      %2191 = vmatpush.bf16.msra.mxu0 %v2010
      %2192 = vmatmul.bf16.gmra.mxu0 %v1669
      %v2193 = vpop.f32.mrf.mxu0
      %v2194 = vadd.f32 %v2180, %v2193
      %v2195 = vpop.f32.mrf.mxu0
      %v2196 = vadd.f32 %v2182, %v2195
      %2197 = vdwg.mxu0
      %2198 = vmatpush.bf16.msra.mxu0 %v2025
      %2199 = vmatpush.bf16.msra.mxu0 %v2024
      %2200 = vmatpush.bf16.msra.mxu0 %v2023
      %2201 = vmatpush.bf16.msra.mxu0 %v2022
      %2202 = vmatpush.bf16.msra.mxu0 %v2021
      %2203 = vmatpush.bf16.msra.mxu0 %v2020
      %2204 = vmatpush.bf16.msra.mxu0 %v2019
      %2205 = vmatpush.bf16.msra.mxu0 %v2018
      %2206 = vmatmul.bf16.gmra.mxu0 %v1670
      %v2207 = vpop.f32.mrf.mxu0
      %v2208 = vadd.f32 %v2194, %v2207
      %v2209 = vpop.f32.mrf.mxu0
      %v2210 = vadd.f32 %v2196, %v2209
      %2211 = vdwg.mxu0
      %2212 = vmatpush.bf16.msra.mxu0 %v2033
      %2213 = vmatpush.bf16.msra.mxu0 %v2032
      %2214 = vmatpush.bf16.msra.mxu0 %v2031
      %2215 = vmatpush.bf16.msra.mxu0 %v2030
      %2216 = vmatpush.bf16.msra.mxu0 %v2029
      %2217 = vmatpush.bf16.msra.mxu0 %v2028
      %2218 = vmatpush.bf16.msra.mxu0 %v2027
      %2219 = vmatpush.bf16.msra.mxu0 %v2026
      %2220 = vmatmul.bf16.gmra.mxu0 %v1671
      %v2221 = vpop.f32.mrf.mxu0
      %v2222 = vadd.f32 %v2208, %v2221
      %v2223 = vpop.f32.mrf.mxu0
      %v2224 = vadd.f32 %v2210, %v2223
      %2225 = vdwg.mxu0
      %2226 = vmatpush.bf16.msra.mxu0 %v2041
      %2227 = vmatpush.bf16.msra.mxu0 %v2040
      %2228 = vmatpush.bf16.msra.mxu0 %v2039
      %2229 = vmatpush.bf16.msra.mxu0 %v2038
      %2230 = vmatpush.bf16.msra.mxu0 %v2037
      %2231 = vmatpush.bf16.msra.mxu0 %v2036
      %2232 = vmatpush.bf16.msra.mxu0 %v2035
      %2233 = vmatpush.bf16.msra.mxu0 %v2034
      %2234 = vmatmul.bf16.gmra.mxu0 %v1672
      %v2235 = vpop.f32.mrf.mxu0
      %v2236 = vadd.f32 %v2222, %v2235
      %v2237 = vpop.f32.mrf.mxu0
      %v2238 = vadd.f32 %v2224, %v2237
      %2239 = vdwg.mxu0
      %v2240 = vmax.f32 %v2236, 0.0
      %v2241 = vmax.f32 %v2238, 0.0
      %v2242 = vpack.c.bf16 %v2240, %v2240
      %v2243 = vpack.c.bf16 %v2241, %v2241
      %2244 = vst.msk [vmem:[%s605] sm:$0xf] %vm707, %v2242
      %2245 = vst.msk [vmem:[%s605 + $0x4] sm:$0xf] %vm707, %v2243
      %v2246 = vld [vmem:[%s587] sm:$0xff]
      %v2247 = vld [vmem:[%s587 + $0x8] sm:$0xff]
      %v2248 = vld [vmem:[%s587 + $0x10] sm:$0xff]
      %v2249 = vld [vmem:[%s587 + $0x18] sm:$0xff]
      %v2250 = vld [vmem:[%s587 + $0x20] sm:$0xf]
      %v2251 = vld [vmem:[%s587 + $0x24] sm:$0xff]
      %v2252 = vld [vmem:[%s587 + $0x2c] sm:$0xff]
      %v2253 = vld [vmem:[%s587 + $0x34] sm:$0xff]
      %v2254 = vld [vmem:[%s587 + $0x3c] sm:$0xff]
      %v2255 = vld [vmem:[%s587 + $0x44] sm:$0xf]
      %v2256 = vld [vmem:[%s10] sm:$0xf]
      %v2257 = vld [vmem:[%s10 + $0x4] sm:$0xf]
      %v2258 = vld [vmem:[%s10 + $0x8] sm:$0xf]
      %v2259 = vld [vmem:[%s10 + $0xc] sm:$0xf]
      %v2260 = vld [vmem:[%s10 + $0x10] sm:$0xf]
      %v2261 = vld [vmem:[%s10 + $0x14] sm:$0xf]
      %v2262 = vld [vmem:[%s10 + $0x18] sm:$0xf]
      %v2263 = vld [vmem:[%s10 + $0x1c] sm:$0xf]
      %v2264 = vld [vmem:[%s10 + $0x20] sm:$0xf]
      %v2265 = vld [vmem:[%s10 + $0x24] sm:$0xf]
      %v2266 = vld [vmem:[%s10 + $0x28] sm:$0xf]
      %v2267 = vld [vmem:[%s10 + $0x2c] sm:$0xf]
      %v2268 = vld [vmem:[%s10 + $0x30] sm:$0xf]
      %v2269 = vld [vmem:[%s10 + $0x34] sm:$0xf]
      %v2270 = vld [vmem:[%s10 + $0x38] sm:$0xf]
      %v2271 = vld [vmem:[%s10 + $0x3c] sm:$0xf]
      %v2272 = vld [vmem:[%s10 + $0x40] sm:$0xf]
      %v2273 = vld [vmem:[%s10 + $0x44] sm:$0xf]
      %v2274 = vld [vmem:[%s10 + $0x48] sm:$0xf]
      %v2275 = vld [vmem:[%s10 + $0x4c] sm:$0xf]
      %v2276 = vld [vmem:[%s10 + $0x50] sm:$0xf]
      %v2277 = vld [vmem:[%s10 + $0x54] sm:$0xf]
      %v2278 = vld [vmem:[%s10 + $0x58] sm:$0xf]
      %v2279 = vld [vmem:[%s10 + $0x5c] sm:$0xf]
      %v2280 = vld [vmem:[%s10 + $0x60] sm:$0xf]
      %v2281 = vld [vmem:[%s10 + $0x64] sm:$0xf]
      %v2282 = vld [vmem:[%s10 + $0x68] sm:$0xf]
      %v2283 = vld [vmem:[%s10 + $0x6c] sm:$0xf]
      %v2284 = vld [vmem:[%s10 + $0x70] sm:$0xf]
      %v2285 = vld [vmem:[%s10 + $0x74] sm:$0xf]
      %v2286 = vld [vmem:[%s10 + $0x78] sm:$0xf]
      %v2287 = vld [vmem:[%s10 + $0x7c] sm:$0xf]
      %v2288 = vld [vmem:[%s10 + $0x80] sm:$0xf]
      %v2289 = vld [vmem:[%s10 + $0x84] sm:$0xf]
      %v2290 = vld [vmem:[%s10 + $0x88] sm:$0xf]
      %v2291 = vld [vmem:[%s10 + $0x8c] sm:$0xf]
      %v2292 = vld [vmem:[%s10 + $0x90] sm:$0xf]
      %v2293 = vld [vmem:[%s10 + $0x94] sm:$0xf]
      %v2294 = vld [vmem:[%s10 + $0x98] sm:$0xf]
      %v2295 = vld [vmem:[%s10 + $0x9c] sm:$0xf]
      %v2296 = vld [vmem:[%s10 + $0xa0] sm:$0xf]
      %v2297 = vld [vmem:[%s10 + $0xa4] sm:$0xf]
      %v2298 = vld [vmem:[%s10 + $0xa8] sm:$0xf]
      %v2299 = vld [vmem:[%s10 + $0xac] sm:$0xf]
      %v2300 = vld [vmem:[%s10 + $0xb0] sm:$0xf]
      %v2301 = vld [vmem:[%s10 + $0xb4] sm:$0xf]
      %v2302 = vld [vmem:[%s10 + $0xb8] sm:$0xf]
      %v2303 = vld [vmem:[%s10 + $0xbc] sm:$0xf]
      %v2304 = vld [vmem:[%s10 + $0xc0] sm:$0xf]
      %v2305 = vld [vmem:[%s10 + $0xc4] sm:$0xf]
      %v2306 = vld [vmem:[%s10 + $0xc8] sm:$0xf]
      %v2307 = vld [vmem:[%s10 + $0xcc] sm:$0xf]
      %v2308 = vld [vmem:[%s10 + $0xd0] sm:$0xf]
      %v2309 = vld [vmem:[%s10 + $0xd4] sm:$0xf]
      %v2310 = vld [vmem:[%s10 + $0xd8] sm:$0xf]
      %v2311 = vld [vmem:[%s10 + $0xdc] sm:$0xf]
      %v2312 = vld [vmem:[%s10 + $0xe0] sm:$0xf]
      %v2313 = vld [vmem:[%s10 + $0xe4] sm:$0xf]
      %v2314 = vld [vmem:[%s10 + $0xe8] sm:$0xf]
      %v2315 = vld [vmem:[%s10 + $0xec] sm:$0xf]
      %v2316 = vld [vmem:[%s10 + $0xf0] sm:$0xf]
      %v2317 = vld [vmem:[%s10 + $0xf4] sm:$0xf]
      %v2318 = vld [vmem:[%s10 + $0xf8] sm:$0xf]
      %v2319 = vld [vmem:[%s10 + $0xfc] sm:$0xf]
      %v2320 = vld [vmem:[%s10 + $0x100] sm:$0xf]
      %v2321 = vld [vmem:[%s10 + $0x104] sm:$0xf]
      %v2322 = vld [vmem:[%s10 + $0x108] sm:$0xf]
      %v2323 = vld [vmem:[%s10 + $0x10c] sm:$0xf]
      %v2324 = vld [vmem:[%s10 + $0x110] sm:$0xf]
      %v2325 = vld [vmem:[%s10 + $0x114] sm:$0xf]
      %v2326 = vld [vmem:[%s10 + $0x118] sm:$0xf]
      %v2327 = vld [vmem:[%s10 + $0x11c] sm:$0xf]
      %v2328 = vld [vmem:[%s10 + $0x120] sm:$0xf]
      %v2329 = vld [vmem:[%s10 + $0x124] sm:$0xf]
      %v2330 = vld [vmem:[%s10 + $0x128] sm:$0xf]
      %v2331 = vld [vmem:[%s10 + $0x12c] sm:$0xf]
      %v2332 = vld [vmem:[%s10 + $0x130] sm:$0xf]
      %v2333 = vld [vmem:[%s10 + $0x134] sm:$0xf]
      %v2334 = vld [vmem:[%s10 + $0x138] sm:$0xf]
      %v2335 = vld [vmem:[%s10 + $0x13c] sm:$0xf]
      %v2336 = vld [vmem:[%s10 + $0x140] sm:$0xf]
      %v2337 = vld [vmem:[%s10 + $0x144] sm:$0xf]
      %v2338 = vld [vmem:[%s10 + $0x148] sm:$0xf]
      %v2339 = vld [vmem:[%s10 + $0x14c] sm:$0xf]
      %v2340 = vld [vmem:[%s10 + $0x150] sm:$0xf]
      %v2341 = vld [vmem:[%s10 + $0x154] sm:$0xf]
      %v2342 = vld [vmem:[%s10 + $0x158] sm:$0xf]
      %v2343 = vld [vmem:[%s10 + $0x15c] sm:$0xf]
      %v2344 = vld [vmem:[%s10 + $0x160] sm:$0xf]
      %v2345 = vld [vmem:[%s10 + $0x164] sm:$0xf]
      %v2346 = vld [vmem:[%s10 + $0x168] sm:$0xf]
      %v2347 = vld [vmem:[%s10 + $0x16c] sm:$0xf]
      %v2348 = vld [vmem:[%s10 + $0x170] sm:$0xf]
      %v2349 = vld [vmem:[%s10 + $0x174] sm:$0xf]
      %v2350 = vld [vmem:[%s10 + $0x178] sm:$0xf]
      %v2351 = vld [vmem:[%s10 + $0x17c] sm:$0xf]
      %v2352 = vld [vmem:[%s10 + $0x180] sm:$0xf]
      %v2353 = vld [vmem:[%s10 + $0x184] sm:$0xf]
      %v2354 = vld [vmem:[%s10 + $0x188] sm:$0xf]
      %v2355 = vld [vmem:[%s10 + $0x18c] sm:$0xf]
      %v2356 = vld [vmem:[%s10 + $0x190] sm:$0xf]
      %v2357 = vld [vmem:[%s10 + $0x194] sm:$0xf]
      %v2358 = vld [vmem:[%s10 + $0x198] sm:$0xf]
      %v2359 = vld [vmem:[%s10 + $0x19c] sm:$0xf]
      %v2360 = vld [vmem:[%s10 + $0x1a0] sm:$0xf]
      %v2361 = vld [vmem:[%s10 + $0x1a4] sm:$0xf]
      %v2362 = vld [vmem:[%s10 + $0x1a8] sm:$0xf]
      %v2363 = vld [vmem:[%s10 + $0x1ac] sm:$0xf]
      %v2364 = vld [vmem:[%s10 + $0x1b0] sm:$0xf]
      %v2365 = vld [vmem:[%s10 + $0x1b4] sm:$0xf]
      %v2366 = vld [vmem:[%s10 + $0x1b8] sm:$0xf]
      %v2367 = vld [vmem:[%s10 + $0x1bc] sm:$0xf]
      %v2368 = vld [vmem:[%s10 + $0x1c0] sm:$0xf]
      %v2369 = vld [vmem:[%s10 + $0x1c4] sm:$0xf]
      %v2370 = vld [vmem:[%s10 + $0x1c8] sm:$0xf]
      %v2371 = vld [vmem:[%s10 + $0x1cc] sm:$0xf]
      %v2372 = vld [vmem:[%s10 + $0x1d0] sm:$0xf]
      %v2373 = vld [vmem:[%s10 + $0x1d4] sm:$0xf]
      %v2374 = vld [vmem:[%s10 + $0x1d8] sm:$0xf]
      %v2375 = vld [vmem:[%s10 + $0x1dc] sm:$0xf]
      %v2376 = vld [vmem:[%s10 + $0x1e0] sm:$0xf]
      %v2377 = vld [vmem:[%s10 + $0x1e4] sm:$0xf]
      %v2378 = vld [vmem:[%s10 + $0x1e8] sm:$0xf]
      %v2379 = vld [vmem:[%s10 + $0x1ec] sm:$0xf]
      %v2380 = vld [vmem:[%s10 + $0x1f0] sm:$0xf]
      %v2381 = vld [vmem:[%s10 + $0x1f4] sm:$0xf]
      %v2382 = vld [vmem:[%s10 + $0x1f8] sm:$0xf]
      %v2383 = vld [vmem:[%s10 + $0x1fc] sm:$0xf]
      %v2384 = vld [vmem:[%s10 + $0x200] sm:$0xf]
      %v2385 = vld [vmem:[%s10 + $0x204] sm:$0xf]
      %v2386 = vld [vmem:[%s10 + $0x208] sm:$0xf]
      %v2387 = vld [vmem:[%s10 + $0x20c] sm:$0xf]
      %v2388 = vld [vmem:[%s10 + $0x210] sm:$0xf]
      %v2389 = vld [vmem:[%s10 + $0x214] sm:$0xf]
      %v2390 = vld [vmem:[%s10 + $0x218] sm:$0xf]
      %v2391 = vld [vmem:[%s10 + $0x21c] sm:$0xf]
      %v2392 = vld [vmem:[%s10 + $0x220] sm:$0xf]
      %v2393 = vld [vmem:[%s10 + $0x224] sm:$0xf]
      %v2394 = vld [vmem:[%s10 + $0x228] sm:$0xf]
      %v2395 = vld [vmem:[%s10 + $0x22c] sm:$0xf]
      %v2396 = vld [vmem:[%s10 + $0x230] sm:$0xf]
      %v2397 = vld [vmem:[%s10 + $0x234] sm:$0xf]
      %v2398 = vld [vmem:[%s10 + $0x238] sm:$0xf]
      %v2399 = vld [vmem:[%s10 + $0x23c] sm:$0xf]
      %v2400 = vld [vmem:[%s11] sm:$0x1]
      %v2402 = vperm.slane %v2400, 0
      %v2414 = vunpack.c.l.b16 %v2246
      %v2415 = vunpack.c.h.b16 %v2246
      %v2416 = vunpack.c.l.b16 %v2247
      %v2417 = vunpack.c.h.b16 %v2247
      %v2418 = vunpack.c.l.b16 %v2248
      %v2419 = vunpack.c.h.b16 %v2248
      %v2420 = vunpack.c.l.b16 %v2249
      %v2421 = vunpack.c.h.b16 %v2249
      %v2422 = vunpack.c.l.b16 %v2250
      %v2423 = vunpack.c.l.b16 %v2251
      %v2424 = vunpack.c.h.b16 %v2251
      %v2425 = vunpack.c.l.b16 %v2252
      %v2426 = vunpack.c.h.b16 %v2252
      %v2427 = vunpack.c.l.b16 %v2253
      %v2428 = vunpack.c.h.b16 %v2253
      %v2429 = vunpack.c.l.b16 %v2254
      %v2430 = vunpack.c.h.b16 %v2254
      %v2431 = vunpack.c.l.b16 %v2255
      %v2432 = vpack.c.b16 %v2423, %v2414
      %v2433 = vpack.c.b16 %v2424, %v2415
      %v2434 = vpack.c.b16 %v2425, %v2416
      %v2435 = vpack.c.b16 %v2426, %v2417
      %v2436 = vpack.c.b16 %v2427, %v2418
      %v2437 = vpack.c.b16 %v2428, %v2419
      %v2438 = vpack.c.b16 %v2429, %v2420
      %v2439 = vpack.c.b16 %v2430, %v2421
      %v2440 = vpack.c.b16 %v2431, %v2422
      %v2594 = vunpack.c.l.b16 %v2256
      %v2595 = vunpack.c.l.b16 %v2257
      %v2596 = vunpack.c.l.b16 %v2258
      %v2597 = vunpack.c.l.b16 %v2259
      %v2598 = vunpack.c.l.b16 %v2260
      %v2599 = vunpack.c.l.b16 %v2261
      %v2600 = vunpack.c.l.b16 %v2262
      %v2601 = vunpack.c.l.b16 %v2263
      %v2602 = vunpack.c.l.b16 %v2264
      %v2603 = vunpack.c.l.b16 %v2265
      %v2604 = vunpack.c.l.b16 %v2266
      %v2605 = vunpack.c.l.b16 %v2267
      %v2606 = vunpack.c.l.b16 %v2268
      %v2607 = vunpack.c.l.b16 %v2269
      %v2608 = vunpack.c.l.b16 %v2270
      %v2609 = vunpack.c.l.b16 %v2271
      %v2610 = vunpack.c.l.b16 %v2272
      %v2611 = vunpack.c.l.b16 %v2273
      %v2612 = vunpack.c.l.b16 %v2274
      %v2613 = vunpack.c.l.b16 %v2275
      %v2614 = vunpack.c.l.b16 %v2276
      %v2615 = vunpack.c.l.b16 %v2277
      %v2616 = vunpack.c.l.b16 %v2278
      %v2617 = vunpack.c.l.b16 %v2279
      %v2618 = vunpack.c.l.b16 %v2280
      %v2619 = vunpack.c.l.b16 %v2281
      %v2620 = vunpack.c.l.b16 %v2282
      %v2621 = vunpack.c.l.b16 %v2283
      %v2622 = vunpack.c.l.b16 %v2284
      %v2623 = vunpack.c.l.b16 %v2285
      %v2624 = vunpack.c.l.b16 %v2286
      %v2625 = vunpack.c.l.b16 %v2287
      %v2626 = vunpack.c.l.b16 %v2288
      %v2627 = vunpack.c.l.b16 %v2289
      %v2628 = vunpack.c.l.b16 %v2290
      %v2629 = vunpack.c.l.b16 %v2291
      %v2630 = vunpack.c.l.b16 %v2292
      %v2631 = vunpack.c.l.b16 %v2293
      %v2632 = vunpack.c.l.b16 %v2294
      %v2633 = vunpack.c.l.b16 %v2295
      %v2634 = vunpack.c.l.b16 %v2296
      %v2635 = vunpack.c.l.b16 %v2297
      %v2636 = vunpack.c.l.b16 %v2298
      %v2637 = vunpack.c.l.b16 %v2299
      %v2638 = vunpack.c.l.b16 %v2300
      %v2639 = vunpack.c.l.b16 %v2301
      %v2640 = vunpack.c.l.b16 %v2302
      %v2641 = vunpack.c.l.b16 %v2303
      %v2642 = vunpack.c.l.b16 %v2304
      %v2643 = vunpack.c.l.b16 %v2305
      %v2644 = vunpack.c.l.b16 %v2306
      %v2645 = vunpack.c.l.b16 %v2307
      %v2646 = vunpack.c.l.b16 %v2308
      %v2647 = vunpack.c.l.b16 %v2309
      %v2648 = vunpack.c.l.b16 %v2310
      %v2649 = vunpack.c.l.b16 %v2311
      %v2650 = vunpack.c.l.b16 %v2312
      %v2651 = vunpack.c.l.b16 %v2313
      %v2652 = vunpack.c.l.b16 %v2314
      %v2653 = vunpack.c.l.b16 %v2315
      %v2654 = vunpack.c.l.b16 %v2316
      %v2655 = vunpack.c.l.b16 %v2317
      %v2656 = vunpack.c.l.b16 %v2318
      %v2657 = vunpack.c.l.b16 %v2319
      %v2658 = vunpack.c.l.b16 %v2320
      %v2659 = vunpack.c.l.b16 %v2321
      %v2660 = vunpack.c.l.b16 %v2322
      %v2661 = vunpack.c.l.b16 %v2323
      %v2662 = vunpack.c.l.b16 %v2324
      %v2663 = vunpack.c.l.b16 %v2325
      %v2664 = vunpack.c.l.b16 %v2326
      %v2665 = vunpack.c.l.b16 %v2327
      %v2666 = vunpack.c.l.b16 %v2328
      %v2667 = vunpack.c.l.b16 %v2329
      %v2668 = vunpack.c.l.b16 %v2330
      %v2669 = vunpack.c.l.b16 %v2331
      %v2670 = vunpack.c.l.b16 %v2332
      %v2671 = vunpack.c.l.b16 %v2333
      %v2672 = vunpack.c.l.b16 %v2334
      %v2673 = vunpack.c.l.b16 %v2335
      %v2674 = vunpack.c.l.b16 %v2336
      %v2675 = vunpack.c.l.b16 %v2337
      %v2676 = vunpack.c.l.b16 %v2338
      %v2677 = vunpack.c.l.b16 %v2339
      %v2678 = vunpack.c.l.b16 %v2340
      %v2679 = vunpack.c.l.b16 %v2341
      %v2680 = vunpack.c.l.b16 %v2342
      %v2681 = vunpack.c.l.b16 %v2343
      %v2682 = vunpack.c.l.b16 %v2344
      %v2683 = vunpack.c.l.b16 %v2345
      %v2684 = vunpack.c.l.b16 %v2346
      %v2685 = vunpack.c.l.b16 %v2347
      %v2686 = vunpack.c.l.b16 %v2348
      %v2687 = vunpack.c.l.b16 %v2349
      %v2688 = vunpack.c.l.b16 %v2350
      %v2689 = vunpack.c.l.b16 %v2351
      %v2690 = vunpack.c.l.b16 %v2352
      %v2691 = vunpack.c.l.b16 %v2353
      %v2692 = vunpack.c.l.b16 %v2354
      %v2693 = vunpack.c.l.b16 %v2355
      %v2694 = vunpack.c.l.b16 %v2356
      %v2695 = vunpack.c.l.b16 %v2357
      %v2696 = vunpack.c.l.b16 %v2358
      %v2697 = vunpack.c.l.b16 %v2359
      %v2698 = vunpack.c.l.b16 %v2360
      %v2699 = vunpack.c.l.b16 %v2361
      %v2700 = vunpack.c.l.b16 %v2362
      %v2701 = vunpack.c.l.b16 %v2363
      %v2702 = vunpack.c.l.b16 %v2364
      %v2703 = vunpack.c.l.b16 %v2365
      %v2704 = vunpack.c.l.b16 %v2366
      %v2705 = vunpack.c.l.b16 %v2367
      %v2706 = vunpack.c.l.b16 %v2368
      %v2707 = vunpack.c.l.b16 %v2369
      %v2708 = vunpack.c.l.b16 %v2370
      %v2709 = vunpack.c.l.b16 %v2371
      %v2710 = vunpack.c.l.b16 %v2372
      %v2711 = vunpack.c.l.b16 %v2373
      %v2712 = vunpack.c.l.b16 %v2374
      %v2713 = vunpack.c.l.b16 %v2375
      %v2714 = vunpack.c.l.b16 %v2376
      %v2715 = vunpack.c.l.b16 %v2377
      %v2716 = vunpack.c.l.b16 %v2378
      %v2717 = vunpack.c.l.b16 %v2379
      %v2718 = vunpack.c.l.b16 %v2380
      %v2719 = vunpack.c.l.b16 %v2381
      %v2720 = vunpack.c.l.b16 %v2382
      %v2721 = vunpack.c.l.b16 %v2383
      %v2722 = vunpack.c.l.b16 %v2384
      %v2723 = vunpack.c.l.b16 %v2385
      %v2724 = vunpack.c.l.b16 %v2386
      %v2725 = vunpack.c.l.b16 %v2387
      %v2726 = vunpack.c.l.b16 %v2388
      %v2727 = vunpack.c.l.b16 %v2389
      %v2728 = vunpack.c.l.b16 %v2390
      %v2729 = vunpack.c.l.b16 %v2391
      %v2730 = vunpack.c.l.b16 %v2392
      %v2731 = vunpack.c.l.b16 %v2393
      %v2732 = vunpack.c.l.b16 %v2394
      %v2733 = vunpack.c.l.b16 %v2395
      %v2734 = vunpack.c.l.b16 %v2396
      %v2735 = vunpack.c.l.b16 %v2397
      %v2736 = vunpack.c.l.b16 %v2398
      %v2737 = vunpack.c.l.b16 %v2399
      %v2738 = vpack.c.b16 %v2595, %v2594
      %v2739 = vpack.c.b16 %v2597, %v2596
      %v2740 = vpack.c.b16 %v2599, %v2598
      %v2741 = vpack.c.b16 %v2601, %v2600
      %v2742 = vpack.c.b16 %v2603, %v2602
      %v2743 = vpack.c.b16 %v2605, %v2604
      %v2744 = vpack.c.b16 %v2607, %v2606
      %v2745 = vpack.c.b16 %v2609, %v2608
      %v2746 = vpack.c.b16 %v2611, %v2610
      %v2747 = vpack.c.b16 %v2613, %v2612
      %v2748 = vpack.c.b16 %v2615, %v2614
      %v2749 = vpack.c.b16 %v2617, %v2616
      %v2750 = vpack.c.b16 %v2619, %v2618
      %v2751 = vpack.c.b16 %v2621, %v2620
      %v2752 = vpack.c.b16 %v2623, %v2622
      %v2753 = vpack.c.b16 %v2625, %v2624
      %v2754 = vpack.c.b16 %v2627, %v2626
      %v2755 = vpack.c.b16 %v2629, %v2628
      %v2756 = vpack.c.b16 %v2631, %v2630
      %v2757 = vpack.c.b16 %v2633, %v2632
      %v2758 = vpack.c.b16 %v2635, %v2634
      %v2759 = vpack.c.b16 %v2637, %v2636
      %v2760 = vpack.c.b16 %v2639, %v2638
      %v2761 = vpack.c.b16 %v2641, %v2640
      %v2762 = vpack.c.b16 %v2643, %v2642
      %v2763 = vpack.c.b16 %v2645, %v2644
      %v2764 = vpack.c.b16 %v2647, %v2646
      %v2765 = vpack.c.b16 %v2649, %v2648
      %v2766 = vpack.c.b16 %v2651, %v2650
      %v2767 = vpack.c.b16 %v2653, %v2652
      %v2768 = vpack.c.b16 %v2655, %v2654
      %v2769 = vpack.c.b16 %v2657, %v2656
      %v2770 = vpack.c.b16 %v2659, %v2658
      %v2771 = vpack.c.b16 %v2661, %v2660
      %v2772 = vpack.c.b16 %v2663, %v2662
      %v2773 = vpack.c.b16 %v2665, %v2664
      %v2774 = vpack.c.b16 %v2667, %v2666
      %v2775 = vpack.c.b16 %v2669, %v2668
      %v2776 = vpack.c.b16 %v2671, %v2670
      %v2777 = vpack.c.b16 %v2673, %v2672
      %v2778 = vpack.c.b16 %v2675, %v2674
      %v2779 = vpack.c.b16 %v2677, %v2676
      %v2780 = vpack.c.b16 %v2679, %v2678
      %v2781 = vpack.c.b16 %v2681, %v2680
      %v2782 = vpack.c.b16 %v2683, %v2682
      %v2783 = vpack.c.b16 %v2685, %v2684
      %v2784 = vpack.c.b16 %v2687, %v2686
      %v2785 = vpack.c.b16 %v2689, %v2688
      %v2786 = vpack.c.b16 %v2691, %v2690
      %v2787 = vpack.c.b16 %v2693, %v2692
      %v2788 = vpack.c.b16 %v2695, %v2694
      %v2789 = vpack.c.b16 %v2697, %v2696
      %v2790 = vpack.c.b16 %v2699, %v2698
      %v2791 = vpack.c.b16 %v2701, %v2700
      %v2792 = vpack.c.b16 %v2703, %v2702
      %v2793 = vpack.c.b16 %v2705, %v2704
      %v2794 = vpack.c.b16 %v2707, %v2706
      %v2795 = vpack.c.b16 %v2709, %v2708
      %v2796 = vpack.c.b16 %v2711, %v2710
      %v2797 = vpack.c.b16 %v2713, %v2712
      %v2798 = vpack.c.b16 %v2715, %v2714
      %v2799 = vpack.c.b16 %v2717, %v2716
      %v2800 = vpack.c.b16 %v2719, %v2718
      %v2801 = vpack.c.b16 %v2721, %v2720
      %v2802 = vpack.c.b16 %v2723, %v2722
      %v2803 = vpack.c.b16 %v2725, %v2724
      %v2804 = vpack.c.b16 %v2727, %v2726
      %v2805 = vpack.c.b16 %v2729, %v2728
      %v2806 = vpack.c.b16 %v2731, %v2730
      %v2807 = vpack.c.b16 %v2733, %v2732
      %v2808 = vpack.c.b16 %v2735, %v2734
      %v2809 = vpack.c.b16 %v2737, %v2736
      %2882 = vmatpush.bf16.msra.mxu0 %v2745
      %2883 = vmatpush.bf16.msra.mxu0 %v2744
      %2884 = vmatpush.bf16.msra.mxu0 %v2743
      %2885 = vmatpush.bf16.msra.mxu0 %v2742
      %2886 = vmatpush.bf16.msra.mxu0 %v2741
      %2887 = vmatpush.bf16.msra.mxu0 %v2740
      %2888 = vmatpush.bf16.msra.mxu0 %v2739
      %2889 = vmatpush.bf16.msra.mxu0 %v2738
      %2890 = vmatmul.bf16.gmra.mxu0 %v2432
      %v2891 = vpop.f32.mrf.mxu0
      %v2892 = vadd.f32 %v2402, %v2891
      %v2893 = vpop.f32.mrf.mxu0
      %v2894 = vadd.f32 %v2402, %v2893
      %2895 = vdwg.mxu0
      %2896 = vmatpush.bf16.msra.mxu0 %v2753
      %2897 = vmatpush.bf16.msra.mxu0 %v2752
      %2898 = vmatpush.bf16.msra.mxu0 %v2751
      %2899 = vmatpush.bf16.msra.mxu0 %v2750
      %2900 = vmatpush.bf16.msra.mxu0 %v2749
      %2901 = vmatpush.bf16.msra.mxu0 %v2748
      %2902 = vmatpush.bf16.msra.mxu0 %v2747
      %2903 = vmatpush.bf16.msra.mxu0 %v2746
      %2904 = vmatmul.bf16.gmra.mxu0 %v2433
      %v2905 = vpop.f32.mrf.mxu0
      %v2906 = vadd.f32 %v2892, %v2905
      %v2907 = vpop.f32.mrf.mxu0
      %v2908 = vadd.f32 %v2894, %v2907
      %2909 = vdwg.mxu0
      %2910 = vmatpush.bf16.msra.mxu0 %v2761
      %2911 = vmatpush.bf16.msra.mxu0 %v2760
      %2912 = vmatpush.bf16.msra.mxu0 %v2759
      %2913 = vmatpush.bf16.msra.mxu0 %v2758
      %2914 = vmatpush.bf16.msra.mxu0 %v2757
      %2915 = vmatpush.bf16.msra.mxu0 %v2756
      %2916 = vmatpush.bf16.msra.mxu0 %v2755
      %2917 = vmatpush.bf16.msra.mxu0 %v2754
      %2918 = vmatmul.bf16.gmra.mxu0 %v2434
      %v2919 = vpop.f32.mrf.mxu0
      %v2920 = vadd.f32 %v2906, %v2919
      %v2921 = vpop.f32.mrf.mxu0
      %v2922 = vadd.f32 %v2908, %v2921
      %2923 = vdwg.mxu0
      %2924 = vmatpush.bf16.msra.mxu0 %v2769
      %2925 = vmatpush.bf16.msra.mxu0 %v2768
      %2926 = vmatpush.bf16.msra.mxu0 %v2767
      %2927 = vmatpush.bf16.msra.mxu0 %v2766
      %2928 = vmatpush.bf16.msra.mxu0 %v2765
      %2929 = vmatpush.bf16.msra.mxu0 %v2764
      %2930 = vmatpush.bf16.msra.mxu0 %v2763
      %2931 = vmatpush.bf16.msra.mxu0 %v2762
      %2932 = vmatmul.bf16.gmra.mxu0 %v2435
      %v2933 = vpop.f32.mrf.mxu0
      %v2934 = vadd.f32 %v2920, %v2933
      %v2935 = vpop.f32.mrf.mxu0
      %v2936 = vadd.f32 %v2922, %v2935
      %2937 = vdwg.mxu0
      %2938 = vmatpush.bf16.msra.mxu0 %v2777
      %2939 = vmatpush.bf16.msra.mxu0 %v2776
      %2940 = vmatpush.bf16.msra.mxu0 %v2775
      %2941 = vmatpush.bf16.msra.mxu0 %v2774
      %2942 = vmatpush.bf16.msra.mxu0 %v2773
      %2943 = vmatpush.bf16.msra.mxu0 %v2772
      %2944 = vmatpush.bf16.msra.mxu0 %v2771
      %2945 = vmatpush.bf16.msra.mxu0 %v2770
      %2946 = vmatmul.bf16.gmra.mxu0 %v2436
      %v2947 = vpop.f32.mrf.mxu0
      %v2948 = vadd.f32 %v2934, %v2947
      %v2949 = vpop.f32.mrf.mxu0
      %v2950 = vadd.f32 %v2936, %v2949
      %2951 = vdwg.mxu0
      %2952 = vmatpush.bf16.msra.mxu0 %v2785
      %2953 = vmatpush.bf16.msra.mxu0 %v2784
      %2954 = vmatpush.bf16.msra.mxu0 %v2783
      %2955 = vmatpush.bf16.msra.mxu0 %v2782
      %2956 = vmatpush.bf16.msra.mxu0 %v2781
      %2957 = vmatpush.bf16.msra.mxu0 %v2780
      %2958 = vmatpush.bf16.msra.mxu0 %v2779
      %2959 = vmatpush.bf16.msra.mxu0 %v2778
      %2960 = vmatmul.bf16.gmra.mxu0 %v2437
      %v2961 = vpop.f32.mrf.mxu0
      %v2962 = vadd.f32 %v2948, %v2961
      %v2963 = vpop.f32.mrf.mxu0
      %v2964 = vadd.f32 %v2950, %v2963
      %2965 = vdwg.mxu0
      %2966 = vmatpush.bf16.msra.mxu0 %v2793
      %2967 = vmatpush.bf16.msra.mxu0 %v2792
      %2968 = vmatpush.bf16.msra.mxu0 %v2791
      %2969 = vmatpush.bf16.msra.mxu0 %v2790
      %2970 = vmatpush.bf16.msra.mxu0 %v2789
      %2971 = vmatpush.bf16.msra.mxu0 %v2788
      %2972 = vmatpush.bf16.msra.mxu0 %v2787
      %2973 = vmatpush.bf16.msra.mxu0 %v2786
      %2974 = vmatmul.bf16.gmra.mxu0 %v2438
      %v2975 = vpop.f32.mrf.mxu0
      %v2976 = vadd.f32 %v2962, %v2975
      %v2977 = vpop.f32.mrf.mxu0
      %v2978 = vadd.f32 %v2964, %v2977
      %2979 = vdwg.mxu0
      %2980 = vmatpush.bf16.msra.mxu0 %v2801
      %2981 = vmatpush.bf16.msra.mxu0 %v2800
      %2982 = vmatpush.bf16.msra.mxu0 %v2799
      %2983 = vmatpush.bf16.msra.mxu0 %v2798
      %2984 = vmatpush.bf16.msra.mxu0 %v2797
      %2985 = vmatpush.bf16.msra.mxu0 %v2796
      %2986 = vmatpush.bf16.msra.mxu0 %v2795
      %2987 = vmatpush.bf16.msra.mxu0 %v2794
      %2988 = vmatmul.bf16.gmra.mxu0 %v2439
      %v2989 = vpop.f32.mrf.mxu0
      %v2990 = vadd.f32 %v2976, %v2989
      %v2991 = vpop.f32.mrf.mxu0
      %v2992 = vadd.f32 %v2978, %v2991
      %2993 = vdwg.mxu0
      %2994 = vmatpush.bf16.msra.mxu0 %v2809
      %2995 = vmatpush.bf16.msra.mxu0 %v2808
      %2996 = vmatpush.bf16.msra.mxu0 %v2807
      %2997 = vmatpush.bf16.msra.mxu0 %v2806
      %2998 = vmatpush.bf16.msra.mxu0 %v2805
      %2999 = vmatpush.bf16.msra.mxu0 %v2804
      %3000 = vmatpush.bf16.msra.mxu0 %v2803
      %3001 = vmatpush.bf16.msra.mxu0 %v2802
      %3002 = vmatmul.bf16.gmra.mxu0 %v2440
      %v3003 = vpop.f32.mrf.mxu0
      %v3004 = vadd.f32 %v2990, %v3003
      %v3005 = vpop.f32.mrf.mxu0
      %v3006 = vadd.f32 %v2992, %v3005
      %3007 = vdwg.mxu0
      %v3008 = vmax.f32 %v3004, 0.0
      %v3009 = vmax.f32 %v3006, 0.0
      %v3010 = vpack.c.bf16 %v3008, %v3008
      %v3011 = vpack.c.bf16 %v3009, %v3009
      %3012 = vst.msk [vmem:[%s611] sm:$0xf] %vm707, %v3010
      %3013 = vst.msk [vmem:[%s611 + $0x4] sm:$0xf] %vm707, %v3011
      %s3014 = smul.u32 2, %s27
      %p3015 = scmp.lt.s32.totalorder %s3014, 3
      %s3016 = scalar_select %p3015, %s3014, 3
      %s3017 = smul.addr %s3016, 4
      %s3018 = scalar_lea.vmem %s12, %s3017
      %s3019 = smul.u32 2, %s27
      %p3020 = scmp.lt.s32.totalorder %s3019, 3
      %s3021 = scalar_select %p3020, %s3019, 3
      %s3022 = smul.addr %s3021, 4
      %s3023 = scalar_lea.vmem %s13, %s3022
      %s3024 = smul.u32 2, %s27
      %p3025 = scmp.lt.s32.totalorder %s3024, 3
      %s3026 = scalar_select %p3025, %s3024, 3
      %s3027 = smul.addr %s3026, 4
      %s3028 = scalar_lea.vmem %s14, %s3027
      %s3029 = smul.u32 2, %s27
      %p3030 = scmp.lt.s32.totalorder %s3029, 3
      %s3031 = scalar_select %p3030, %s3029, 3
      %s3032 = smul.addr %s3031, 4
      %s3033 = scalar_lea.vmem %s15, %s3032
      // Predicated region
      $region69: #{deeplabv3_forward.7} parent=67 // pred_check
        %p3034 = pneg %p317
      $region70: #{deeplabv3_forward.7} parent=67 // pred_check_branch
        %3036 = sbr.rel (%p3034) target = $region72
      $region71: #{deeplabv3_forward.7} parent=67 // pred_region
        %s3037 = smul.u32 2, %s27
      $region72: #{deeplabv3_forward.7} parent=67 // pred_fallthru
        _
      // Predicated region
      $region73: #{deeplabv3_forward.7} parent=67 // pred_check
        %p3038 = pneg %p343
      $region74: #{deeplabv3_forward.7} parent=67 // pred_check_branch
        %3040 = sbr.rel (%p3038) target = $region76
      $region75: #{deeplabv3_forward.7} parent=67 // pred_region
        %s3041 = smul.u32 2, %s27
      $region76: #{deeplabv3_forward.7} parent=67 // pred_fallthru
        _
      // Predicated region
      $region77: #{deeplabv3_forward.7} parent=67 // pred_check
        %p3042 = pneg %p369
      $region78: #{deeplabv3_forward.7} parent=67 // pred_check_branch
        %3044 = sbr.rel (%p3042) target = $region80
      $region79: #{deeplabv3_forward.7} parent=67 // pred_region
        %s3045 = smul.u32 2, %s27
      $region80: #{deeplabv3_forward.7} parent=67 // pred_fallthru
        _
      // Predicated region
      $region81: #{deeplabv3_forward.7} parent=67 // pred_check
        %p3046 = pneg %p395
      $region82: #{deeplabv3_forward.7} parent=67 // pred_check_branch
        %3048 = sbr.rel (%p3046) target = $region84
      $region83: #{deeplabv3_forward.7} parent=67 // pred_region
        %s3049 = smul.u32 2, %s27
      $region84: #{deeplabv3_forward.7} parent=67 // pred_fallthru
        _
    $region68: #{deeplabv3_forward.7} parent=5 // pred_fallthru
      _
    %p3050 = scmp.le.s32.totalorder 2, %s22
    // Predicated region
    $region85: #{deeplabv3_forward.7} parent=5 // pred_check
      %p3051 = pneg %p3050
    $region86: #{deeplabv3_forward.7} parent=5 // pred_check_branch
      %3053 = sbr.rel (%p3051) target = $region88
    $region87: #{deeplabv3_forward.7} parent=5 // pred_region
      %s3054 = ssub.s32 %s22, 2
      // Predicated region
      $region89: #{deeplabv3_forward.7} parent=87 // pred_check
        %p3055 = pneg %p323
      $region90: #{deeplabv3_forward.7} parent=87 // pred_check_branch
        %3057 = sbr.rel (%p3055) target = $region92
      $region91: #{deeplabv3_forward.7} parent=87 // pred_region
        %s3058 = smul.u32 2, %s28
        %p3059 = scmp.lt.s32.totalorder %s3058, 3
        %s3060 = scalar_select %p3059, %s3058, 3
        %s3061 = smul.addr %s3060, 4
        %s3062 = scalar_lea.vmem %s12, %s3061
      $region92: #{deeplabv3_forward.7} parent=87 // pred_fallthru
        _
      // Predicated region
      $region93: #{deeplabv3_forward.7} parent=87 // pred_check
        %p3063 = pneg %p349
      $region94: #{deeplabv3_forward.7} parent=87 // pred_check_branch
        %3065 = sbr.rel (%p3063) target = $region96
      $region95: #{deeplabv3_forward.7} parent=87 // pred_region
        %s3066 = smul.u32 2, %s28
        %p3067 = scmp.lt.s32.totalorder %s3066, 3
        %s3068 = scalar_select %p3067, %s3066, 3
        %s3069 = smul.addr %s3068, 4
        %s3070 = scalar_lea.vmem %s13, %s3069
      $region96: #{deeplabv3_forward.7} parent=87 // pred_fallthru
        _
      // Predicated region
      $region97: #{deeplabv3_forward.7} parent=87 // pred_check
        %p3071 = pneg %p375
      $region98: #{deeplabv3_forward.7} parent=87 // pred_check_branch
        %3073 = sbr.rel (%p3071) target = $region100
      $region99: #{deeplabv3_forward.7} parent=87 // pred_region
        %s3074 = smul.u32 2, %s28
        %p3075 = scmp.lt.s32.totalorder %s3074, 3
        %s3076 = scalar_select %p3075, %s3074, 3
        %s3077 = smul.addr %s3076, 4
        %s3078 = scalar_lea.vmem %s14, %s3077
      $region100: #{deeplabv3_forward.7} parent=87 // pred_fallthru
        _
      // Predicated region
      $region101: #{deeplabv3_forward.7} parent=87 // pred_check
        %p3079 = pneg %p401
      $region102: #{deeplabv3_forward.7} parent=87 // pred_check_branch
        %3081 = sbr.rel (%p3079) target = $region104
      $region103: #{deeplabv3_forward.7} parent=87 // pred_region
        %s3082 = smul.u32 2, %s28
        %p3083 = scmp.lt.s32.totalorder %s3082, 3
        %s3084 = scalar_select %p3083, %s3082, 3
        %s3085 = smul.addr %s3084, 4
        %s3086 = scalar_lea.vmem %s15, %s3085
      $region104: #{deeplabv3_forward.7} parent=87 // pred_fallthru
        _
    $region88: #{deeplabv3_forward.7} parent=5 // pred_fallthru
      _
  $region6: #{deeplabv3_forward.7} parent=0 // loop_footer
    %s26 = sadd.s32 1, %s22
  $region7: #{deeplabv3_forward.7} parent=0 // loop_footer_branch
    %21 = sbr.rel target = $region3
  $region8: #{deeplabv3_forward.7} parent=0 // loop_exit
    _

</llo_original>
